<compile_context>
chip_gen: v5e
topology: v5e:2x2
jax: 0.10.0
libtpu: 0.0.40
codegen_flags: <defaults>
</compile_context>

<pallas_src>
import jax
import jax.numpy as jnp
from jax import lax
from jax.experimental import pallas as pl
from jax.experimental.pallas import tpu as pltpu

HIDDEN = 768
N_HEADS = 12
D_HEAD = 64
N_PAIRS = N_HEADS // 2        # heads processed two at a time (128-lane V slices)
LN_EPS = 1e-12
MAX_S_CHUNK = 512             # rows of x / att columns per reduction grid step


def _round_up(x, m):
    return (x + m - 1) // m * m


# ---------------------------------------------------------------------------
# Fused kernel: value proj + (CLS-rows-only) att @ V accumulation over S chunks
#               + BertLayerNorm + wo + sigmoid + mask_cls (on last chunk)
# ---------------------------------------------------------------------------
def _fused_scores_kernel(x_ref, att_ref, wv_ref, bv_ref, gamma_ref, beta_ref,
                         wow_ref, wob_ref, mask_ref, out_ref, acc_ref):
    # x_ref    : (1, S_CHUNK, 768)       bf16  sentence-embedding chunk
    # att_ref  : (1, 12*n_cls, S_CHUNK)  bf16  [CLS]-row attention, heads stacked on rows
    # wv_ref   : (768, 768)              bf16  value projection [in, out] (resident)
    # bv/gamma/beta/wow : (1, 768) f32 ; wob : (1,) f32 in SMEM
    # mask_ref : (1, n_cls, 1) f32 ;  out_ref : (1, n_cls, 1) f32
    # acc_ref  : (n_cls, 768) f32 VMEM scratch (context accumulator)
    k = pl.program_id(1)
    n_cls = acc_ref.shape[0]

    @pl.when(k == 0)
    def _():
        acc_ref[...] = jnp.zeros_like(acc_ref)

    # Value projection for this S chunk (bf16 MXU, f32 accumulation). The value
    # bias is folded out here and added once to ctx in the epilogue, exploiting
    # that softmax attention rows sum to 1 (zero-padded S columns contribute 0).
    v = jnp.dot(x_ref[0], wv_ref[...], preferred_element_type=jnp.float32)
    v_bf = v.astype(jnp.bfloat16)                             # [S_CHUNK, 768]

    # att @ V, two heads at a time against a 128-lane-aligned V column slice.
    # Pair p result is [2*n_cls, 128]: head 2p lives in the top rows / left 64
    # lanes, head 2p+1 in the bottom rows / right 64 lanes, so a lane select
    # (pure VPU) recovers the block diagonal with no lane shuffles.
    lane = lax.broadcasted_iota(jnp.int32, (n_cls, 2 * D_HEAD), 1)
    left = lane < D_HEAD
    att = att_ref[0]                                          # [12*n_cls, S_CHUNK]
    parts = []
    for p in range(N_PAIRS):                                  # static unroll (6)
        att_pair = att[2 * p * n_cls:(2 * p + 2) * n_cls, :]  # [2*n_cls, S_CHUNK]
        v_pair = v_bf[:, 2 * D_HEAD * p:2 * D_HEAD * (p + 1)]  # [S_CHUNK, 128]
        res = jnp.dot(att_pair, v_pair, preferred_element_type=jnp.float32)
        parts.append(jnp.where(left, res[:n_cls, :], res[n_cls:, :]))
    # 128-lane-aligned concat: each piece is a whole number of vregs wide.
    acc_ref[...] += jnp.concatenate(parts, axis=-1)           # [n_cls, 768]

    # Epilogue only on the last S chunk.
    @pl.when(k == pl.num_programs(1) - 1)
    def _():
        ctx = acc_ref[...] + bv_ref[...]                      # folded value bias
        # BertLayerNorm (biased variance, eps inside the sqrt), EUP rsqrt.
        u = jnp.mean(ctx, axis=-1, keepdims=True)
        xc = ctx - u
        s = jnp.mean(xc * xc, axis=-1, keepdims=True)
        y = xc * lax.rsqrt(s + LN_EPS) * gamma_ref[...] + beta_ref[...]
        # wo: Linear(768 -> 1) as a VPU lane reduction (no 1-column MXU matmul).
        logit = jnp.sum(y * wow_ref[...], axis=-1, keepdims=True) + wob_ref[0]
        out_ref[0] = jax.nn.sigmoid(logit) * mask_ref[0]


def ext_sentence_scores(sent_embedding, att_cls, wv, bv, ln_gamma, ln_beta,
                        wo_w, wo_b, mask_cls):
    """sent_embedding [B,S,768] f32, att_cls [B,12,n_cls,S] f32 -> [B,n_cls]."""
    B, S, _ = sent_embedding.shape
    n_cls = att_cls.shape[2]

    # S-chunk reduction axis sizing: single full-S chunk (lane-padded) when S is
    # small, otherwise 512-row chunks with S padded up to a multiple of 512.
    if S <= MAX_S_CHUNK:
        s_chunk = _round_up(S, 128)
        s_pad = s_chunk
    else:
        s_chunk = MAX_S_CHUNK
        s_pad = _round_up(S, s_chunk)
    num_chunks = s_pad // s_chunk

    # bf16 casts sit right next to their producer fusions (embedding gather /
    # softmax gather); heads are stacked along rows so the bf16 sublane padding
    # of the att slab is paid once, not per head. Zero-padded x rows give V=0
    # (bias folded out) and zero-padded att columns contribute nothing.
    x = sent_embedding.astype(jnp.bfloat16)
    att = att_cls.reshape(B, N_HEADS * n_cls, S).astype(jnp.bfloat16)
    if s_pad != S:
        x = jnp.pad(x, ((0, 0), (0, s_pad - S), (0, 0)))
        att = jnp.pad(att, ((0, 0), (0, 0), (0, s_pad - S)))

    flops = (2 * B * s_pad * HIDDEN * HIDDEN
             + 2 * B * N_PAIRS * (2 * n_cls) * s_pad * (2 * D_HEAD))
    bytes_accessed = (x.size * 2 + att.size * 2 + HIDDEN * HIDDEN * 2
                      + 4 * HIDDEN * 4 + 2 * B * n_cls * 4)

    out = pl.pallas_call(
        _fused_scores_kernel,
        out_shape=jax.ShapeDtypeStruct((B, n_cls, 1), jnp.float32),
        grid_spec=pltpu.PrefetchScalarGridSpec(
            num_scalar_prefetch=0,
            grid=(B, num_chunks),
            in_specs=[
                pl.BlockSpec((1, s_chunk, HIDDEN), lambda b, k: (b, k, 0)),
                pl.BlockSpec((1, N_HEADS * n_cls, s_chunk),
                             lambda b, k: (b, 0, k)),
                pl.BlockSpec((HIDDEN, HIDDEN), lambda b, k: (0, 0)),
                pl.BlockSpec((1, HIDDEN), lambda b, k: (0, 0)),
                pl.BlockSpec((1, HIDDEN), lambda b, k: (0, 0)),
                pl.BlockSpec((1, HIDDEN), lambda b, k: (0, 0)),
                pl.BlockSpec((1, HIDDEN), lambda b, k: (0, 0)),
                pl.BlockSpec(memory_space=pltpu.MemorySpace.SMEM),
                pl.BlockSpec((1, n_cls, 1), lambda b, k: (b, 0, 0)),
            ],
            out_specs=pl.BlockSpec((1, n_cls, 1), lambda b, k: (b, 0, 0)),
            scratch_shapes=[pltpu.VMEM((n_cls, HIDDEN), jnp.float32)]),
        compiler_params=pltpu.CompilerParams(
            dimension_semantics=("parallel", "arbitrary")),
        cost_estimate=pl.CostEstimate(
            flops=flops, transcendentals=2 * B * n_cls,
            bytes_accessed=bytes_accessed),
    )(x, att,
      wv.astype(jnp.bfloat16),                      # weight cast once per call
      bv.reshape(1, HIDDEN).astype(jnp.float32),
      ln_gamma.reshape(1, HIDDEN).astype(jnp.float32),
      ln_beta.reshape(1, HIDDEN).astype(jnp.float32),
      wo_w.reshape(1, HIDDEN).astype(jnp.float32),
      wo_b.reshape(1).astype(jnp.float32),
      mask_cls.astype(jnp.float32).reshape(B, n_cls, 1))
    return out.reshape(B, n_cls)


# ---------------------------------------------------------------------------
# ExtSummarizer.forward
# ---------------------------------------------------------------------------
def ext_summarizer_forward(params, src, segs, clss, mask_src, mask_cls):
    # TODO(synk): pretrained XLNet backbone has no clean Pallas equivalent; its
    # outputs (last hidden state `sent_embedding` and layer-11 attention probs
    # `att`) are synthesized deterministically below from in-script parameters.
    del segs  # token_type_ids only feed the (stubbed) backbone
    sent_embedding = params["emb_table"][src]                          # [B, S, 768]
    att_logits = jnp.where(mask_src[:, None, None, :] > 0,
                           params["att_logits"], -1e9)
    att = jax.nn.softmax(att_logits, axis=-1)                          # [B, 12, S, S]

    # Only the [CLS] query rows of att are ever consumed downstream: gather
    # them here so the kernel computes att@V (and LN/wo/sigmoid) for n_cls
    # rows instead of S rows, and no [B,S,768] context ever hits HBM.
    att_cls = jnp.take_along_axis(att, clss[:, None, :, None], axis=2)  # [B,12,n_cls,S]

    scores = ext_sentence_scores(
        sent_embedding, att_cls, params["wv"], params["bv"],
        params["ln_gamma"], params["ln_beta"], params["wo_w"], params["wo_b"],
        mask_cls)
    return scores, mask_cls


# ---------------------------------------------------------------------------
# Pure-JAX reference (same math as the PyTorch module, f32, no Pallas)
# ---------------------------------------------------------------------------
def reference_forward(params, src, segs, clss, mask_src, mask_cls):
    del segs
    sent_embedding = params["emb_table"][src]
    att = jax.nn.softmax(jnp.where(mask_src[:, None, None, :] > 0,
                                   params["att_logits"], -1e9), axis=-1)
    B, S, _ = sent_embedding.shape
    v = sent_embedding @ params["wv"] + params["bv"]
    v = v.reshape(B, S, N_HEADS, D_HEAD).transpose(0, 2, 1, 3)
    ctx = jnp.einsum("bhqk,bhkd->bhqd", att, v)
    ctx = ctx.transpose(0, 2, 1, 3).reshape(B, S, HIDDEN)
    ctx = ctx[jnp.arange(B)[:, None], clss]
    u = ctx.mean(-1, keepdims=True)
    s = ((ctx - u) ** 2).mean(-1, keepdims=True)
    y = (ctx - u) / jnp.sqrt(s + LN_EPS) * params["ln_gamma"] + params["ln_beta"]
    score = jax.nn.sigmoid(y @ params["wo_w"].T + params["wo_b"])[..., 0]
    return score * mask_cls.astype(jnp.float32), mask_cls


if __name__ == "__main__":
    import numpy as np

    key = jax.random.PRNGKey(0)
    ks = jax.random.split(key, 8)
    B, S, N_CLS, VOCAB = 2, 16, 4, 100

    # Module-call inputs: forward(src, segs, clss, mask_src, mask_cls)
    src = jax.random.randint(ks[0], (B, S), 0, VOCAB, dtype=jnp.int32)
    segs = jnp.zeros((B, S), jnp.int32)
    clss = jnp.array([[0, 4, 8, 12], [0, 5, 10, 15]], jnp.int32)
    mask_src = jnp.ones((B, S), jnp.float32)
    mask_cls = jnp.array([[1., 1., 1., 0.], [1., 1., 1., 1.]], jnp.float32)

    # Deterministic synthetic parameters (shapes from __init__: Linear(768,768),
    # Linear(768,1), BertLayerNorm(768)); XLNet backbone outputs are stubbed.
    params = {
        "emb_table": 0.02 * jax.random.normal(ks[1], (VOCAB, HIDDEN), jnp.float32),
        "att_logits": jax.random.normal(ks[2], (B, N_HEADS, S, S), jnp.float32),
        "wv": 0.02 * jax.random.normal(ks[3], (HIDDEN, HIDDEN), jnp.float32),
        "bv": 0.02 * jax.random.normal(ks[4], (HIDDEN,), jnp.float32),
        "wo_w": 0.02 * jax.random.normal(ks[5], (1, HIDDEN), jnp.float32),
        "wo_b": 0.02 * jax.random.normal(ks[6], (1,), jnp.float32),
        "ln_gamma": jnp.ones((HIDDEN,), jnp.float32),
        "ln_beta": jnp.zeros((HIDDEN,), jnp.float32),
    }

    scores, out_mask = jax.jit(ext_summarizer_forward)(
        params, src, segs, clss, mask_src, mask_cls)
    jax.block_until_ready(scores)

    ref_scores, _ = reference_forward(params, src, segs, clss, mask_src, mask_cls)
    # bf16 matmul inputs (f32 accumulation) -> slightly looser tolerance.
    np.testing.assert_allclose(np.asarray(scores), np.asarray(ref_scores),
                               atol=1e-2, rtol=1e-2)
    assert scores.shape == (B, N_CLS) and out_mask.shape == (B, N_CLS)
    print("KERNEL_OK")
</pallas_src>

<mosaic_0001>
module attributes {stable_mosaic.version = 11 : i64} {
  func.func @_fused_scores_kernel(%arg0: i32, %arg1: i32, %arg2: memref<1x128x768xbf16, #tpu.memory_space<vmem>>, %arg3: memref<1x48x128xbf16, #tpu.memory_space<vmem>>, %arg4: memref<768x768xbf16, #tpu.memory_space<vmem>>, %arg5: memref<1x768xf32, #tpu.memory_space<vmem>>, %arg6: memref<1x768xf32, #tpu.memory_space<vmem>>, %arg7: memref<1x768xf32, #tpu.memory_space<vmem>>, %arg8: memref<1x768xf32, #tpu.memory_space<vmem>>, %arg9: memref<1xf32, #tpu.memory_space<smem>>, %arg10: memref<1x4x1xf32, #tpu.memory_space<vmem>>, %arg11: memref<1x4x1xf32, #tpu.memory_space<vmem>>, %arg12: memref<4x768xf32, #tpu.memory_space<vmem>>) attributes {dimension_semantics = [#tpu.dimension_semantics<parallel>, #tpu.dimension_semantics<arbitrary>], iteration_bounds = array<i64: 2, 1>, scalar_prefetch = 0 : i64, scratch_operands = 1 : i64, tpu.core_type = #tpu.core_type<tc>, window_params = [{transform_indices = @transform_0, window_bounds = array<i64: 1, 128, 768>}, {transform_indices = @transform_1, window_bounds = array<i64: 1, 48, 128>}, {pipeline_mode = #tpu.pipeline_mode<synchronous>, transform_indices = @transform_2, window_bounds = array<i64: 768, 768>}, {pipeline_mode = #tpu.pipeline_mode<synchronous>, transform_indices = @transform_3, window_bounds = array<i64: 1, 768>}, {pipeline_mode = #tpu.pipeline_mode<synchronous>, transform_indices = @transform_4, window_bounds = array<i64: 1, 768>}, {pipeline_mode = #tpu.pipeline_mode<synchronous>, transform_indices = @transform_5, window_bounds = array<i64: 1, 768>}, {pipeline_mode = #tpu.pipeline_mode<synchronous>, transform_indices = @transform_6, window_bounds = array<i64: 1, 768>}, {transform_indices = @transform_7, window_bounds = array<i64: 1>}, {transform_indices = @transform_8, window_bounds = array<i64: 1, 4, 1>}, {transform_indices = @transform_9, window_bounds = array<i64: 1, 4, 1>}]} {
    %c0_i32 = arith.constant 0 : i32
    %0 = arith.cmpi eq, %arg1, %c0_i32 : i32
    %1 = arith.extui %0 : i1 to i32
    %c0_i32_0 = arith.constant 0 : i32
    %2 = arith.cmpi ne, %1, %c0_i32_0 : i32
    scf.if %2 {
      %cst_20 = arith.constant 0.000000e+00 : f32
      %56 = vector.broadcast %cst_20 : f32 to vector<4x768xf32>
      %c0_21 = arith.constant 0 : index
      %c0_22 = arith.constant 0 : index
      %57 = vector.load %arg12[%c0_21, %c0_22] : memref<4x768xf32, #tpu.memory_space<vmem>>, vector<4x768xf32>
      tpu.vector_store %arg12[%c0_21, %c0_22], %56 {strides = array<i32>} : memref<4x768xf32, #tpu.memory_space<vmem>>, vector<4x768xf32>,
    } else {
    }
    %c0 = arith.constant 0 : index
    %c0_1 = arith.constant 0 : index
    %c0_2 = arith.constant 0 : index
    %3 = vector.load %arg2[%c0, %c0_1, %c0_2] : memref<1x128x768xbf16, #tpu.memory_space<vmem>>, vector<1x128x768xbf16>
    %4 = vector.shape_cast %3 : vector<1x128x768xbf16> to vector<128x768xbf16>
    %c0_3 = arith.constant 0 : index
    %c0_4 = arith.constant 0 : index
    %5 = vector.load %arg4[%c0_3, %c0_4] : memref<768x768xbf16, #tpu.memory_space<vmem>>, vector<768x768xbf16>
    %cst = arith.constant dense<0.000000e+00> : vector<128x768xf32>
    %6 = tpu.matmul %4, %5, %cst {dimension_numbers = #tpu.dot_dimension_numbers<[1], [0], [0], [1], [0, 0, 1, 1], [], []>} : vector<128x768xbf16>, vector<768x768xbf16>, vector<128x768xf32> -> vector<128x768xf32>
    %7 = arith.truncf %6 : vector<128x768xf32> to vector<128x768xbf16>
    %8 = tpu.iota {dimensions = array<i32: 1>} : vector<4x128xi32>
    %c64_i32 = arith.constant 64 : i32
    %9 = vector.broadcast %c64_i32 : i32 to vector<4x128xi32>
    %10 = arith.cmpi slt, %8, %9 : vector<4x128xi32>
    %c0_5 = arith.constant 0 : index
    %c0_6 = arith.constant 0 : index
    %c0_7 = arith.constant 0 : index
    %11 = vector.load %arg3[%c0_5, %c0_6, %c0_7] : memref<1x48x128xbf16, #tpu.memory_space<vmem>>, vector<1x48x128xbf16>
    %12 = vector.shape_cast %11 : vector<1x48x128xbf16> to vector<48x128xbf16>
    %13 = vector.extract_strided_slice %12 {offsets = [0, 0], sizes = [8, 128], strides = [1, 1]} : vector<48x128xbf16> to vector<8x128xbf16>
    %14 = vector.extract_strided_slice %7 {offsets = [0, 0], sizes = [128, 128], strides = [1, 1]} : vector<128x768xbf16> to vector<128x128xbf16>
    %cst_8 = arith.constant dense<0.000000e+00> : vector<8x128xf32>
    %15 = tpu.matmul %13, %14, %cst_8 {dimension_numbers = #tpu.dot_dimension_numbers<[1], [0], [0], [1], [0, 0, 1, 1], [], []>} : vector<8x128xbf16>, vector<128x128xbf16>, vector<8x128xf32> -> vector<8x128xf32>
    %16 = vector.extract_strided_slice %15 {offsets = [0, 0], sizes = [4, 128], strides = [1, 1]} : vector<8x128xf32> to vector<4x128xf32>
    %17 = vector.extract_strided_slice %15 {offsets = [4, 0], sizes = [4, 128], strides = [1, 1]} : vector<8x128xf32> to vector<4x128xf32>
    %18 = arith.select %10, %16, %17 : vector<4x128xi1>, vector<4x128xf32>
    %19 = vector.extract_strided_slice %12 {offsets = [8, 0], sizes = [8, 128], strides = [1, 1]} : vector<48x128xbf16> to vector<8x128xbf16>
    %20 = vector.extract_strided_slice %7 {offsets = [0, 128], sizes = [128, 128], strides = [1, 1]} : vector<128x768xbf16> to vector<128x128xbf16>
    %cst_9 = arith.constant dense<0.000000e+00> : vector<8x128xf32>
    %21 = tpu.matmul %19, %20, %cst_9 {dimension_numbers = #tpu.dot_dimension_numbers<[1], [0], [0], [1], [0, 0, 1, 1], [], []>} : vector<8x128xbf16>, vector<128x128xbf16>, vector<8x128xf32> -> vector<8x128xf32>
    %22 = vector.extract_strided_slice %21 {offsets = [0, 0], sizes = [4, 128], strides = [1, 1]} : vector<8x128xf32> to vector<4x128xf32>
    %23 = vector.extract_strided_slice %21 {offsets = [4, 0], sizes = [4, 128], strides = [1, 1]} : vector<8x128xf32> to vector<4x128xf32>
    %24 = arith.select %10, %22, %23 : vector<4x128xi1>, vector<4x128xf32>
    %25 = vector.extract_strided_slice %12 {offsets = [16, 0], sizes = [8, 128], strides = [1, 1]} : vector<48x128xbf16> to vector<8x128xbf16>
    %26 = vector.extract_strided_slice %7 {offsets = [0, 256], sizes = [128, 128], strides = [1, 1]} : vector<128x768xbf16> to vector<128x128xbf16>
    %cst_10 = arith.constant dense<0.000000e+00> : vector<8x128xf32>
    %27 = tpu.matmul %25, %26, %cst_10 {dimension_numbers = #tpu.dot_dimension_numbers<[1], [0], [0], [1], [0, 0, 1, 1], [], []>} : vector<8x128xbf16>, vector<128x128xbf16>, vector<8x128xf32> -> vector<8x128xf32>
    %28 = vector.extract_strided_slice %27 {offsets = [0, 0], sizes = [4, 128], strides = [1, 1]} : vector<8x128xf32> to vector<4x128xf32>
    %29 = vector.extract_strided_slice %27 {offsets = [4, 0], sizes = [4, 128], strides = [1, 1]} : vector<8x128xf32> to vector<4x128xf32>
    %30 = arith.select %10, %28, %29 : vector<4x128xi1>, vector<4x128xf32>
    %31 = vector.extract_strided_slice %12 {offsets = [24, 0], sizes = [8, 128], strides = [1, 1]} : vector<48x128xbf16> to vector<8x128xbf16>
    %32 = vector.extract_strided_slice %7 {offsets = [0, 384], sizes = [128, 128], strides = [1, 1]} : vector<128x768xbf16> to vector<128x128xbf16>
    %cst_11 = arith.constant dense<0.000000e+00> : vector<8x128xf32>
    %33 = tpu.matmul %31, %32, %cst_11 {dimension_numbers = #tpu.dot_dimension_numbers<[1], [0], [0], [1], [0, 0, 1, 1], [], []>} : vector<8x128xbf16>, vector<128x128xbf16>, vector<8x128xf32> -> vector<8x128xf32>
    %34 = vector.extract_strided_slice %33 {offsets = [0, 0], sizes = [4, 128], strides = [1, 1]} : vector<8x128xf32> to vector<4x128xf32>
    %35 = vector.extract_strided_slice %33 {offsets = [4, 0], sizes = [4, 128], strides = [1, 1]} : vector<8x128xf32> to vector<4x128xf32>
    %36 = arith.select %10, %34, %35 : vector<4x128xi1>, vector<4x128xf32>
    %37 = vector.extract_strided_slice %12 {offsets = [32, 0], sizes = [8, 128], strides = [1, 1]} : vector<48x128xbf16> to vector<8x128xbf16>
    %38 = vector.extract_strided_slice %7 {offsets = [0, 512], sizes = [128, 128], strides = [1, 1]} : vector<128x768xbf16> to vector<128x128xbf16>
    %cst_12 = arith.constant dense<0.000000e+00> : vector<8x128xf32>
    %39 = tpu.matmul %37, %38, %cst_12 {dimension_numbers = #tpu.dot_dimension_numbers<[1], [0], [0], [1], [0, 0, 1, 1], [], []>} : vector<8x128xbf16>, vector<128x128xbf16>, vector<8x128xf32> -> vector<8x128xf32>
    %40 = vector.extract_strided_slice %39 {offsets = [0, 0], sizes = [4, 128], strides = [1, 1]} : vector<8x128xf32> to vector<4x128xf32>
    %41 = vector.extract_strided_slice %39 {offsets = [4, 0], sizes = [4, 128], strides = [1, 1]} : vector<8x128xf32> to vector<4x128xf32>
    %42 = arith.select %10, %40, %41 : vector<4x128xi1>, vector<4x128xf32>
    %43 = vector.extract_strided_slice %12 {offsets = [40, 0], sizes = [8, 128], strides = [1, 1]} : vector<48x128xbf16> to vector<8x128xbf16>
    %44 = vector.extract_strided_slice %7 {offsets = [0, 640], sizes = [128, 128], strides = [1, 1]} : vector<128x768xbf16> to vector<128x128xbf16>
    %cst_13 = arith.constant dense<0.000000e+00> : vector<8x128xf32>
    %45 = tpu.matmul %43, %44, %cst_13 {dimension_numbers = #tpu.dot_dimension_numbers<[1], [0], [0], [1], [0, 0, 1, 1], [], []>} : vector<8x128xbf16>, vector<128x128xbf16>, vector<8x128xf32> -> vector<8x128xf32>
    %46 = vector.extract_strided_slice %45 {offsets = [0, 0], sizes = [4, 128], strides = [1, 1]} : vector<8x128xf32> to vector<4x128xf32>
    %47 = vector.extract_strided_slice %45 {offsets = [4, 0], sizes = [4, 128], strides = [1, 1]} : vector<8x128xf32> to vector<4x128xf32>
    %48 = arith.select %10, %46, %47 : vector<4x128xi1>, vector<4x128xf32>
    %c0_14 = arith.constant 0 : index
    %c0_15 = arith.constant 0 : index
    %49 = vector.load %arg12[%c0_14, %c0_15] : memref<4x768xf32, #tpu.memory_space<vmem>>, vector<4x768xf32>
    %50 = tpu.concatenate %18, %24, %30, %36, %42, %48 in 1 : vector<4x128xf32>, vector<4x128xf32>, vector<4x128xf32>, vector<4x128xf32>, vector<4x128xf32>, vector<4x128xf32> -> vector<4x768xf32>
    %51 = arith.addf %49, %50 : vector<4x768xf32>
    %c0_16 = arith.constant 0 : index
    %c0_17 = arith.constant 0 : index
    %52 = vector.load %arg12[%c0_16, %c0_17] : memref<4x768xf32, #tpu.memory_space<vmem>>, vector<4x768xf32>
    tpu.vector_store %arg12[%c0_16, %c0_17], %51 {strides = array<i32>} : memref<4x768xf32, #tpu.memory_space<vmem>>, vector<4x768xf32>,
    %c0_i32_18 = arith.constant 0 : i32
    %53 = arith.cmpi eq, %arg1, %c0_i32_18 : i32
    %54 = arith.extui %53 : i1 to i32
    %c0_i32_19 = arith.constant 0 : i32
    %55 = arith.cmpi ne, %54, %c0_i32_19 : i32
    scf.if %55 {
      %c0_20 = arith.constant 0 : index
      %c0_21 = arith.constant 0 : index
      %56 = vector.load %arg12[%c0_20, %c0_21] : memref<4x768xf32, #tpu.memory_space<vmem>>, vector<4x768xf32>
      %c0_22 = arith.constant 0 : index
      %c0_23 = arith.constant 0 : index
      %57 = vector.load %arg5[%c0_22, %c0_23] : memref<1x768xf32, #tpu.memory_space<vmem>>, vector<1x768xf32>
      %58 = vector.broadcast %57 : vector<1x768xf32> to vector<4x768xf32>
      %59 = arith.addf %56, %58 : vector<4x768xf32>
      %cst_24 = arith.constant dense<0.000000e+00> : vector<4xf32>
      %60 = vector.multi_reduction <add>, %59, %cst_24 [1] : vector<4x768xf32> to vector<4xf32>
      %61 = vector.shape_cast %60 : vector<4xf32> to vector<4x1xf32>
      %cst_25 = arith.constant 7.680000e+02 : f32
      %62 = vector.broadcast %cst_25 : f32 to vector<4x1xf32>
      %63 = arith.divf %61, %62 : vector<4x1xf32>
      %64 = vector.broadcast %63 : vector<4x1xf32> to vector<4x768xf32>
      %65 = arith.subf %59, %64 : vector<4x768xf32>
      %66 = arith.mulf %65, %65 : vector<4x768xf32>
      %cst_26 = arith.constant dense<0.000000e+00> : vector<4xf32>
      %67 = vector.multi_reduction <add>, %66, %cst_26 [1] : vector<4x768xf32> to vector<4xf32>
      %68 = vector.shape_cast %67 : vector<4xf32> to vector<4x1xf32>
      %cst_27 = arith.constant 7.680000e+02 : f32
      %69 = vector.broadcast %cst_27 : f32 to vector<4x1xf32>
      %70 = arith.divf %68, %69 : vector<4x1xf32>
      %cst_28 = arith.constant 9.99999996E-13 : f32
      %71 = vector.broadcast %cst_28 : f32 to vector<4x1xf32>
      %72 = arith.addf %70, %71 : vector<4x1xf32>
      %73 = math.rsqrt %72 : vector<4x1xf32>
      %74 = vector.broadcast %73 : vector<4x1xf32> to vector<4x768xf32>
      %75 = arith.mulf %65, %74 : vector<4x768xf32>
      %c0_29 = arith.constant 0 : index
      %c0_30 = arith.constant 0 : index
      %76 = vector.load %arg6[%c0_29, %c0_30] : memref<1x768xf32, #tpu.memory_space<vmem>>, vector<1x768xf32>
      %77 = vector.broadcast %76 : vector<1x768xf32> to vector<4x768xf32>
      %78 = arith.mulf %75, %77 : vector<4x768xf32>
      %c0_31 = arith.constant 0 : index
      %c0_32 = arith.constant 0 : index
      %79 = vector.load %arg7[%c0_31, %c0_32] : memref<1x768xf32, #tpu.memory_space<vmem>>, vector<1x768xf32>
      %80 = vector.broadcast %79 : vector<1x768xf32> to vector<4x768xf32>
      %81 = arith.addf %78, %80 : vector<4x768xf32>
      %c0_33 = arith.constant 0 : index
      %c0_34 = arith.constant 0 : index
      %82 = vector.load %arg8[%c0_33, %c0_34] : memref<1x768xf32, #tpu.memory_space<vmem>>, vector<1x768xf32>
      %83 = vector.broadcast %82 : vector<1x768xf32> to vector<4x768xf32>
      %84 = arith.mulf %81, %83 : vector<4x768xf32>
      %cst_35 = arith.constant dense<0.000000e+00> : vector<4xf32>
      %85 = vector.multi_reduction <add>, %84, %cst_35 [1] : vector<4x768xf32> to vector<4xf32>
      %86 = vector.shape_cast %85 : vector<4xf32> to vector<4x1xf32>
      %c0_36 = arith.constant 0 : index
      %87 = memref.load %arg9[%c0_36] : memref<1xf32, #tpu.memory_space<smem>>
      %88 = vector.broadcast %87 : f32 to vector<4x1xf32>
      %89 = arith.addf %86, %88 : vector<4x1xf32>
      %90 = arith.negf %89 : vector<4x1xf32>
      %91 = math.exp %90 : vector<4x1xf32>
      %cst_37 = arith.constant 1.000000e+00 : f32
      %92 = vector.broadcast %cst_37 : f32 to vector<4x1xf32>
      %93 = arith.addf %92, %91 : vector<4x1xf32>
      %94 = arith.divf %92, %93 : vector<4x1xf32>
      %c0_38 = arith.constant 0 : index
      %c0_39 = arith.constant 0 : index
      %c0_40 = arith.constant 0 : index
      %95 = vector.load %arg10[%c0_38, %c0_39, %c0_40] : memref<1x4x1xf32, #tpu.memory_space<vmem>>, vector<1x4x1xf32>
      %96 = vector.shape_cast %95 : vector<1x4x1xf32> to vector<4x1xf32>
      %97 = arith.mulf %94, %96 : vector<4x1xf32>
      %c0_41 = arith.constant 0 : index
      %c0_42 = arith.constant 0 : index
      %c0_43 = arith.constant 0 : index
      %98 = vector.load %arg11[%c0_41, %c0_42, %c0_43] : memref<1x4x1xf32, #tpu.memory_space<vmem>>, vector<1x4x1xf32>
      %99 = vector.shape_cast %98 : vector<1x4x1xf32> to vector<4x1xf32>
      %100 = vector.shape_cast %97 : vector<4x1xf32> to vector<1x4x1xf32>
      tpu.vector_store %arg11[%c0_41, %c0_42, %c0_43], %100 {strides = array<i32>} : memref<1x4x1xf32, #tpu.memory_space<vmem>>, vector<1x4x1xf32>,
    } else {
    }
    return
  }
  func.func @transform_0(%arg0: i32, %arg1: i32) -> (i32, i32, i32) {
    %c0_i32 = arith.constant 0 : i32
    %c0_i32_0 = arith.constant 0 : i32
    return %arg0, %arg1, %c0_i32 : i32, i32, i32
  }
  func.func @transform_1(%arg0: i32, %arg1: i32) -> (i32, i32, i32) {
    %c0_i32 = arith.constant 0 : i32
    %c0_i32_0 = arith.constant 0 : i32
    return %arg0, %c0_i32, %arg1 : i32, i32, i32
  }
  func.func @transform_2(%arg0: i32, %arg1: i32) -> (i32, i32) {
    %c0_i32 = arith.constant 0 : i32
    %c0_i32_0 = arith.constant 0 : i32
    %c0_i32_1 = arith.constant 0 : i32
    return %c0_i32, %c0_i32_0 : i32, i32
  }
  func.func @transform_3(%arg0: i32, %arg1: i32) -> (i32, i32) {
    %c0_i32 = arith.constant 0 : i32
    %c0_i32_0 = arith.constant 0 : i32
    %c0_i32_1 = arith.constant 0 : i32
    return %c0_i32, %c0_i32_0 : i32, i32
  }
  func.func @transform_4(%arg0: i32, %arg1: i32) -> (i32, i32) {
    %c0_i32 = arith.constant 0 : i32
    %c0_i32_0 = arith.constant 0 : i32
    %c0_i32_1 = arith.constant 0 : i32
    return %c0_i32, %c0_i32_0 : i32, i32
  }
  func.func @transform_5(%arg0: i32, %arg1: i32) -> (i32, i32) {
    %c0_i32 = arith.constant 0 : i32
    %c0_i32_0 = arith.constant 0 : i32
    %c0_i32_1 = arith.constant 0 : i32
    return %c0_i32, %c0_i32_0 : i32, i32
  }
  func.func @transform_6(%arg0: i32, %arg1: i32) -> (i32, i32) {
    %c0_i32 = arith.constant 0 : i32
    %c0_i32_0 = arith.constant 0 : i32
    %c0_i32_1 = arith.constant 0 : i32
    return %c0_i32, %c0_i32_0 : i32, i32
  }
  func.func @transform_7(%arg0: i32, %arg1: i32) -> i32 {
    %c0_i32 = arith.constant 0 : i32
    %c0_i32_0 = arith.constant 0 : i32
    return %c0_i32 : i32
  }
  func.func @transform_8(%arg0: i32, %arg1: i32) -> (i32, i32, i32) {
    %c0_i32 = arith.constant 0 : i32
    %c0_i32_0 = arith.constant 0 : i32
    %c0_i32_1 = arith.constant 0 : i32
    return %arg0, %c0_i32, %c0_i32_0 : i32, i32, i32
  }
  func.func @transform_9(%arg0: i32, %arg1: i32) -> (i32, i32, i32) {
    %c0_i32 = arith.constant 0 : i32
    %c0_i32_0 = arith.constant 0 : i32
    %c0_i32_1 = arith.constant 0 : i32
    return %arg0, %c0_i32, %c0_i32_0 : i32, i32, i32
  }
}

</mosaic_0001>

<llo_original>
// kernel: ext_summarizer_forward.1
$region0: #{ext_summarizer_forward.1}
  #allocation0 [shape = 'u32[]', space=smem, size = 0x4, offset = 0x4, fixed_abs, tag = 'smem constant byte address 0x4 - core index']
  #allocation1 [shape = 'u32[72,128]{1,0:T(1,128)}', space=vmem, size = 0x9000, scoped, tag = 'internal scratch']
  #allocation2 [shape = 'f32[4,768]{1,0:T(4,128)}', space=vmem, size = 0x3000, scoped, tag = 'scratch operand']
  #allocation3 [shape = 'f32[1]{0:T(128)S(6)}', space=smem, size = 0x200, scoped, tag = 'scoped memory for ext_summarizer_forward.1']
  %s0 = inlined_call_operand.vmem [shape: bf16[2,128,768], index: 0, kind: input, shape index: {}]
  %s1 = inlined_call_operand.vmem [shape: bf16[2,48,128], index: 1, kind: input, shape index: {}]
  %s2 = inlined_call_operand.vmem [shape: bf16[768,768], index: 2, kind: input, shape index: {}]
  %s3 = inlined_call_operand.vmem [shape: f32[1,768], index: 3, kind: input, shape index: {}]
  %s4 = inlined_call_operand.vmem [shape: f32[1,768], index: 4, kind: input, shape index: {}]
  %s5 = inlined_call_operand.vmem [shape: f32[1,768], index: 5, kind: input, shape index: {}]
  %s6 = inlined_call_operand.vmem [shape: f32[1,768], index: 6, kind: input, shape index: {}]
  %s7 = inlined_call_operand.<no memory space> [shape: f32[1], index: 7, kind: input, shape index: {}]
  %s8 = inlined_call_operand.vmem [shape: f32[2,4,1], index: 8, kind: input, shape index: {}]
  %s9 = inlined_call_operand.vmem [shape: f32[2,4,1], index: 9, kind: output, shape index: {}]
  %s10 = sld [smem:[#allocation0]]
  $region77: #{ext_summarizer_forward.1} parent=0
    _
  %s12 = ssub.s32 1, %s10
  %s13 = scalar_select 0, %s12, %s10
  %14 = sst [smem:[#allocation3]] %s7
  loop: start=0, step=1, limit=4
  $region2: #{ext_summarizer_forward.1} parent=0 // loop_pre_header
    _
  $region3: #{ext_summarizer_forward.1} parent=0 // loop_header
    %s16 = sphi 0, %s20
    %p17 = scmp.ge.s32.totalorder %s16, 4
    %s23 = sphi 0, %s35
    %s24 = sphi 0, %s31
    %s25 = sphi 0, %s23
    %s26 = sphi 0, %s24
    %s27 = sphi 0, %s25
    %s28 = sphi 0, %s26
    %s40 = sphi 0, %s42
    %s43 = sphi 0, %s40
    %s44 = sphi 0, %s43
    %s60 = sphi 0, %s44
    %s68 = sphi 0, %s70
    %s71 = sphi 0, %s68
    %s72 = sphi 0, %s71
    %s88 = sphi 0, %s72
    %s92 = sphi 0, %s92
    %s94 = sphi 0, %s92
    %s95 = sphi 0, %s94
    %s109 = sphi 0, %s95
    %s113 = sphi 0, %s113
    %s115 = sphi 0, %s113
    %s116 = sphi 0, %s115
    %s130 = sphi 0, %s116
    %s134 = sphi 0, %s134
    %s136 = sphi 0, %s134
    %s137 = sphi 0, %s136
    %s151 = sphi 0, %s137
    %s155 = sphi 0, %s155
    %s157 = sphi 0, %s155
    %s158 = sphi 0, %s157
    %s172 = sphi 0, %s158
    %s176 = sphi 0, %s176
    %s178 = sphi 0, %s176
    %s179 = sphi 0, %s178
    %s193 = sphi 0, %s179
    %s197 = sphi 0, %s197
    %s199 = sphi 0, %s197
    %s200 = sphi 0, %s199
    %s214 = sphi 0, %s200
    %s220 = sphi 0, %s222
    %s223 = sphi 0, %s220
    %s224 = sphi 0, %s223
    %s240 = sphi 0, %s224
    %s246 = sphi 0, %s248
    %s249 = sphi 0, %s246
    %s250 = sphi 0, %s249
    %s266 = sphi 0, %s250
  $region4: #{ext_summarizer_forward.1} parent=0 // loop_header_branch
    %19 = sbr.rel (%p17) target = $region8
  $region5: #{ext_summarizer_forward.1} parent=0 // loop_body
    %s21 = ssub.s32 %s16, 1
    %s22 = ssub.s32 %s16, 2
    %s29 = sadd.s32 1, %s24
    %p30 = scmp.ge.s32.totalorder %s29, 1
    %s31 = scalar_select %p30, 0, %s29
    %s32 = sadd.s32 1, %s23
    %s33 = scalar_select %p30, %s32, %s23
    %p34 = scmp.ge.s32.totalorder %s33, 2
    %s35 = scalar_select %p34, 0, %s33
    %s36 = ssub.s32 %s23, %s35
    %s37 = ssub.s32 %s24, %s31
    %s38 = sor.u32 %s36, %s37
    %p39 = scmp.eq.s32.totalorder %s38, 0
    %s41 = sadd.s32 %s40, 1
    %s42 = scalar_select %p39, %s40, %s41
    %p45 = pneg %p39
    %p46 = scmp.eq.s32.totalorder %s16, 1
    %p47 = por %p45, %p46
    %p48 = scmp.ne.s32.totalorder %s40, %s43
    %p49 = scmp.eq.s32.totalorder %s16, 0
    %p50 = por %p48, %p49
    %p51 = scmp.ne.s32.totalorder %s40, %s43
    %p52 = scmp.eq.s32.totalorder %s21, 1
    %p53 = por %p51, %p52
    %p54 = scmp.ne.s32.totalorder %s43, %s44
    %p55 = scmp.eq.s32.totalorder %s21, 0
    %p56 = por %p54, %p55
    %p57 = scmp.ne.s32.totalorder %s43, %s44
    %p58 = scmp.eq.s32.totalorder %s22, 1
    %p59 = por %p57, %p58
    %p61 = scmp.ne.s32.totalorder %s44, %s60
    %p62 = scmp.eq.s32.totalorder %s22, 0
    %p63 = por %p61, %p62
    %s64 = ssub.s32 %s23, %s35
    %s65 = ssub.s32 %s24, %s31
    %s66 = sor.u32 %s64, %s65
    %p67 = scmp.eq.s32.totalorder %s66, 0
    %s69 = sadd.s32 %s68, 1
    %s70 = scalar_select %p67, %s68, %s69
    %p73 = pneg %p67
    %p74 = scmp.eq.s32.totalorder %s16, 1
    %p75 = por %p73, %p74
    %p76 = scmp.ne.s32.totalorder %s68, %s71
    %p77 = scmp.eq.s32.totalorder %s16, 0
    %p78 = por %p76, %p77
    %p79 = scmp.ne.s32.totalorder %s68, %s71
    %p80 = scmp.eq.s32.totalorder %s21, 1
    %p81 = por %p79, %p80
    %p82 = scmp.ne.s32.totalorder %s71, %s72
    %p83 = scmp.eq.s32.totalorder %s21, 0
    %p84 = por %p82, %p83
    %p85 = scmp.ne.s32.totalorder %s71, %s72
    %p86 = scmp.eq.s32.totalorder %s22, 1
    %p87 = por %p85, %p86
    %p89 = scmp.ne.s32.totalorder %s72, %s88
    %p90 = scmp.eq.s32.totalorder %s22, 0
    %p91 = por %p89, %p90
    %s93 = sadd.s32 %s92, 1
    %p96 = scmp.eq.s32.totalorder %s16, 1
    %p97 = scmp.ne.s32.totalorder %s92, %s94
    %p98 = scmp.eq.s32.totalorder %s16, 0
    %p99 = por %p97, %p98
    %p100 = scmp.ne.s32.totalorder %s92, %s94
    %p101 = scmp.eq.s32.totalorder %s21, 1
    %p102 = por %p100, %p101
    %p103 = scmp.ne.s32.totalorder %s94, %s95
    %p104 = scmp.eq.s32.totalorder %s21, 0
    %p105 = por %p103, %p104
    %p106 = scmp.ne.s32.totalorder %s94, %s95
    %p107 = scmp.eq.s32.totalorder %s22, 1
    %p108 = por %p106, %p107
    %p110 = scmp.ne.s32.totalorder %s95, %s109
    %p111 = scmp.eq.s32.totalorder %s22, 0
    %p112 = por %p110, %p111
    %s114 = sadd.s32 %s113, 1
    %p117 = scmp.eq.s32.totalorder %s16, 1
    %p118 = scmp.ne.s32.totalorder %s113, %s115
    %p119 = scmp.eq.s32.totalorder %s16, 0
    %p120 = por %p118, %p119
    %p121 = scmp.ne.s32.totalorder %s113, %s115
    %p122 = scmp.eq.s32.totalorder %s21, 1
    %p123 = por %p121, %p122
    %p124 = scmp.ne.s32.totalorder %s115, %s116
    %p125 = scmp.eq.s32.totalorder %s21, 0
    %p126 = por %p124, %p125
    %p127 = scmp.ne.s32.totalorder %s115, %s116
    %p128 = scmp.eq.s32.totalorder %s22, 1
    %p129 = por %p127, %p128
    %p131 = scmp.ne.s32.totalorder %s116, %s130
    %p132 = scmp.eq.s32.totalorder %s22, 0
    %p133 = por %p131, %p132
    %s135 = sadd.s32 %s134, 1
    %p138 = scmp.eq.s32.totalorder %s16, 1
    %p139 = scmp.ne.s32.totalorder %s134, %s136
    %p140 = scmp.eq.s32.totalorder %s16, 0
    %p141 = por %p139, %p140
    %p142 = scmp.ne.s32.totalorder %s134, %s136
    %p143 = scmp.eq.s32.totalorder %s21, 1
    %p144 = por %p142, %p143
    %p145 = scmp.ne.s32.totalorder %s136, %s137
    %p146 = scmp.eq.s32.totalorder %s21, 0
    %p147 = por %p145, %p146
    %p148 = scmp.ne.s32.totalorder %s136, %s137
    %p149 = scmp.eq.s32.totalorder %s22, 1
    %p150 = por %p148, %p149
    %p152 = scmp.ne.s32.totalorder %s137, %s151
    %p153 = scmp.eq.s32.totalorder %s22, 0
    %p154 = por %p152, %p153
    %s156 = sadd.s32 %s155, 1
    %p159 = scmp.eq.s32.totalorder %s16, 1
    %p160 = scmp.ne.s32.totalorder %s155, %s157
    %p161 = scmp.eq.s32.totalorder %s16, 0
    %p162 = por %p160, %p161
    %p163 = scmp.ne.s32.totalorder %s155, %s157
    %p164 = scmp.eq.s32.totalorder %s21, 1
    %p165 = por %p163, %p164
    %p166 = scmp.ne.s32.totalorder %s157, %s158
    %p167 = scmp.eq.s32.totalorder %s21, 0
    %p168 = por %p166, %p167
    %p169 = scmp.ne.s32.totalorder %s157, %s158
    %p170 = scmp.eq.s32.totalorder %s22, 1
    %p171 = por %p169, %p170
    %p173 = scmp.ne.s32.totalorder %s158, %s172
    %p174 = scmp.eq.s32.totalorder %s22, 0
    %p175 = por %p173, %p174
    %s177 = sadd.s32 %s176, 1
    %p180 = scmp.eq.s32.totalorder %s16, 1
    %p181 = scmp.ne.s32.totalorder %s176, %s178
    %p182 = scmp.eq.s32.totalorder %s16, 0
    %p183 = por %p181, %p182
    %p184 = scmp.ne.s32.totalorder %s176, %s178
    %p185 = scmp.eq.s32.totalorder %s21, 1
    %p186 = por %p184, %p185
    %p187 = scmp.ne.s32.totalorder %s178, %s179
    %p188 = scmp.eq.s32.totalorder %s21, 0
    %p189 = por %p187, %p188
    %p190 = scmp.ne.s32.totalorder %s178, %s179
    %p191 = scmp.eq.s32.totalorder %s22, 1
    %p192 = por %p190, %p191
    %p194 = scmp.ne.s32.totalorder %s179, %s193
    %p195 = scmp.eq.s32.totalorder %s22, 0
    %p196 = por %p194, %p195
    %s198 = sadd.s32 %s197, 1
    %p201 = scmp.eq.s32.totalorder %s16, 1
    %p202 = scmp.ne.s32.totalorder %s197, %s199
    %p203 = scmp.eq.s32.totalorder %s16, 0
    %p204 = por %p202, %p203
    %p205 = scmp.ne.s32.totalorder %s197, %s199
    %p206 = scmp.eq.s32.totalorder %s21, 1
    %p207 = por %p205, %p206
    %p208 = scmp.ne.s32.totalorder %s199, %s200
    %p209 = scmp.eq.s32.totalorder %s21, 0
    %p210 = por %p208, %p209
    %p211 = scmp.ne.s32.totalorder %s199, %s200
    %p212 = scmp.eq.s32.totalorder %s22, 1
    %p213 = por %p211, %p212
    %p215 = scmp.ne.s32.totalorder %s200, %s214
    %p216 = scmp.eq.s32.totalorder %s22, 0
    %p217 = por %p215, %p216
    %s218 = ssub.s32 %s23, %s35
    %p219 = scmp.eq.s32.totalorder %s218, 0
    %s221 = sadd.s32 %s220, 1
    %s222 = scalar_select %p219, %s220, %s221
    %p225 = pneg %p219
    %p226 = scmp.eq.s32.totalorder %s16, 1
    %p227 = por %p225, %p226
    %p228 = scmp.ne.s32.totalorder %s220, %s223
    %p229 = scmp.eq.s32.totalorder %s16, 0
    %p230 = por %p228, %p229
    %p231 = scmp.ne.s32.totalorder %s220, %s223
    %p232 = scmp.eq.s32.totalorder %s21, 1
    %p233 = por %p231, %p232
    %p234 = scmp.ne.s32.totalorder %s223, %s224
    %p235 = scmp.eq.s32.totalorder %s21, 0
    %p236 = por %p234, %p235
    %p237 = scmp.ne.s32.totalorder %s223, %s224
    %p238 = scmp.eq.s32.totalorder %s22, 1
    %p239 = por %p237, %p238
    %p241 = scmp.ne.s32.totalorder %s224, %s240
    %p242 = scmp.eq.s32.totalorder %s22, 0
    %p243 = por %p241, %p242
    %s244 = ssub.s32 %s23, %s35
    %p245 = scmp.eq.s32.totalorder %s244, 0
    %s247 = sadd.s32 %s246, 1
    %s248 = scalar_select %p245, %s246, %s247
    %p251 = pneg %p245
    %p252 = scmp.eq.s32.totalorder %s16, 1
    %p253 = por %p251, %p252
    %p254 = scmp.ne.s32.totalorder %s246, %s249
    %p255 = scmp.eq.s32.totalorder %s16, 0
    %p256 = por %p254, %p255
    %p257 = scmp.ne.s32.totalorder %s246, %s249
    %p258 = scmp.eq.s32.totalorder %s21, 1
    %p259 = por %p257, %p258
    %p260 = scmp.ne.s32.totalorder %s249, %s250
    %p261 = scmp.eq.s32.totalorder %s21, 0
    %p262 = por %p260, %p261
    %p263 = scmp.ne.s32.totalorder %s249, %s250
    %p264 = scmp.eq.s32.totalorder %s22, 1
    %p265 = por %p263, %p264
    %p267 = scmp.ne.s32.totalorder %s250, %s266
    %p268 = scmp.eq.s32.totalorder %s22, 0
    %p269 = por %p267, %p268
    %p270 = scmp.le.s32.totalorder 1, %s16
    %p271 = scmp.lt.s32.totalorder %s16, 3
    %p272 = pnand %p270, %p271
    %p273 = pneg %p272
    // Predicated region
    $region9: #{ext_summarizer_forward.1} parent=5 // pred_check
      _
    $region10: #{ext_summarizer_forward.1} parent=5 // pred_check_branch
      %275 = sbr.rel (%p272) target = $region12
    $region11: #{ext_summarizer_forward.1} parent=5 // pred_region
      %s276 = ssub.s32 %s16, 1
      // Predicated region
      $region13: #{ext_summarizer_forward.1} parent=11 // pred_check
        %p277 = pneg %p105
      $region14: #{ext_summarizer_forward.1} parent=11 // pred_check_branch
        %279 = sbr.rel (%p277) target = $region16
      $region15: #{ext_summarizer_forward.1} parent=11 // pred_region
        _
      $region16: #{ext_summarizer_forward.1} parent=11 // pred_fallthru
        _
      // Predicated region
      $region17: #{ext_summarizer_forward.1} parent=11 // pred_check
        %p280 = pneg %p126
      $region18: #{ext_summarizer_forward.1} parent=11 // pred_check_branch
        %282 = sbr.rel (%p280) target = $region20
      $region19: #{ext_summarizer_forward.1} parent=11 // pred_region
        _
      $region20: #{ext_summarizer_forward.1} parent=11 // pred_fallthru
        _
      // Predicated region
      $region21: #{ext_summarizer_forward.1} parent=11 // pred_check
        %p283 = pneg %p147
      $region22: #{ext_summarizer_forward.1} parent=11 // pred_check_branch
        %285 = sbr.rel (%p283) target = $region24
      $region23: #{ext_summarizer_forward.1} parent=11 // pred_region
        _
      $region24: #{ext_summarizer_forward.1} parent=11 // pred_fallthru
        _
      // Predicated region
      $region25: #{ext_summarizer_forward.1} parent=11 // pred_check
        %p286 = pneg %p168
      $region26: #{ext_summarizer_forward.1} parent=11 // pred_check_branch
        %288 = sbr.rel (%p286) target = $region28
      $region27: #{ext_summarizer_forward.1} parent=11 // pred_region
        _
      $region28: #{ext_summarizer_forward.1} parent=11 // pred_fallthru
        _
      // Predicated region
      $region29: #{ext_summarizer_forward.1} parent=11 // pred_check
        %p289 = pneg %p189
      $region30: #{ext_summarizer_forward.1} parent=11 // pred_check_branch
        %291 = sbr.rel (%p289) target = $region32
      $region31: #{ext_summarizer_forward.1} parent=11 // pred_region
        _
      $region32: #{ext_summarizer_forward.1} parent=11 // pred_fallthru
        _
      // Predicated region
      $region33: #{ext_summarizer_forward.1} parent=11 // pred_check
        %p292 = pneg %p210
      $region34: #{ext_summarizer_forward.1} parent=11 // pred_check_branch
        %294 = sbr.rel (%p292) target = $region36
      $region35: #{ext_summarizer_forward.1} parent=11 // pred_region
        _
      $region36: #{ext_summarizer_forward.1} parent=11 // pred_fallthru
        _
    $region12: #{ext_summarizer_forward.1} parent=5 // pred_fallthru
      _
    %p295 = scmp.lt.s32.totalorder %s16, 2
    // Predicated region
    $region37: #{ext_summarizer_forward.1} parent=5 // pred_check
      %p296 = pneg %p295
    $region38: #{ext_summarizer_forward.1} parent=5 // pred_check_branch
      %298 = sbr.rel (%p296) target = $region40
    $region39: #{ext_summarizer_forward.1} parent=5 // pred_region
      // Predicated region
      $region41: #{ext_summarizer_forward.1} parent=39 // pred_check
        %p299 = pneg %p50
      $region42: #{ext_summarizer_forward.1} parent=39 // pred_check_branch
        %301 = sbr.rel (%p299) target = $region44
      $region43: #{ext_summarizer_forward.1} parent=39 // pred_region
        %s302 = smul.u32 16, %s24
        %p303 = scmp.lt.s32.totalorder %s23, 1
        %s304 = scalar_select %p303, %s23, 1
        %p305 = scmp.lt.s32.totalorder %s302, 15
        %s306 = scalar_select %p305, %s302, 15
        %s307 = smul.addr %s306, 6
        %s308 = smul.addr %s304, 96
        %s309 = sadd.s32 %s307, %s308
        %s310 = smul.addr %s309, 4
        %s311 = scalar_lea.vmem %s0, %s310
        %s312 = smul.u32 16, %s24
      $region44: #{ext_summarizer_forward.1} parent=39 // pred_fallthru
        _
      // Predicated region
      $region45: #{ext_summarizer_forward.1} parent=39 // pred_check
        %p313 = pneg %p78
      $region46: #{ext_summarizer_forward.1} parent=39 // pred_check_branch
        %315 = sbr.rel (%p313) target = $region48
      $region47: #{ext_summarizer_forward.1} parent=39 // pred_region
        %p316 = scmp.lt.s32.totalorder %s23, 1
        %s317 = scalar_select %p316, %s23, 1
        %p318 = scmp.lt.s32.totalorder %s24, 0
        %s319 = scalar_select %p318, %s24, 0
        %s320 = smul.addr %s317, 6
        %s321 = sadd.s32 %s319, %s320
        %s322 = smul.addr %s321, 4
        %s323 = scalar_lea.vmem %s1, %s322
      $region48: #{ext_summarizer_forward.1} parent=39 // pred_fallthru
        _
      // Predicated region
      $region49: #{ext_summarizer_forward.1} parent=39 // pred_check
        %p324 = pneg %p230
      $region50: #{ext_summarizer_forward.1} parent=39 // pred_check_branch
        %326 = sbr.rel (%p324) target = $region52
      $region51: #{ext_summarizer_forward.1} parent=39 // pred_region
        %p327 = scmp.lt.s32.totalorder %s23, 1
        %s328 = scalar_select %p327, %s23, 1
        %s329 = smul.addr %s328, 4
        %s330 = scalar_lea.vmem %s8, %s329
      $region52: #{ext_summarizer_forward.1} parent=39 // pred_fallthru
        _
    $region40: #{ext_summarizer_forward.1} parent=5 // pred_fallthru
      _
    %p331 = scmp.le.s32.totalorder 1, %s16
    %p332 = scmp.lt.s32.totalorder %s16, 3
    %p333 = pnand %p331, %p332
    %p334 = pneg %p333
    // Predicated region
    $region53: #{ext_summarizer_forward.1} parent=5 // pred_check
      _
    $region54: #{ext_summarizer_forward.1} parent=5 // pred_check_branch
      %336 = sbr.rel (%p333) target = $region56
    $region55: #{ext_summarizer_forward.1} parent=5 // pred_region
      %s337 = ssub.s32 %s16, 1
      %s338 = smul.u32 16, %s26
      %p339 = scmp.lt.s32.totalorder %s25, 1
      %s340 = scalar_select %p339, %s25, 1
      %p341 = scmp.lt.s32.totalorder %s338, 15
      %s342 = scalar_select %p341, %s338, 15
      %s343 = smul.addr %s342, 6
      %s344 = smul.addr %s340, 96
      %s345 = sadd.s32 %s343, %s344
      %s346 = smul.addr %s345, 4
      %s347 = scalar_lea.vmem %s0, %s346
      %p348 = pneg %p56
      %p349 = pneg %p53
      %p350 = scmp.lt.s32.totalorder %s25, 1
      %s351 = scalar_select %p350, %s25, 1
      %p352 = scmp.lt.s32.totalorder %s26, 0
      %s353 = scalar_select %p352, %s26, 0
      %s354 = smul.addr %s351, 6
      %s355 = sadd.s32 %s353, %s354
      %s356 = smul.addr %s355, 4
      %s357 = scalar_lea.vmem %s1, %s356
      %p358 = pneg %p84
      %p359 = pneg %p81
      %p360 = pneg %p105
      %p361 = pneg %p102
      %p362 = pneg %p126
      %p363 = pneg %p123
      %p364 = pneg %p147
      %p365 = pneg %p144
      %p366 = pneg %p168
      %p367 = pneg %p165
      %p368 = pneg %p189
      %p369 = pneg %p186
      %p370 = pneg %p210
      %p371 = pneg %p207
      %p372 = scmp.lt.s32.totalorder %s25, 1
      %s373 = scalar_select %p372, %s25, 1
      %s374 = smul.addr %s373, 4
      %s375 = scalar_lea.vmem %s8, %s374
      %p376 = pneg %p236
      %p377 = pneg %p233
      %p378 = pneg %p262
      %p379 = pneg %p259
      %p380 = scmp.lt.s32.totalorder %s25, 1
      %s381 = scalar_select %p380, %s25, 1
      %s382 = smul.addr %s381, 4
      %s383 = scalar_lea.vmem %s9, %s382
      %s384 = smul.u32 16, %s26
      %p385 = scmp.lt.s32.totalorder %s25, 1
      %s386 = scalar_select %p385, %s25, 1
      %p387 = scmp.lt.s32.totalorder %s384, 15
      %s388 = scalar_select %p387, %s384, 15
      %s389 = smul.addr %s388, 6
      %s390 = smul.addr %s386, 96
      %s391 = sadd.s32 %s389, %s390
      %s392 = smul.addr %s391, 4
      %s393 = scalar_lea.vmem %s0, %s392
      %s394 = smul.u32 16, %s26
      %p395 = scmp.lt.s32.totalorder %s25, 1
      %s396 = scalar_select %p395, %s25, 1
      %p397 = scmp.lt.s32.totalorder %s26, 0
      %s398 = scalar_select %p397, %s26, 0
      %s399 = smul.addr %s396, 6
      %s400 = sadd.s32 %s398, %s399
      %s401 = smul.addr %s400, 4
      %s402 = scalar_lea.vmem %s1, %s401
      %p403 = scmp.lt.s32.totalorder %s25, 1
      %s404 = scalar_select %p403, %s25, 1
      %s405 = smul.addr %s404, 4
      %s406 = scalar_lea.vmem %s8, %s405
      %p407 = scmp.lt.s32.totalorder %s25, 1
      %s408 = scalar_select %p407, %s25, 1
      %s409 = smul.addr %s408, 4
      %s410 = scalar_lea.vmem %s9, %s409
      %p411 = scmp.eq.s32.totalorder %s26, 0
      // Predicated region
      $region57: #{ext_summarizer_forward.1} parent=55 // pred_check
        %p412 = pneg %p411
      $region58: #{ext_summarizer_forward.1} parent=55 // pred_check_branch
        %414 = sbr.rel (%p412) target = $region60
      $region59: #{ext_summarizer_forward.1} parent=55 // pred_region
        %415 = vst [vmem:[#allocation2] sm:$0xff] 0.0
        %416 = vst [vmem:[#allocation2 + $0x8] sm:$0xff] 0.0
        %417 = vst [vmem:[#allocation2 + $0x10] sm:$0xff] 0.0
      $region60: #{ext_summarizer_forward.1} parent=55 // pred_fallthru
        _
      %v418 = vld [vmem:[%s393] sm:$0xff]
      %v419 = vld [vmem:[%s393 + $0x8] sm:$0xff]
      %v420 = vld [vmem:[%s393 + $0x10] sm:$0xff]
      %v421 = vld [vmem:[%s393 + $0x18] sm:$0xff]
      %v422 = vld [vmem:[%s393 + $0x20] sm:$0xff]
      %v423 = vld [vmem:[%s393 + $0x28] sm:$0xff]
      %v424 = vld [vmem:[%s393 + $0x30] sm:$0xff]
      %v425 = vld [vmem:[%s393 + $0x38] sm:$0xff]
      %v426 = vld [vmem:[%s393 + $0x40] sm:$0xff]
      %v427 = vld [vmem:[%s393 + $0x48] sm:$0xff]
      %v428 = vld [vmem:[%s393 + $0x50] sm:$0xff]
      %v429 = vld [vmem:[%s393 + $0x58] sm:$0xff]
      %v430 = vld [vmem:[%s393 + $0x60] sm:$0xff]
      %v431 = vld [vmem:[%s393 + $0x68] sm:$0xff]
      %v432 = vld [vmem:[%s393 + $0x70] sm:$0xff]
      %v433 = vld [vmem:[%s393 + $0x78] sm:$0xff]
      %v434 = vld [vmem:[%s393 + $0x80] sm:$0xff]
      %v435 = vld [vmem:[%s393 + $0x88] sm:$0xff]
      %v436 = vld [vmem:[%s393 + $0x90] sm:$0xff]
      %v437 = vld [vmem:[%s393 + $0x98] sm:$0xff]
      %v438 = vld [vmem:[%s393 + $0xa0] sm:$0xff]
      %v439 = vld [vmem:[%s393 + $0xa8] sm:$0xff]
      %v440 = vld [vmem:[%s393 + $0xb0] sm:$0xff]
      %v441 = vld [vmem:[%s393 + $0xb8] sm:$0xff]
      %v442 = vld [vmem:[%s393 + $0xc0] sm:$0xff]
      %v443 = vld [vmem:[%s393 + $0xc8] sm:$0xff]
      %v444 = vld [vmem:[%s393 + $0xd0] sm:$0xff]
      %v445 = vld [vmem:[%s393 + $0xd8] sm:$0xff]
      %v446 = vld [vmem:[%s393 + $0xe0] sm:$0xff]
      %v447 = vld [vmem:[%s393 + $0xe8] sm:$0xff]
      %v448 = vld [vmem:[%s393 + $0xf0] sm:$0xff]
      %v449 = vld [vmem:[%s393 + $0xf8] sm:$0xff]
      %v450 = vld [vmem:[%s393 + $0x100] sm:$0xff]
      %v451 = vld [vmem:[%s393 + $0x108] sm:$0xff]
      %v452 = vld [vmem:[%s393 + $0x110] sm:$0xff]
      %v453 = vld [vmem:[%s393 + $0x118] sm:$0xff]
      %v454 = vld [vmem:[%s393 + $0x120] sm:$0xff]
      %v455 = vld [vmem:[%s393 + $0x128] sm:$0xff]
      %v456 = vld [vmem:[%s393 + $0x130] sm:$0xff]
      %v457 = vld [vmem:[%s393 + $0x138] sm:$0xff]
      %v458 = vld [vmem:[%s393 + $0x140] sm:$0xff]
      %v459 = vld [vmem:[%s393 + $0x148] sm:$0xff]
      %v460 = vld [vmem:[%s393 + $0x150] sm:$0xff]
      %v461 = vld [vmem:[%s393 + $0x158] sm:$0xff]
      %v462 = vld [vmem:[%s393 + $0x160] sm:$0xff]
      %v463 = vld [vmem:[%s393 + $0x168] sm:$0xff]
      %v464 = vld [vmem:[%s393 + $0x170] sm:$0xff]
      %v465 = vld [vmem:[%s393 + $0x178] sm:$0xff]
      %v466 = vld [vmem:[%s2] sm:$0xff]
      %v467 = vld [vmem:[%s2 + $0x8] sm:$0xff]
      %v468 = vld [vmem:[%s2 + $0x10] sm:$0xff]
      %v469 = vld [vmem:[%s2 + $0x18] sm:$0xff]
      %v470 = vld [vmem:[%s2 + $0x20] sm:$0xff]
      %v471 = vld [vmem:[%s2 + $0x28] sm:$0xff]
      %v472 = vld [vmem:[%s2 + $0x30] sm:$0xff]
      %v473 = vld [vmem:[%s2 + $0x38] sm:$0xff]
      %v474 = vld [vmem:[%s2 + $0x40] sm:$0xff]
      %v475 = vld [vmem:[%s2 + $0x48] sm:$0xff]
      %v476 = vld [vmem:[%s2 + $0x50] sm:$0xff]
      %v477 = vld [vmem:[%s2 + $0x58] sm:$0xff]
      %v478 = vld [vmem:[%s2 + $0x60] sm:$0xff]
      %v479 = vld [vmem:[%s2 + $0x68] sm:$0xff]
      %v480 = vld [vmem:[%s2 + $0x70] sm:$0xff]
      %v481 = vld [vmem:[%s2 + $0x78] sm:$0xff]
      %v482 = vld [vmem:[%s2 + $0x80] sm:$0xff]
      %v483 = vld [vmem:[%s2 + $0x88] sm:$0xff]
      %v484 = vld [vmem:[%s2 + $0x90] sm:$0xff]
      %v485 = vld [vmem:[%s2 + $0x98] sm:$0xff]
      %v486 = vld [vmem:[%s2 + $0xa0] sm:$0xff]
      %v487 = vld [vmem:[%s2 + $0xa8] sm:$0xff]
      %v488 = vld [vmem:[%s2 + $0xb0] sm:$0xff]
      %v489 = vld [vmem:[%s2 + $0xb8] sm:$0xff]
      %v490 = vld [vmem:[%s2 + $0xc0] sm:$0xff]
      %v491 = vld [vmem:[%s2 + $0xc8] sm:$0xff]
      %v492 = vld [vmem:[%s2 + $0xd0] sm:$0xff]
      %v493 = vld [vmem:[%s2 + $0xd8] sm:$0xff]
      %v494 = vld [vmem:[%s2 + $0xe0] sm:$0xff]
      %v495 = vld [vmem:[%s2 + $0xe8] sm:$0xff]
      %v496 = vld [vmem:[%s2 + $0xf0] sm:$0xff]
      %v497 = vld [vmem:[%s2 + $0xf8] sm:$0xff]
      %v498 = vld [vmem:[%s2 + $0x100] sm:$0xff]
      %v499 = vld [vmem:[%s2 + $0x108] sm:$0xff]
      %v500 = vld [vmem:[%s2 + $0x110] sm:$0xff]
      %v501 = vld [vmem:[%s2 + $0x118] sm:$0xff]
      %v502 = vld [vmem:[%s2 + $0x120] sm:$0xff]
      %v503 = vld [vmem:[%s2 + $0x128] sm:$0xff]
      %v504 = vld [vmem:[%s2 + $0x130] sm:$0xff]
      %v505 = vld [vmem:[%s2 + $0x138] sm:$0xff]
      %v506 = vld [vmem:[%s2 + $0x140] sm:$0xff]
      %v507 = vld [vmem:[%s2 + $0x148] sm:$0xff]
      %v508 = vld [vmem:[%s2 + $0x150] sm:$0xff]
      %v509 = vld [vmem:[%s2 + $0x158] sm:$0xff]
      %v510 = vld [vmem:[%s2 + $0x160] sm:$0xff]
      %v511 = vld [vmem:[%s2 + $0x168] sm:$0xff]
      %v512 = vld [vmem:[%s2 + $0x170] sm:$0xff]
      %v513 = vld [vmem:[%s2 + $0x178] sm:$0xff]
      %v514 = vld [vmem:[%s2 + $0x180] sm:$0xff]
      %v515 = vld [vmem:[%s2 + $0x188] sm:$0xff]
      %v516 = vld [vmem:[%s2 + $0x190] sm:$0xff]
      %v517 = vld [vmem:[%s2 + $0x198] sm:$0xff]
      %v518 = vld [vmem:[%s2 + $0x1a0] sm:$0xff]
      %v519 = vld [vmem:[%s2 + $0x1a8] sm:$0xff]
      %v520 = vld [vmem:[%s2 + $0x1b0] sm:$0xff]
      %v521 = vld [vmem:[%s2 + $0x1b8] sm:$0xff]
      %v522 = vld [vmem:[%s2 + $0x1c0] sm:$0xff]
      %v523 = vld [vmem:[%s2 + $0x1c8] sm:$0xff]
      %v524 = vld [vmem:[%s2 + $0x1d0] sm:$0xff]
      %v525 = vld [vmem:[%s2 + $0x1d8] sm:$0xff]
      %v526 = vld [vmem:[%s2 + $0x1e0] sm:$0xff]
      %v527 = vld [vmem:[%s2 + $0x1e8] sm:$0xff]
      %v528 = vld [vmem:[%s2 + $0x1f0] sm:$0xff]
      %v529 = vld [vmem:[%s2 + $0x1f8] sm:$0xff]
      %v530 = vld [vmem:[%s2 + $0x200] sm:$0xff]
      %v531 = vld [vmem:[%s2 + $0x208] sm:$0xff]
      %v532 = vld [vmem:[%s2 + $0x210] sm:$0xff]
      %v533 = vld [vmem:[%s2 + $0x218] sm:$0xff]
      %v534 = vld [vmem:[%s2 + $0x220] sm:$0xff]
      %v535 = vld [vmem:[%s2 + $0x228] sm:$0xff]
      %v536 = vld [vmem:[%s2 + $0x230] sm:$0xff]
      %v537 = vld [vmem:[%s2 + $0x238] sm:$0xff]
      %v538 = vld [vmem:[%s2 + $0x240] sm:$0xff]
      %v539 = vld [vmem:[%s2 + $0x248] sm:$0xff]
      %v540 = vld [vmem:[%s2 + $0x250] sm:$0xff]
      %v541 = vld [vmem:[%s2 + $0x258] sm:$0xff]
      %v542 = vld [vmem:[%s2 + $0x260] sm:$0xff]
      %v543 = vld [vmem:[%s2 + $0x268] sm:$0xff]
      %v544 = vld [vmem:[%s2 + $0x270] sm:$0xff]
      %v545 = vld [vmem:[%s2 + $0x278] sm:$0xff]
      %v546 = vld [vmem:[%s2 + $0x280] sm:$0xff]
      %v547 = vld [vmem:[%s2 + $0x288] sm:$0xff]
      %v548 = vld [vmem:[%s2 + $0x290] sm:$0xff]
      %v549 = vld [vmem:[%s2 + $0x298] sm:$0xff]
      %v550 = vld [vmem:[%s2 + $0x2a0] sm:$0xff]
      %v551 = vld [vmem:[%s2 + $0x2a8] sm:$0xff]
      %v552 = vld [vmem:[%s2 + $0x2b0] sm:$0xff]
      %v553 = vld [vmem:[%s2 + $0x2b8] sm:$0xff]
      %v554 = vld [vmem:[%s2 + $0x2c0] sm:$0xff]
      %v555 = vld [vmem:[%s2 + $0x2c8] sm:$0xff]
      %v556 = vld [vmem:[%s2 + $0x2d0] sm:$0xff]
      %v557 = vld [vmem:[%s2 + $0x2d8] sm:$0xff]
      %v558 = vld [vmem:[%s2 + $0x2e0] sm:$0xff]
      %v559 = vld [vmem:[%s2 + $0x2e8] sm:$0xff]
      %v560 = vld [vmem:[%s2 + $0x2f0] sm:$0xff]
      %v561 = vld [vmem:[%s2 + $0x2f8] sm:$0xff]
      %v562 = vld [vmem:[%s2 + $0x300] sm:$0xff]
      %v563 = vld [vmem:[%s2 + $0x308] sm:$0xff]
      %v564 = vld [vmem:[%s2 + $0x310] sm:$0xff]
      %v565 = vld [vmem:[%s2 + $0x318] sm:$0xff]
      %v566 = vld [vmem:[%s2 + $0x320] sm:$0xff]
      %v567 = vld [vmem:[%s2 + $0x328] sm:$0xff]
      %v568 = vld [vmem:[%s2 + $0x330] sm:$0xff]
      %v569 = vld [vmem:[%s2 + $0x338] sm:$0xff]
      %v570 = vld [vmem:[%s2 + $0x340] sm:$0xff]
      %v571 = vld [vmem:[%s2 + $0x348] sm:$0xff]
      %v572 = vld [vmem:[%s2 + $0x350] sm:$0xff]
      %v573 = vld [vmem:[%s2 + $0x358] sm:$0xff]
      %v574 = vld [vmem:[%s2 + $0x360] sm:$0xff]
      %v575 = vld [vmem:[%s2 + $0x368] sm:$0xff]
      %v576 = vld [vmem:[%s2 + $0x370] sm:$0xff]
      %v577 = vld [vmem:[%s2 + $0x378] sm:$0xff]
      %v578 = vld [vmem:[%s2 + $0x380] sm:$0xff]
      %v579 = vld [vmem:[%s2 + $0x388] sm:$0xff]
      %v580 = vld [vmem:[%s2 + $0x390] sm:$0xff]
      %v581 = vld [vmem:[%s2 + $0x398] sm:$0xff]
      %v582 = vld [vmem:[%s2 + $0x3a0] sm:$0xff]
      %v583 = vld [vmem:[%s2 + $0x3a8] sm:$0xff]
      %v584 = vld [vmem:[%s2 + $0x3b0] sm:$0xff]
      %v585 = vld [vmem:[%s2 + $0x3b8] sm:$0xff]
      %v586 = vld [vmem:[%s2 + $0x3c0] sm:$0xff]
      %v587 = vld [vmem:[%s2 + $0x3c8] sm:$0xff]
      %v588 = vld [vmem:[%s2 + $0x3d0] sm:$0xff]
      %v589 = vld [vmem:[%s2 + $0x3d8] sm:$0xff]
      %v590 = vld [vmem:[%s2 + $0x3e0] sm:$0xff]
      %v591 = vld [vmem:[%s2 + $0x3e8] sm:$0xff]
      %v592 = vld [vmem:[%s2 + $0x3f0] sm:$0xff]
      %v593 = vld [vmem:[%s2 + $0x3f8] sm:$0xff]
      %v594 = vld [vmem:[%s2 + $0x400] sm:$0xff]
      %v595 = vld [vmem:[%s2 + $0x408] sm:$0xff]
      %v596 = vld [vmem:[%s2 + $0x410] sm:$0xff]
      %v597 = vld [vmem:[%s2 + $0x418] sm:$0xff]
      %v598 = vld [vmem:[%s2 + $0x420] sm:$0xff]
      %v599 = vld [vmem:[%s2 + $0x428] sm:$0xff]
      %v600 = vld [vmem:[%s2 + $0x430] sm:$0xff]
      %v601 = vld [vmem:[%s2 + $0x438] sm:$0xff]
      %v602 = vld [vmem:[%s2 + $0x440] sm:$0xff]
      %v603 = vld [vmem:[%s2 + $0x448] sm:$0xff]
      %v604 = vld [vmem:[%s2 + $0x450] sm:$0xff]
      %v605 = vld [vmem:[%s2 + $0x458] sm:$0xff]
      %v606 = vld [vmem:[%s2 + $0x460] sm:$0xff]
      %v607 = vld [vmem:[%s2 + $0x468] sm:$0xff]
      %v608 = vld [vmem:[%s2 + $0x470] sm:$0xff]
      %v609 = vld [vmem:[%s2 + $0x478] sm:$0xff]
      %v610 = vld [vmem:[%s2 + $0x480] sm:$0xff]
      %v611 = vld [vmem:[%s2 + $0x488] sm:$0xff]
      %v612 = vld [vmem:[%s2 + $0x490] sm:$0xff]
      %v613 = vld [vmem:[%s2 + $0x498] sm:$0xff]
      %v614 = vld [vmem:[%s2 + $0x4a0] sm:$0xff]
      %v615 = vld [vmem:[%s2 + $0x4a8] sm:$0xff]
      %v616 = vld [vmem:[%s2 + $0x4b0] sm:$0xff]
      %v617 = vld [vmem:[%s2 + $0x4b8] sm:$0xff]
      %v618 = vld [vmem:[%s2 + $0x4c0] sm:$0xff]
      %v619 = vld [vmem:[%s2 + $0x4c8] sm:$0xff]
      %v620 = vld [vmem:[%s2 + $0x4d0] sm:$0xff]
      %v621 = vld [vmem:[%s2 + $0x4d8] sm:$0xff]
      %v622 = vld [vmem:[%s2 + $0x4e0] sm:$0xff]
      %v623 = vld [vmem:[%s2 + $0x4e8] sm:$0xff]
      %v624 = vld [vmem:[%s2 + $0x4f0] sm:$0xff]
      %v625 = vld [vmem:[%s2 + $0x4f8] sm:$0xff]
      %v626 = vld [vmem:[%s2 + $0x500] sm:$0xff]
      %v627 = vld [vmem:[%s2 + $0x508] sm:$0xff]
      %v628 = vld [vmem:[%s2 + $0x510] sm:$0xff]
      %v629 = vld [vmem:[%s2 + $0x518] sm:$0xff]
      %v630 = vld [vmem:[%s2 + $0x520] sm:$0xff]
      %v631 = vld [vmem:[%s2 + $0x528] sm:$0xff]
      %v632 = vld [vmem:[%s2 + $0x530] sm:$0xff]
      %v633 = vld [vmem:[%s2 + $0x538] sm:$0xff]
      %v634 = vld [vmem:[%s2 + $0x540] sm:$0xff]
      %v635 = vld [vmem:[%s2 + $0x548] sm:$0xff]
      %v636 = vld [vmem:[%s2 + $0x550] sm:$0xff]
      %v637 = vld [vmem:[%s2 + $0x558] sm:$0xff]
      %v638 = vld [vmem:[%s2 + $0x560] sm:$0xff]
      %v639 = vld [vmem:[%s2 + $0x568] sm:$0xff]
      %v640 = vld [vmem:[%s2 + $0x570] sm:$0xff]
      %v641 = vld [vmem:[%s2 + $0x578] sm:$0xff]
      %v642 = vld [vmem:[%s2 + $0x580] sm:$0xff]
      %v643 = vld [vmem:[%s2 + $0x588] sm:$0xff]
      %v644 = vld [vmem:[%s2 + $0x590] sm:$0xff]
      %v645 = vld [vmem:[%s2 + $0x598] sm:$0xff]
      %v646 = vld [vmem:[%s2 + $0x5a0] sm:$0xff]
      %v647 = vld [vmem:[%s2 + $0x5a8] sm:$0xff]
      %v648 = vld [vmem:[%s2 + $0x5b0] sm:$0xff]
      %v649 = vld [vmem:[%s2 + $0x5b8] sm:$0xff]
      %v650 = vld [vmem:[%s2 + $0x5c0] sm:$0xff]
      %v651 = vld [vmem:[%s2 + $0x5c8] sm:$0xff]
      %v652 = vld [vmem:[%s2 + $0x5d0] sm:$0xff]
      %v653 = vld [vmem:[%s2 + $0x5d8] sm:$0xff]
      %v654 = vld [vmem:[%s2 + $0x5e0] sm:$0xff]
      %v655 = vld [vmem:[%s2 + $0x5e8] sm:$0xff]
      %v656 = vld [vmem:[%s2 + $0x5f0] sm:$0xff]
      %v657 = vld [vmem:[%s2 + $0x5f8] sm:$0xff]
      %v658 = vld [vmem:[%s2 + $0x600] sm:$0xff]
      %v659 = vld [vmem:[%s2 + $0x608] sm:$0xff]
      %v660 = vld [vmem:[%s2 + $0x610] sm:$0xff]
      %v661 = vld [vmem:[%s2 + $0x618] sm:$0xff]
      %v662 = vld [vmem:[%s2 + $0x620] sm:$0xff]
      %v663 = vld [vmem:[%s2 + $0x628] sm:$0xff]
      %v664 = vld [vmem:[%s2 + $0x630] sm:$0xff]
      %v665 = vld [vmem:[%s2 + $0x638] sm:$0xff]
      %v666 = vld [vmem:[%s2 + $0x640] sm:$0xff]
      %v667 = vld [vmem:[%s2 + $0x648] sm:$0xff]
      %v668 = vld [vmem:[%s2 + $0x650] sm:$0xff]
      %v669 = vld [vmem:[%s2 + $0x658] sm:$0xff]
      %v670 = vld [vmem:[%s2 + $0x660] sm:$0xff]
      %v671 = vld [vmem:[%s2 + $0x668] sm:$0xff]
      %v672 = vld [vmem:[%s2 + $0x670] sm:$0xff]
      %v673 = vld [vmem:[%s2 + $0x678] sm:$0xff]
      %v674 = vld [vmem:[%s2 + $0x680] sm:$0xff]
      %v675 = vld [vmem:[%s2 + $0x688] sm:$0xff]
      %v676 = vld [vmem:[%s2 + $0x690] sm:$0xff]
      %v677 = vld [vmem:[%s2 + $0x698] sm:$0xff]
      %v678 = vld [vmem:[%s2 + $0x6a0] sm:$0xff]
      %v679 = vld [vmem:[%s2 + $0x6a8] sm:$0xff]
      %v680 = vld [vmem:[%s2 + $0x6b0] sm:$0xff]
      %v681 = vld [vmem:[%s2 + $0x6b8] sm:$0xff]
      %v682 = vld [vmem:[%s2 + $0x6c0] sm:$0xff]
      %v683 = vld [vmem:[%s2 + $0x6c8] sm:$0xff]
      %v684 = vld [vmem:[%s2 + $0x6d0] sm:$0xff]
      %v685 = vld [vmem:[%s2 + $0x6d8] sm:$0xff]
      %v686 = vld [vmem:[%s2 + $0x6e0] sm:$0xff]
      %v687 = vld [vmem:[%s2 + $0x6e8] sm:$0xff]
      %v688 = vld [vmem:[%s2 + $0x6f0] sm:$0xff]
      %v689 = vld [vmem:[%s2 + $0x6f8] sm:$0xff]
      %v690 = vld [vmem:[%s2 + $0x700] sm:$0xff]
      %v691 = vld [vmem:[%s2 + $0x708] sm:$0xff]
      %v692 = vld [vmem:[%s2 + $0x710] sm:$0xff]
      %v693 = vld [vmem:[%s2 + $0x718] sm:$0xff]
      %v694 = vld [vmem:[%s2 + $0x720] sm:$0xff]
      %v695 = vld [vmem:[%s2 + $0x728] sm:$0xff]
      %v696 = vld [vmem:[%s2 + $0x730] sm:$0xff]
      %v697 = vld [vmem:[%s2 + $0x738] sm:$0xff]
      %v698 = vld [vmem:[%s2 + $0x740] sm:$0xff]
      %v699 = vld [vmem:[%s2 + $0x748] sm:$0xff]
      %v700 = vld [vmem:[%s2 + $0x750] sm:$0xff]
      %v701 = vld [vmem:[%s2 + $0x758] sm:$0xff]
      %v702 = vld [vmem:[%s2 + $0x760] sm:$0xff]
      %v703 = vld [vmem:[%s2 + $0x768] sm:$0xff]
      %v704 = vld [vmem:[%s2 + $0x770] sm:$0xff]
      %v705 = vld [vmem:[%s2 + $0x778] sm:$0xff]
      %v706 = vld [vmem:[%s2 + $0x780] sm:$0xff]
      %v707 = vld [vmem:[%s2 + $0x788] sm:$0xff]
      %v708 = vld [vmem:[%s2 + $0x790] sm:$0xff]
      %v709 = vld [vmem:[%s2 + $0x798] sm:$0xff]
      %v710 = vld [vmem:[%s2 + $0x7a0] sm:$0xff]
      %v711 = vld [vmem:[%s2 + $0x7a8] sm:$0xff]
      %v712 = vld [vmem:[%s2 + $0x7b0] sm:$0xff]
      %v713 = vld [vmem:[%s2 + $0x7b8] sm:$0xff]
      %v714 = vld [vmem:[%s2 + $0x7c0] sm:$0xff]
      %v715 = vld [vmem:[%s2 + $0x7c8] sm:$0xff]
      %v716 = vld [vmem:[%s2 + $0x7d0] sm:$0xff]
      %v717 = vld [vmem:[%s2 + $0x7d8] sm:$0xff]
      %v718 = vld [vmem:[%s2 + $0x7e0] sm:$0xff]
      %v719 = vld [vmem:[%s2 + $0x7e8] sm:$0xff]
      %v720 = vld [vmem:[%s2 + $0x7f0] sm:$0xff]
      %v721 = vld [vmem:[%s2 + $0x7f8] sm:$0xff]
      %v722 = vld [vmem:[%s2 + $0x800] sm:$0xff]
      %v723 = vld [vmem:[%s2 + $0x808] sm:$0xff]
      %v724 = vld [vmem:[%s2 + $0x810] sm:$0xff]
      %v725 = vld [vmem:[%s2 + $0x818] sm:$0xff]
      %v726 = vld [vmem:[%s2 + $0x820] sm:$0xff]
      %v727 = vld [vmem:[%s2 + $0x828] sm:$0xff]
      %v728 = vld [vmem:[%s2 + $0x830] sm:$0xff]
      %v729 = vld [vmem:[%s2 + $0x838] sm:$0xff]
      %v730 = vld [vmem:[%s2 + $0x840] sm:$0xff]
      %v731 = vld [vmem:[%s2 + $0x848] sm:$0xff]
      %v732 = vld [vmem:[%s2 + $0x850] sm:$0xff]
      %v733 = vld [vmem:[%s2 + $0x858] sm:$0xff]
      %v734 = vld [vmem:[%s2 + $0x860] sm:$0xff]
      %v735 = vld [vmem:[%s2 + $0x868] sm:$0xff]
      %v736 = vld [vmem:[%s2 + $0x870] sm:$0xff]
      %v737 = vld [vmem:[%s2 + $0x878] sm:$0xff]
      %v738 = vld [vmem:[%s2 + $0x880] sm:$0xff]
      %v739 = vld [vmem:[%s2 + $0x888] sm:$0xff]
      %v740 = vld [vmem:[%s2 + $0x890] sm:$0xff]
      %v741 = vld [vmem:[%s2 + $0x898] sm:$0xff]
      %v742 = vld [vmem:[%s2 + $0x8a0] sm:$0xff]
      %v743 = vld [vmem:[%s2 + $0x8a8] sm:$0xff]
      %v744 = vld [vmem:[%s2 + $0x8b0] sm:$0xff]
      %v745 = vld [vmem:[%s2 + $0x8b8] sm:$0xff]
      %v746 = vld [vmem:[%s2 + $0x8c0] sm:$0xff]
      %v747 = vld [vmem:[%s2 + $0x8c8] sm:$0xff]
      %v748 = vld [vmem:[%s2 + $0x8d0] sm:$0xff]
      %v749 = vld [vmem:[%s2 + $0x8d8] sm:$0xff]
      %v750 = vld [vmem:[%s2 + $0x8e0] sm:$0xff]
      %v751 = vld [vmem:[%s2 + $0x8e8] sm:$0xff]
      %v752 = vld [vmem:[%s2 + $0x8f0] sm:$0xff]
      %v753 = vld [vmem:[%s2 + $0x8f8] sm:$0xff]
      %v802 = vunpack.c.l.b16 %v418
      %v803 = vunpack.c.h.b16 %v418
      %v804 = vunpack.c.l.b16 %v419
      %v805 = vunpack.c.h.b16 %v419
      %v806 = vunpack.c.l.b16 %v420
      %v807 = vunpack.c.h.b16 %v420
      %v808 = vunpack.c.l.b16 %v421
      %v809 = vunpack.c.h.b16 %v421
      %v810 = vunpack.c.l.b16 %v422
      %v811 = vunpack.c.h.b16 %v422
      %v812 = vunpack.c.l.b16 %v423
      %v813 = vunpack.c.h.b16 %v423
      %v814 = vunpack.c.l.b16 %v424
      %v815 = vunpack.c.h.b16 %v424
      %v816 = vunpack.c.l.b16 %v425
      %v817 = vunpack.c.h.b16 %v425
      %v818 = vunpack.c.l.b16 %v426
      %v819 = vunpack.c.h.b16 %v426
      %v820 = vunpack.c.l.b16 %v427
      %v821 = vunpack.c.h.b16 %v427
      %v822 = vunpack.c.l.b16 %v428
      %v823 = vunpack.c.h.b16 %v428
      %v824 = vunpack.c.l.b16 %v429
      %v825 = vunpack.c.h.b16 %v429
      %v826 = vunpack.c.l.b16 %v430
      %v827 = vunpack.c.h.b16 %v430
      %v828 = vunpack.c.l.b16 %v431
      %v829 = vunpack.c.h.b16 %v431
      %v830 = vunpack.c.l.b16 %v432
      %v831 = vunpack.c.h.b16 %v432
      %v832 = vunpack.c.l.b16 %v433
      %v833 = vunpack.c.h.b16 %v433
      %v834 = vunpack.c.l.b16 %v434
      %v835 = vunpack.c.h.b16 %v434
      %v836 = vunpack.c.l.b16 %v435
      %v837 = vunpack.c.h.b16 %v435
      %v838 = vunpack.c.l.b16 %v436
      %v839 = vunpack.c.h.b16 %v436
      %v840 = vunpack.c.l.b16 %v437
      %v841 = vunpack.c.h.b16 %v437
      %v842 = vunpack.c.l.b16 %v438
      %v843 = vunpack.c.h.b16 %v438
      %v844 = vunpack.c.l.b16 %v439
      %v845 = vunpack.c.h.b16 %v439
      %v846 = vunpack.c.l.b16 %v440
      %v847 = vunpack.c.h.b16 %v440
      %v848 = vunpack.c.l.b16 %v441
      %v849 = vunpack.c.h.b16 %v441
      %v850 = vunpack.c.l.b16 %v442
      %v851 = vunpack.c.h.b16 %v442
      %v852 = vunpack.c.l.b16 %v443
      %v853 = vunpack.c.h.b16 %v443
      %v854 = vunpack.c.l.b16 %v444
      %v855 = vunpack.c.h.b16 %v444
      %v856 = vunpack.c.l.b16 %v445
      %v857 = vunpack.c.h.b16 %v445
      %v858 = vunpack.c.l.b16 %v446
      %v859 = vunpack.c.h.b16 %v446
      %v860 = vunpack.c.l.b16 %v447
      %v861 = vunpack.c.h.b16 %v447
      %v862 = vunpack.c.l.b16 %v448
      %v863 = vunpack.c.h.b16 %v448
      %v864 = vunpack.c.l.b16 %v449
      %v865 = vunpack.c.h.b16 %v449
      %v866 = vunpack.c.l.b16 %v450
      %v867 = vunpack.c.h.b16 %v450
      %v868 = vunpack.c.l.b16 %v451
      %v869 = vunpack.c.h.b16 %v451
      %v870 = vunpack.c.l.b16 %v452
      %v871 = vunpack.c.h.b16 %v452
      %v872 = vunpack.c.l.b16 %v453
      %v873 = vunpack.c.h.b16 %v453
      %v874 = vunpack.c.l.b16 %v454
      %v875 = vunpack.c.h.b16 %v454
      %v876 = vunpack.c.l.b16 %v455
      %v877 = vunpack.c.h.b16 %v455
      %v878 = vunpack.c.l.b16 %v456
      %v879 = vunpack.c.h.b16 %v456
      %v880 = vunpack.c.l.b16 %v457
      %v881 = vunpack.c.h.b16 %v457
      %v882 = vunpack.c.l.b16 %v458
      %v883 = vunpack.c.h.b16 %v458
      %v884 = vunpack.c.l.b16 %v459
      %v885 = vunpack.c.h.b16 %v459
      %v886 = vunpack.c.l.b16 %v460
      %v887 = vunpack.c.h.b16 %v460
      %v888 = vunpack.c.l.b16 %v461
      %v889 = vunpack.c.h.b16 %v461
      %v890 = vunpack.c.l.b16 %v462
      %v891 = vunpack.c.h.b16 %v462
      %v892 = vunpack.c.l.b16 %v463
      %v893 = vunpack.c.h.b16 %v463
      %v894 = vunpack.c.l.b16 %v464
      %v895 = vunpack.c.h.b16 %v464
      %v896 = vunpack.c.l.b16 %v465
      %v897 = vunpack.c.h.b16 %v465
      %v898 = vpack.c.b16 %v808, %v802
      %v899 = vpack.c.b16 %v809, %v803
      %v900 = vpack.c.b16 %v810, %v804
      %v901 = vpack.c.b16 %v811, %v805
      %v902 = vpack.c.b16 %v812, %v806
      %v903 = vpack.c.b16 %v813, %v807
      %v904 = vpack.c.b16 %v820, %v814
      %v905 = vpack.c.b16 %v821, %v815
      %v906 = vpack.c.b16 %v822, %v816
      %v907 = vpack.c.b16 %v823, %v817
      %v908 = vpack.c.b16 %v824, %v818
      %v909 = vpack.c.b16 %v825, %v819
      %v910 = vpack.c.b16 %v832, %v826
      %v911 = vpack.c.b16 %v833, %v827
      %v912 = vpack.c.b16 %v834, %v828
      %v913 = vpack.c.b16 %v835, %v829
      %v914 = vpack.c.b16 %v836, %v830
      %v915 = vpack.c.b16 %v837, %v831
      %v916 = vpack.c.b16 %v844, %v838
      %v917 = vpack.c.b16 %v845, %v839
      %v918 = vpack.c.b16 %v846, %v840
      %v919 = vpack.c.b16 %v847, %v841
      %v920 = vpack.c.b16 %v848, %v842
      %v921 = vpack.c.b16 %v849, %v843
      %v922 = vpack.c.b16 %v856, %v850
      %v923 = vpack.c.b16 %v857, %v851
      %v924 = vpack.c.b16 %v858, %v852
      %v925 = vpack.c.b16 %v859, %v853
      %v926 = vpack.c.b16 %v860, %v854
      %v927 = vpack.c.b16 %v861, %v855
      %v928 = vpack.c.b16 %v868, %v862
      %v929 = vpack.c.b16 %v869, %v863
      %v930 = vpack.c.b16 %v870, %v864
      %v931 = vpack.c.b16 %v871, %v865
      %v932 = vpack.c.b16 %v872, %v866
      %v933 = vpack.c.b16 %v873, %v867
      %v934 = vpack.c.b16 %v880, %v874
      %v935 = vpack.c.b16 %v881, %v875
      %v936 = vpack.c.b16 %v882, %v876
      %v937 = vpack.c.b16 %v883, %v877
      %v938 = vpack.c.b16 %v884, %v878
      %v939 = vpack.c.b16 %v885, %v879
      %v940 = vpack.c.b16 %v892, %v886
      %v941 = vpack.c.b16 %v893, %v887
      %v942 = vpack.c.b16 %v894, %v888
      %v943 = vpack.c.b16 %v895, %v889
      %v944 = vpack.c.b16 %v896, %v890
      %v945 = vpack.c.b16 %v897, %v891
      %v1282 = vunpack.c.l.b16 %v466
      %v1283 = vunpack.c.h.b16 %v466
      %v1284 = vunpack.c.l.b16 %v467
      %v1285 = vunpack.c.h.b16 %v467
      %v1286 = vunpack.c.l.b16 %v468
      %v1287 = vunpack.c.h.b16 %v468
      %v1288 = vunpack.c.l.b16 %v469
      %v1289 = vunpack.c.h.b16 %v469
      %v1290 = vunpack.c.l.b16 %v470
      %v1291 = vunpack.c.h.b16 %v470
      %v1292 = vunpack.c.l.b16 %v471
      %v1293 = vunpack.c.h.b16 %v471
      %v1294 = vunpack.c.l.b16 %v472
      %v1295 = vunpack.c.h.b16 %v472
      %v1296 = vunpack.c.l.b16 %v473
      %v1297 = vunpack.c.h.b16 %v473
      %v1298 = vunpack.c.l.b16 %v474
      %v1299 = vunpack.c.h.b16 %v474
      %v1300 = vunpack.c.l.b16 %v475
      %v1301 = vunpack.c.h.b16 %v475
      %v1302 = vunpack.c.l.b16 %v476
      %v1303 = vunpack.c.h.b16 %v476
      %v1304 = vunpack.c.l.b16 %v477
      %v1305 = vunpack.c.h.b16 %v477
      %v1306 = vunpack.c.l.b16 %v478
      %v1307 = vunpack.c.h.b16 %v478
      %v1308 = vunpack.c.l.b16 %v479
      %v1309 = vunpack.c.h.b16 %v479
      %v1310 = vunpack.c.l.b16 %v480
      %v1311 = vunpack.c.h.b16 %v480
      %v1312 = vunpack.c.l.b16 %v481
      %v1313 = vunpack.c.h.b16 %v481
      %v1314 = vunpack.c.l.b16 %v482
      %v1315 = vunpack.c.h.b16 %v482
      %v1316 = vunpack.c.l.b16 %v483
      %v1317 = vunpack.c.h.b16 %v483
      %v1318 = vunpack.c.l.b16 %v484
      %v1319 = vunpack.c.h.b16 %v484
      %v1320 = vunpack.c.l.b16 %v485
      %v1321 = vunpack.c.h.b16 %v485
      %v1322 = vunpack.c.l.b16 %v486
      %v1323 = vunpack.c.h.b16 %v486
      %v1324 = vunpack.c.l.b16 %v487
      %v1325 = vunpack.c.h.b16 %v487
      %v1326 = vunpack.c.l.b16 %v488
      %v1327 = vunpack.c.h.b16 %v488
      %v1328 = vunpack.c.l.b16 %v489
      %v1329 = vunpack.c.h.b16 %v489
      %v1330 = vunpack.c.l.b16 %v490
      %v1331 = vunpack.c.h.b16 %v490
      %v1332 = vunpack.c.l.b16 %v491
      %v1333 = vunpack.c.h.b16 %v491
      %v1334 = vunpack.c.l.b16 %v492
      %v1335 = vunpack.c.h.b16 %v492
      %v1336 = vunpack.c.l.b16 %v493
      %v1337 = vunpack.c.h.b16 %v493
      %v1338 = vunpack.c.l.b16 %v494
      %v1339 = vunpack.c.h.b16 %v494
      %v1340 = vunpack.c.l.b16 %v495
      %v1341 = vunpack.c.h.b16 %v495
      %v1342 = vunpack.c.l.b16 %v496
      %v1343 = vunpack.c.h.b16 %v496
      %v1344 = vunpack.c.l.b16 %v497
      %v1345 = vunpack.c.h.b16 %v497
      %v1346 = vunpack.c.l.b16 %v498
      %v1347 = vunpack.c.h.b16 %v498
      %v1348 = vunpack.c.l.b16 %v499
      %v1349 = vunpack.c.h.b16 %v499
      %v1350 = vunpack.c.l.b16 %v500
      %v1351 = vunpack.c.h.b16 %v500
      %v1352 = vunpack.c.l.b16 %v501
      %v1353 = vunpack.c.h.b16 %v501
      %v1354 = vunpack.c.l.b16 %v502
      %v1355 = vunpack.c.h.b16 %v502
      %v1356 = vunpack.c.l.b16 %v503
      %v1357 = vunpack.c.h.b16 %v503
      %v1358 = vunpack.c.l.b16 %v504
      %v1359 = vunpack.c.h.b16 %v504
      %v1360 = vunpack.c.l.b16 %v505
      %v1361 = vunpack.c.h.b16 %v505
      %v1362 = vunpack.c.l.b16 %v506
      %v1363 = vunpack.c.h.b16 %v506
      %v1364 = vunpack.c.l.b16 %v507
      %v1365 = vunpack.c.h.b16 %v507
      %v1366 = vunpack.c.l.b16 %v508
      %v1367 = vunpack.c.h.b16 %v508
      %v1368 = vunpack.c.l.b16 %v509
      %v1369 = vunpack.c.h.b16 %v509
      %v1370 = vunpack.c.l.b16 %v510
      %v1371 = vunpack.c.h.b16 %v510
      %v1372 = vunpack.c.l.b16 %v511
      %v1373 = vunpack.c.h.b16 %v511
      %v1374 = vunpack.c.l.b16 %v512
      %v1375 = vunpack.c.h.b16 %v512
      %v1376 = vunpack.c.l.b16 %v513
      %v1377 = vunpack.c.h.b16 %v513
      %v1378 = vunpack.c.l.b16 %v514
      %v1379 = vunpack.c.h.b16 %v514
      %v1380 = vunpack.c.l.b16 %v515
      %v1381 = vunpack.c.h.b16 %v515
      %v1382 = vunpack.c.l.b16 %v516
      %v1383 = vunpack.c.h.b16 %v516
      %v1384 = vunpack.c.l.b16 %v517
      %v1385 = vunpack.c.h.b16 %v517
      %v1386 = vunpack.c.l.b16 %v518
      %v1387 = vunpack.c.h.b16 %v518
      %v1388 = vunpack.c.l.b16 %v519
      %v1389 = vunpack.c.h.b16 %v519
      %v1390 = vunpack.c.l.b16 %v520
      %v1391 = vunpack.c.h.b16 %v520
      %v1392 = vunpack.c.l.b16 %v521
      %v1393 = vunpack.c.h.b16 %v521
      %v1394 = vunpack.c.l.b16 %v522
      %v1395 = vunpack.c.h.b16 %v522
      %v1396 = vunpack.c.l.b16 %v523
      %v1397 = vunpack.c.h.b16 %v523
      %v1398 = vunpack.c.l.b16 %v524
      %v1399 = vunpack.c.h.b16 %v524
      %v1400 = vunpack.c.l.b16 %v525
      %v1401 = vunpack.c.h.b16 %v525
      %v1402 = vunpack.c.l.b16 %v526
      %v1403 = vunpack.c.h.b16 %v526
      %v1404 = vunpack.c.l.b16 %v527
      %v1405 = vunpack.c.h.b16 %v527
      %v1406 = vunpack.c.l.b16 %v528
      %v1407 = vunpack.c.h.b16 %v528
      %v1408 = vunpack.c.l.b16 %v529
      %v1409 = vunpack.c.h.b16 %v529
      %v1410 = vunpack.c.l.b16 %v530
      %v1411 = vunpack.c.h.b16 %v530
      %v1412 = vunpack.c.l.b16 %v531
      %v1413 = vunpack.c.h.b16 %v531
      %v1414 = vunpack.c.l.b16 %v532
      %v1415 = vunpack.c.h.b16 %v532
      %v1416 = vunpack.c.l.b16 %v533
      %v1417 = vunpack.c.h.b16 %v533
      %v1418 = vunpack.c.l.b16 %v534
      %v1419 = vunpack.c.h.b16 %v534
      %v1420 = vunpack.c.l.b16 %v535
      %v1421 = vunpack.c.h.b16 %v535
      %v1422 = vunpack.c.l.b16 %v536
      %v1423 = vunpack.c.h.b16 %v536
      %v1424 = vunpack.c.l.b16 %v537
      %v1425 = vunpack.c.h.b16 %v537
      %v1426 = vunpack.c.l.b16 %v538
      %v1427 = vunpack.c.h.b16 %v538
      %v1428 = vunpack.c.l.b16 %v539
      %v1429 = vunpack.c.h.b16 %v539
      %v1430 = vunpack.c.l.b16 %v540
      %v1431 = vunpack.c.h.b16 %v540
      %v1432 = vunpack.c.l.b16 %v541
      %v1433 = vunpack.c.h.b16 %v541
      %v1434 = vunpack.c.l.b16 %v542
      %v1435 = vunpack.c.h.b16 %v542
      %v1436 = vunpack.c.l.b16 %v543
      %v1437 = vunpack.c.h.b16 %v543
      %v1438 = vunpack.c.l.b16 %v544
      %v1439 = vunpack.c.h.b16 %v544
      %v1440 = vunpack.c.l.b16 %v545
      %v1441 = vunpack.c.h.b16 %v545
      %v1442 = vunpack.c.l.b16 %v546
      %v1443 = vunpack.c.h.b16 %v546
      %v1444 = vunpack.c.l.b16 %v547
      %v1445 = vunpack.c.h.b16 %v547
      %v1446 = vunpack.c.l.b16 %v548
      %v1447 = vunpack.c.h.b16 %v548
      %v1448 = vunpack.c.l.b16 %v549
      %v1449 = vunpack.c.h.b16 %v549
      %v1450 = vunpack.c.l.b16 %v550
      %v1451 = vunpack.c.h.b16 %v550
      %v1452 = vunpack.c.l.b16 %v551
      %v1453 = vunpack.c.h.b16 %v551
      %v1454 = vunpack.c.l.b16 %v552
      %v1455 = vunpack.c.h.b16 %v552
      %v1456 = vunpack.c.l.b16 %v553
      %v1457 = vunpack.c.h.b16 %v553
      %v1458 = vunpack.c.l.b16 %v554
      %v1459 = vunpack.c.h.b16 %v554
      %v1460 = vunpack.c.l.b16 %v555
      %v1461 = vunpack.c.h.b16 %v555
      %v1462 = vunpack.c.l.b16 %v556
      %v1463 = vunpack.c.h.b16 %v556
      %v1464 = vunpack.c.l.b16 %v557
      %v1465 = vunpack.c.h.b16 %v557
      %v1466 = vunpack.c.l.b16 %v558
      %v1467 = vunpack.c.h.b16 %v558
      %v1468 = vunpack.c.l.b16 %v559
      %v1469 = vunpack.c.h.b16 %v559
      %v1470 = vunpack.c.l.b16 %v560
      %v1471 = vunpack.c.h.b16 %v560
      %v1472 = vunpack.c.l.b16 %v561
      %v1473 = vunpack.c.h.b16 %v561
      %v1474 = vunpack.c.l.b16 %v562
      %v1475 = vunpack.c.h.b16 %v562
      %v1476 = vunpack.c.l.b16 %v563
      %v1477 = vunpack.c.h.b16 %v563
      %v1478 = vunpack.c.l.b16 %v564
      %v1479 = vunpack.c.h.b16 %v564
      %v1480 = vunpack.c.l.b16 %v565
      %v1481 = vunpack.c.h.b16 %v565
      %v1482 = vunpack.c.l.b16 %v566
      %v1483 = vunpack.c.h.b16 %v566
      %v1484 = vunpack.c.l.b16 %v567
      %v1485 = vunpack.c.h.b16 %v567
      %v1486 = vunpack.c.l.b16 %v568
      %v1487 = vunpack.c.h.b16 %v568
      %v1488 = vunpack.c.l.b16 %v569
      %v1489 = vunpack.c.h.b16 %v569
      %v1490 = vunpack.c.l.b16 %v570
      %v1491 = vunpack.c.h.b16 %v570
      %v1492 = vunpack.c.l.b16 %v571
      %v1493 = vunpack.c.h.b16 %v571
      %v1494 = vunpack.c.l.b16 %v572
      %v1495 = vunpack.c.h.b16 %v572
      %v1496 = vunpack.c.l.b16 %v573
      %v1497 = vunpack.c.h.b16 %v573
      %v1498 = vunpack.c.l.b16 %v574
      %v1499 = vunpack.c.h.b16 %v574
      %v1500 = vunpack.c.l.b16 %v575
      %v1501 = vunpack.c.h.b16 %v575
      %v1502 = vunpack.c.l.b16 %v576
      %v1503 = vunpack.c.h.b16 %v576
      %v1504 = vunpack.c.l.b16 %v577
      %v1505 = vunpack.c.h.b16 %v577
      %v1506 = vunpack.c.l.b16 %v578
      %v1507 = vunpack.c.h.b16 %v578
      %v1508 = vunpack.c.l.b16 %v579
      %v1509 = vunpack.c.h.b16 %v579
      %v1510 = vunpack.c.l.b16 %v580
      %v1511 = vunpack.c.h.b16 %v580
      %v1512 = vunpack.c.l.b16 %v581
      %v1513 = vunpack.c.h.b16 %v581
      %v1514 = vunpack.c.l.b16 %v582
      %v1515 = vunpack.c.h.b16 %v582
      %v1516 = vunpack.c.l.b16 %v583
      %v1517 = vunpack.c.h.b16 %v583
      %v1518 = vunpack.c.l.b16 %v584
      %v1519 = vunpack.c.h.b16 %v584
      %v1520 = vunpack.c.l.b16 %v585
      %v1521 = vunpack.c.h.b16 %v585
      %v1522 = vunpack.c.l.b16 %v586
      %v1523 = vunpack.c.h.b16 %v586
      %v1524 = vunpack.c.l.b16 %v587
      %v1525 = vunpack.c.h.b16 %v587
      %v1526 = vunpack.c.l.b16 %v588
      %v1527 = vunpack.c.h.b16 %v588
      %v1528 = vunpack.c.l.b16 %v589
      %v1529 = vunpack.c.h.b16 %v589
      %v1530 = vunpack.c.l.b16 %v590
      %v1531 = vunpack.c.h.b16 %v590
      %v1532 = vunpack.c.l.b16 %v591
      %v1533 = vunpack.c.h.b16 %v591
      %v1534 = vunpack.c.l.b16 %v592
      %v1535 = vunpack.c.h.b16 %v592
      %v1536 = vunpack.c.l.b16 %v593
      %v1537 = vunpack.c.h.b16 %v593
      %v1538 = vunpack.c.l.b16 %v594
      %v1539 = vunpack.c.h.b16 %v594
      %v1540 = vunpack.c.l.b16 %v595
      %v1541 = vunpack.c.h.b16 %v595
      %v1542 = vunpack.c.l.b16 %v596
      %v1543 = vunpack.c.h.b16 %v596
      %v1544 = vunpack.c.l.b16 %v597
      %v1545 = vunpack.c.h.b16 %v597
      %v1546 = vunpack.c.l.b16 %v598
      %v1547 = vunpack.c.h.b16 %v598
      %v1548 = vunpack.c.l.b16 %v599
      %v1549 = vunpack.c.h.b16 %v599
      %v1550 = vunpack.c.l.b16 %v600
      %v1551 = vunpack.c.h.b16 %v600
      %v1552 = vunpack.c.l.b16 %v601
      %v1553 = vunpack.c.h.b16 %v601
      %v1554 = vunpack.c.l.b16 %v602
      %v1555 = vunpack.c.h.b16 %v602
      %v1556 = vunpack.c.l.b16 %v603
      %v1557 = vunpack.c.h.b16 %v603
      %v1558 = vunpack.c.l.b16 %v604
      %v1559 = vunpack.c.h.b16 %v604
      %v1560 = vunpack.c.l.b16 %v605
      %v1561 = vunpack.c.h.b16 %v605
      %v1562 = vunpack.c.l.b16 %v606
      %v1563 = vunpack.c.h.b16 %v606
      %v1564 = vunpack.c.l.b16 %v607
      %v1565 = vunpack.c.h.b16 %v607
      %v1566 = vunpack.c.l.b16 %v608
      %v1567 = vunpack.c.h.b16 %v608
      %v1568 = vunpack.c.l.b16 %v609
      %v1569 = vunpack.c.h.b16 %v609
      %v1570 = vunpack.c.l.b16 %v610
      %v1571 = vunpack.c.h.b16 %v610
      %v1572 = vunpack.c.l.b16 %v611
      %v1573 = vunpack.c.h.b16 %v611
      %v1574 = vunpack.c.l.b16 %v612
      %v1575 = vunpack.c.h.b16 %v612
      %v1576 = vunpack.c.l.b16 %v613
      %v1577 = vunpack.c.h.b16 %v613
      %v1578 = vunpack.c.l.b16 %v614
      %v1579 = vunpack.c.h.b16 %v614
      %v1580 = vunpack.c.l.b16 %v615
      %v1581 = vunpack.c.h.b16 %v615
      %v1582 = vunpack.c.l.b16 %v616
      %v1583 = vunpack.c.h.b16 %v616
      %v1584 = vunpack.c.l.b16 %v617
      %v1585 = vunpack.c.h.b16 %v617
      %v1586 = vunpack.c.l.b16 %v618
      %v1587 = vunpack.c.h.b16 %v618
      %v1588 = vunpack.c.l.b16 %v619
      %v1589 = vunpack.c.h.b16 %v619
      %v1590 = vunpack.c.l.b16 %v620
      %v1591 = vunpack.c.h.b16 %v620
      %v1592 = vunpack.c.l.b16 %v621
      %v1593 = vunpack.c.h.b16 %v621
      %v1594 = vunpack.c.l.b16 %v622
      %v1595 = vunpack.c.h.b16 %v622
      %v1596 = vunpack.c.l.b16 %v623
      %v1597 = vunpack.c.h.b16 %v623
      %v1598 = vunpack.c.l.b16 %v624
      %v1599 = vunpack.c.h.b16 %v624
      %v1600 = vunpack.c.l.b16 %v625
      %v1601 = vunpack.c.h.b16 %v625
      %v1602 = vunpack.c.l.b16 %v626
      %v1603 = vunpack.c.h.b16 %v626
      %v1604 = vunpack.c.l.b16 %v627
      %v1605 = vunpack.c.h.b16 %v627
      %v1606 = vunpack.c.l.b16 %v628
      %v1607 = vunpack.c.h.b16 %v628
      %v1608 = vunpack.c.l.b16 %v629
      %v1609 = vunpack.c.h.b16 %v629
      %v1610 = vunpack.c.l.b16 %v630
      %v1611 = vunpack.c.h.b16 %v630
      %v1612 = vunpack.c.l.b16 %v631
      %v1613 = vunpack.c.h.b16 %v631
      %v1614 = vunpack.c.l.b16 %v632
      %v1615 = vunpack.c.h.b16 %v632
      %v1616 = vunpack.c.l.b16 %v633
      %v1617 = vunpack.c.h.b16 %v633
      %v1618 = vunpack.c.l.b16 %v634
      %v1619 = vunpack.c.h.b16 %v634
      %v1620 = vunpack.c.l.b16 %v635
      %v1621 = vunpack.c.h.b16 %v635
      %v1622 = vunpack.c.l.b16 %v636
      %v1623 = vunpack.c.h.b16 %v636
      %v1624 = vunpack.c.l.b16 %v637
      %v1625 = vunpack.c.h.b16 %v637
      %v1626 = vunpack.c.l.b16 %v638
      %v1627 = vunpack.c.h.b16 %v638
      %v1628 = vunpack.c.l.b16 %v639
      %v1629 = vunpack.c.h.b16 %v639
      %v1630 = vunpack.c.l.b16 %v640
      %v1631 = vunpack.c.h.b16 %v640
      %v1632 = vunpack.c.l.b16 %v641
      %v1633 = vunpack.c.h.b16 %v641
      %v1634 = vunpack.c.l.b16 %v642
      %v1635 = vunpack.c.h.b16 %v642
      %v1636 = vunpack.c.l.b16 %v643
      %v1637 = vunpack.c.h.b16 %v643
      %v1638 = vunpack.c.l.b16 %v644
      %v1639 = vunpack.c.h.b16 %v644
      %v1640 = vunpack.c.l.b16 %v645
      %v1641 = vunpack.c.h.b16 %v645
      %v1642 = vunpack.c.l.b16 %v646
      %v1643 = vunpack.c.h.b16 %v646
      %v1644 = vunpack.c.l.b16 %v647
      %v1645 = vunpack.c.h.b16 %v647
      %v1646 = vunpack.c.l.b16 %v648
      %v1647 = vunpack.c.h.b16 %v648
      %v1648 = vunpack.c.l.b16 %v649
      %v1649 = vunpack.c.h.b16 %v649
      %v1650 = vunpack.c.l.b16 %v650
      %v1651 = vunpack.c.h.b16 %v650
      %v1652 = vunpack.c.l.b16 %v651
      %v1653 = vunpack.c.h.b16 %v651
      %v1654 = vunpack.c.l.b16 %v652
      %v1655 = vunpack.c.h.b16 %v652
      %v1656 = vunpack.c.l.b16 %v653
      %v1657 = vunpack.c.h.b16 %v653
      %v1658 = vunpack.c.l.b16 %v654
      %v1659 = vunpack.c.h.b16 %v654
      %v1660 = vunpack.c.l.b16 %v655
      %v1661 = vunpack.c.h.b16 %v655
      %v1662 = vunpack.c.l.b16 %v656
      %v1663 = vunpack.c.h.b16 %v656
      %v1664 = vunpack.c.l.b16 %v657
      %v1665 = vunpack.c.h.b16 %v657
      %v1666 = vunpack.c.l.b16 %v658
      %v1667 = vunpack.c.h.b16 %v658
      %v1668 = vunpack.c.l.b16 %v659
      %v1669 = vunpack.c.h.b16 %v659
      %v1670 = vunpack.c.l.b16 %v660
      %v1671 = vunpack.c.h.b16 %v660
      %v1672 = vunpack.c.l.b16 %v661
      %v1673 = vunpack.c.h.b16 %v661
      %v1674 = vunpack.c.l.b16 %v662
      %v1675 = vunpack.c.h.b16 %v662
      %v1676 = vunpack.c.l.b16 %v663
      %v1677 = vunpack.c.h.b16 %v663
      %v1678 = vunpack.c.l.b16 %v664
      %v1679 = vunpack.c.h.b16 %v664
      %v1680 = vunpack.c.l.b16 %v665
      %v1681 = vunpack.c.h.b16 %v665
      %v1682 = vunpack.c.l.b16 %v666
      %v1683 = vunpack.c.h.b16 %v666
      %v1684 = vunpack.c.l.b16 %v667
      %v1685 = vunpack.c.h.b16 %v667
      %v1686 = vunpack.c.l.b16 %v668
      %v1687 = vunpack.c.h.b16 %v668
      %v1688 = vunpack.c.l.b16 %v669
      %v1689 = vunpack.c.h.b16 %v669
      %v1690 = vunpack.c.l.b16 %v670
      %v1691 = vunpack.c.h.b16 %v670
      %v1692 = vunpack.c.l.b16 %v671
      %v1693 = vunpack.c.h.b16 %v671
      %v1694 = vunpack.c.l.b16 %v672
      %v1695 = vunpack.c.h.b16 %v672
      %v1696 = vunpack.c.l.b16 %v673
      %v1697 = vunpack.c.h.b16 %v673
      %v1698 = vunpack.c.l.b16 %v674
      %v1699 = vunpack.c.h.b16 %v674
      %v1700 = vunpack.c.l.b16 %v675
      %v1701 = vunpack.c.h.b16 %v675
      %v1702 = vunpack.c.l.b16 %v676
      %v1703 = vunpack.c.h.b16 %v676
      %v1704 = vunpack.c.l.b16 %v677
      %v1705 = vunpack.c.h.b16 %v677
      %v1706 = vunpack.c.l.b16 %v678
      %v1707 = vunpack.c.h.b16 %v678
      %v1708 = vunpack.c.l.b16 %v679
      %v1709 = vunpack.c.h.b16 %v679
      %v1710 = vunpack.c.l.b16 %v680
      %v1711 = vunpack.c.h.b16 %v680
      %v1712 = vunpack.c.l.b16 %v681
      %v1713 = vunpack.c.h.b16 %v681
      %v1714 = vunpack.c.l.b16 %v682
      %v1715 = vunpack.c.h.b16 %v682
      %v1716 = vunpack.c.l.b16 %v683
      %v1717 = vunpack.c.h.b16 %v683
      %v1718 = vunpack.c.l.b16 %v684
      %v1719 = vunpack.c.h.b16 %v684
      %v1720 = vunpack.c.l.b16 %v685
      %v1721 = vunpack.c.h.b16 %v685
      %v1722 = vunpack.c.l.b16 %v686
      %v1723 = vunpack.c.h.b16 %v686
      %v1724 = vunpack.c.l.b16 %v687
      %v1725 = vunpack.c.h.b16 %v687
      %v1726 = vunpack.c.l.b16 %v688
      %v1727 = vunpack.c.h.b16 %v688
      %v1728 = vunpack.c.l.b16 %v689
      %v1729 = vunpack.c.h.b16 %v689
      %v1730 = vunpack.c.l.b16 %v690
      %v1731 = vunpack.c.h.b16 %v690
      %v1732 = vunpack.c.l.b16 %v691
      %v1733 = vunpack.c.h.b16 %v691
      %v1734 = vunpack.c.l.b16 %v692
      %v1735 = vunpack.c.h.b16 %v692
      %v1736 = vunpack.c.l.b16 %v693
      %v1737 = vunpack.c.h.b16 %v693
      %v1738 = vunpack.c.l.b16 %v694
      %v1739 = vunpack.c.h.b16 %v694
      %v1740 = vunpack.c.l.b16 %v695
      %v1741 = vunpack.c.h.b16 %v695
      %v1742 = vunpack.c.l.b16 %v696
      %v1743 = vunpack.c.h.b16 %v696
      %v1744 = vunpack.c.l.b16 %v697
      %v1745 = vunpack.c.h.b16 %v697
      %v1746 = vunpack.c.l.b16 %v698
      %v1747 = vunpack.c.h.b16 %v698
      %v1748 = vunpack.c.l.b16 %v699
      %v1749 = vunpack.c.h.b16 %v699
      %v1750 = vunpack.c.l.b16 %v700
      %v1751 = vunpack.c.h.b16 %v700
      %v1752 = vunpack.c.l.b16 %v701
      %v1753 = vunpack.c.h.b16 %v701
      %v1754 = vunpack.c.l.b16 %v702
      %v1755 = vunpack.c.h.b16 %v702
      %v1756 = vunpack.c.l.b16 %v703
      %v1757 = vunpack.c.h.b16 %v703
      %v1758 = vunpack.c.l.b16 %v704
      %v1759 = vunpack.c.h.b16 %v704
      %v1760 = vunpack.c.l.b16 %v705
      %v1761 = vunpack.c.h.b16 %v705
      %v1762 = vunpack.c.l.b16 %v706
      %v1763 = vunpack.c.h.b16 %v706
      %v1764 = vunpack.c.l.b16 %v707
      %v1765 = vunpack.c.h.b16 %v707
      %v1766 = vunpack.c.l.b16 %v708
      %v1767 = vunpack.c.h.b16 %v708
      %v1768 = vunpack.c.l.b16 %v709
      %v1769 = vunpack.c.h.b16 %v709
      %v1770 = vunpack.c.l.b16 %v710
      %v1771 = vunpack.c.h.b16 %v710
      %v1772 = vunpack.c.l.b16 %v711
      %v1773 = vunpack.c.h.b16 %v711
      %v1774 = vunpack.c.l.b16 %v712
      %v1775 = vunpack.c.h.b16 %v712
      %v1776 = vunpack.c.l.b16 %v713
      %v1777 = vunpack.c.h.b16 %v713
      %v1778 = vunpack.c.l.b16 %v714
      %v1779 = vunpack.c.h.b16 %v714
      %v1780 = vunpack.c.l.b16 %v715
      %v1781 = vunpack.c.h.b16 %v715
      %v1782 = vunpack.c.l.b16 %v716
      %v1783 = vunpack.c.h.b16 %v716
      %v1784 = vunpack.c.l.b16 %v717
      %v1785 = vunpack.c.h.b16 %v717
      %v1786 = vunpack.c.l.b16 %v718
      %v1787 = vunpack.c.h.b16 %v718
      %v1788 = vunpack.c.l.b16 %v719
      %v1789 = vunpack.c.h.b16 %v719
      %v1790 = vunpack.c.l.b16 %v720
      %v1791 = vunpack.c.h.b16 %v720
      %v1792 = vunpack.c.l.b16 %v721
      %v1793 = vunpack.c.h.b16 %v721
      %v1794 = vunpack.c.l.b16 %v722
      %v1795 = vunpack.c.h.b16 %v722
      %v1796 = vunpack.c.l.b16 %v723
      %v1797 = vunpack.c.h.b16 %v723
      %v1798 = vunpack.c.l.b16 %v724
      %v1799 = vunpack.c.h.b16 %v724
      %v1800 = vunpack.c.l.b16 %v725
      %v1801 = vunpack.c.h.b16 %v725
      %v1802 = vunpack.c.l.b16 %v726
      %v1803 = vunpack.c.h.b16 %v726
      %v1804 = vunpack.c.l.b16 %v727
      %v1805 = vunpack.c.h.b16 %v727
      %v1806 = vunpack.c.l.b16 %v728
      %v1807 = vunpack.c.h.b16 %v728
      %v1808 = vunpack.c.l.b16 %v729
      %v1809 = vunpack.c.h.b16 %v729
      %v1810 = vunpack.c.l.b16 %v730
      %v1811 = vunpack.c.h.b16 %v730
      %v1812 = vunpack.c.l.b16 %v731
      %v1813 = vunpack.c.h.b16 %v731
      %v1814 = vunpack.c.l.b16 %v732
      %v1815 = vunpack.c.h.b16 %v732
      %v1816 = vunpack.c.l.b16 %v733
      %v1817 = vunpack.c.h.b16 %v733
      %v1818 = vunpack.c.l.b16 %v734
      %v1819 = vunpack.c.h.b16 %v734
      %v1820 = vunpack.c.l.b16 %v735
      %v1821 = vunpack.c.h.b16 %v735
      %v1822 = vunpack.c.l.b16 %v736
      %v1823 = vunpack.c.h.b16 %v736
      %v1824 = vunpack.c.l.b16 %v737
      %v1825 = vunpack.c.h.b16 %v737
      %v1826 = vunpack.c.l.b16 %v738
      %v1827 = vunpack.c.h.b16 %v738
      %v1828 = vunpack.c.l.b16 %v739
      %v1829 = vunpack.c.h.b16 %v739
      %v1830 = vunpack.c.l.b16 %v740
      %v1831 = vunpack.c.h.b16 %v740
      %v1832 = vunpack.c.l.b16 %v741
      %v1833 = vunpack.c.h.b16 %v741
      %v1834 = vunpack.c.l.b16 %v742
      %v1835 = vunpack.c.h.b16 %v742
      %v1836 = vunpack.c.l.b16 %v743
      %v1837 = vunpack.c.h.b16 %v743
      %v1838 = vunpack.c.l.b16 %v744
      %v1839 = vunpack.c.h.b16 %v744
      %v1840 = vunpack.c.l.b16 %v745
      %v1841 = vunpack.c.h.b16 %v745
      %v1842 = vunpack.c.l.b16 %v746
      %v1843 = vunpack.c.h.b16 %v746
      %v1844 = vunpack.c.l.b16 %v747
      %v1845 = vunpack.c.h.b16 %v747
      %v1846 = vunpack.c.l.b16 %v748
      %v1847 = vunpack.c.h.b16 %v748
      %v1848 = vunpack.c.l.b16 %v749
      %v1849 = vunpack.c.h.b16 %v749
      %v1850 = vunpack.c.l.b16 %v750
      %v1851 = vunpack.c.h.b16 %v750
      %v1852 = vunpack.c.l.b16 %v751
      %v1853 = vunpack.c.h.b16 %v751
      %v1854 = vunpack.c.l.b16 %v752
      %v1855 = vunpack.c.h.b16 %v752
      %v1856 = vunpack.c.l.b16 %v753
      %v1857 = vunpack.c.h.b16 %v753
      %v1858 = vpack.c.b16 %v1288, %v1282
      %v1859 = vpack.c.b16 %v1289, %v1283
      %v1860 = vpack.c.b16 %v1290, %v1284
      %v1861 = vpack.c.b16 %v1291, %v1285
      %v1862 = vpack.c.b16 %v1292, %v1286
      %v1863 = vpack.c.b16 %v1293, %v1287
      %v1864 = vpack.c.b16 %v1300, %v1294
      %v1865 = vpack.c.b16 %v1301, %v1295
      %v1866 = vpack.c.b16 %v1302, %v1296
      %v1867 = vpack.c.b16 %v1303, %v1297
      %v1868 = vpack.c.b16 %v1304, %v1298
      %v1869 = vpack.c.b16 %v1305, %v1299
      %v1870 = vpack.c.b16 %v1312, %v1306
      %v1871 = vpack.c.b16 %v1313, %v1307
      %v1872 = vpack.c.b16 %v1314, %v1308
      %v1873 = vpack.c.b16 %v1315, %v1309
      %v1874 = vpack.c.b16 %v1316, %v1310
      %v1875 = vpack.c.b16 %v1317, %v1311
      %v1876 = vpack.c.b16 %v1324, %v1318
      %v1877 = vpack.c.b16 %v1325, %v1319
      %v1878 = vpack.c.b16 %v1326, %v1320
      %v1879 = vpack.c.b16 %v1327, %v1321
      %v1880 = vpack.c.b16 %v1328, %v1322
      %v1881 = vpack.c.b16 %v1329, %v1323
      %v1882 = vpack.c.b16 %v1336, %v1330
      %v1883 = vpack.c.b16 %v1337, %v1331
      %v1884 = vpack.c.b16 %v1338, %v1332
      %v1885 = vpack.c.b16 %v1339, %v1333
      %v1886 = vpack.c.b16 %v1340, %v1334
      %v1887 = vpack.c.b16 %v1341, %v1335
      %v1888 = vpack.c.b16 %v1348, %v1342
      %v1889 = vpack.c.b16 %v1349, %v1343
      %v1890 = vpack.c.b16 %v1350, %v1344
      %v1891 = vpack.c.b16 %v1351, %v1345
      %v1892 = vpack.c.b16 %v1352, %v1346
      %v1893 = vpack.c.b16 %v1353, %v1347
      %v1894 = vpack.c.b16 %v1360, %v1354
      %v1895 = vpack.c.b16 %v1361, %v1355
      %v1896 = vpack.c.b16 %v1362, %v1356
      %v1897 = vpack.c.b16 %v1363, %v1357
      %v1898 = vpack.c.b16 %v1364, %v1358
      %v1899 = vpack.c.b16 %v1365, %v1359
      %v1900 = vpack.c.b16 %v1372, %v1366
      %v1901 = vpack.c.b16 %v1373, %v1367
      %v1902 = vpack.c.b16 %v1374, %v1368
      %v1903 = vpack.c.b16 %v1375, %v1369
      %v1904 = vpack.c.b16 %v1376, %v1370
      %v1905 = vpack.c.b16 %v1377, %v1371
      %v1906 = vpack.c.b16 %v1384, %v1378
      %v1907 = vpack.c.b16 %v1385, %v1379
      %v1908 = vpack.c.b16 %v1386, %v1380
      %v1909 = vpack.c.b16 %v1387, %v1381
      %v1910 = vpack.c.b16 %v1388, %v1382
      %v1911 = vpack.c.b16 %v1389, %v1383
      %v1912 = vpack.c.b16 %v1396, %v1390
      %v1913 = vpack.c.b16 %v1397, %v1391
      %v1914 = vpack.c.b16 %v1398, %v1392
      %v1915 = vpack.c.b16 %v1399, %v1393
      %v1916 = vpack.c.b16 %v1400, %v1394
      %v1917 = vpack.c.b16 %v1401, %v1395
      %v1918 = vpack.c.b16 %v1408, %v1402
      %v1919 = vpack.c.b16 %v1409, %v1403
      %v1920 = vpack.c.b16 %v1410, %v1404
      %v1921 = vpack.c.b16 %v1411, %v1405
      %v1922 = vpack.c.b16 %v1412, %v1406
      %v1923 = vpack.c.b16 %v1413, %v1407
      %v1924 = vpack.c.b16 %v1420, %v1414
      %v1925 = vpack.c.b16 %v1421, %v1415
      %v1926 = vpack.c.b16 %v1422, %v1416
      %v1927 = vpack.c.b16 %v1423, %v1417
      %v1928 = vpack.c.b16 %v1424, %v1418
      %v1929 = vpack.c.b16 %v1425, %v1419
      %v1930 = vpack.c.b16 %v1432, %v1426
      %v1931 = vpack.c.b16 %v1433, %v1427
      %v1932 = vpack.c.b16 %v1434, %v1428
      %v1933 = vpack.c.b16 %v1435, %v1429
      %v1934 = vpack.c.b16 %v1436, %v1430
      %v1935 = vpack.c.b16 %v1437, %v1431
      %v1936 = vpack.c.b16 %v1444, %v1438
      %v1937 = vpack.c.b16 %v1445, %v1439
      %v1938 = vpack.c.b16 %v1446, %v1440
      %v1939 = vpack.c.b16 %v1447, %v1441
      %v1940 = vpack.c.b16 %v1448, %v1442
      %v1941 = vpack.c.b16 %v1449, %v1443
      %v1942 = vpack.c.b16 %v1456, %v1450
      %v1943 = vpack.c.b16 %v1457, %v1451
      %v1944 = vpack.c.b16 %v1458, %v1452
      %v1945 = vpack.c.b16 %v1459, %v1453
      %v1946 = vpack.c.b16 %v1460, %v1454
      %v1947 = vpack.c.b16 %v1461, %v1455
      %v1948 = vpack.c.b16 %v1468, %v1462
      %v1949 = vpack.c.b16 %v1469, %v1463
      %v1950 = vpack.c.b16 %v1470, %v1464
      %v1951 = vpack.c.b16 %v1471, %v1465
      %v1952 = vpack.c.b16 %v1472, %v1466
      %v1953 = vpack.c.b16 %v1473, %v1467
      %v1954 = vpack.c.b16 %v1480, %v1474
      %v1955 = vpack.c.b16 %v1481, %v1475
      %v1956 = vpack.c.b16 %v1482, %v1476
      %v1957 = vpack.c.b16 %v1483, %v1477
      %v1958 = vpack.c.b16 %v1484, %v1478
      %v1959 = vpack.c.b16 %v1485, %v1479
      %v1960 = vpack.c.b16 %v1492, %v1486
      %v1961 = vpack.c.b16 %v1493, %v1487
      %v1962 = vpack.c.b16 %v1494, %v1488
      %v1963 = vpack.c.b16 %v1495, %v1489
      %v1964 = vpack.c.b16 %v1496, %v1490
      %v1965 = vpack.c.b16 %v1497, %v1491
      %v1966 = vpack.c.b16 %v1504, %v1498
      %v1967 = vpack.c.b16 %v1505, %v1499
      %v1968 = vpack.c.b16 %v1506, %v1500
      %v1969 = vpack.c.b16 %v1507, %v1501
      %v1970 = vpack.c.b16 %v1508, %v1502
      %v1971 = vpack.c.b16 %v1509, %v1503
      %v1972 = vpack.c.b16 %v1516, %v1510
      %v1973 = vpack.c.b16 %v1517, %v1511
      %v1974 = vpack.c.b16 %v1518, %v1512
      %v1975 = vpack.c.b16 %v1519, %v1513
      %v1976 = vpack.c.b16 %v1520, %v1514
      %v1977 = vpack.c.b16 %v1521, %v1515
      %v1978 = vpack.c.b16 %v1528, %v1522
      %v1979 = vpack.c.b16 %v1529, %v1523
      %v1980 = vpack.c.b16 %v1530, %v1524
      %v1981 = vpack.c.b16 %v1531, %v1525
      %v1982 = vpack.c.b16 %v1532, %v1526
      %v1983 = vpack.c.b16 %v1533, %v1527
      %v1984 = vpack.c.b16 %v1540, %v1534
      %v1985 = vpack.c.b16 %v1541, %v1535
      %v1986 = vpack.c.b16 %v1542, %v1536
      %v1987 = vpack.c.b16 %v1543, %v1537
      %v1988 = vpack.c.b16 %v1544, %v1538
      %v1989 = vpack.c.b16 %v1545, %v1539
      %v1990 = vpack.c.b16 %v1552, %v1546
      %v1991 = vpack.c.b16 %v1553, %v1547
      %v1992 = vpack.c.b16 %v1554, %v1548
      %v1993 = vpack.c.b16 %v1555, %v1549
      %v1994 = vpack.c.b16 %v1556, %v1550
      %v1995 = vpack.c.b16 %v1557, %v1551
      %v1996 = vpack.c.b16 %v1564, %v1558
      %v1997 = vpack.c.b16 %v1565, %v1559
      %v1998 = vpack.c.b16 %v1566, %v1560
      %v1999 = vpack.c.b16 %v1567, %v1561
      %v2000 = vpack.c.b16 %v1568, %v1562
      %v2001 = vpack.c.b16 %v1569, %v1563
      %v2002 = vpack.c.b16 %v1576, %v1570
      %v2003 = vpack.c.b16 %v1577, %v1571
      %v2004 = vpack.c.b16 %v1578, %v1572
      %v2005 = vpack.c.b16 %v1579, %v1573
      %v2006 = vpack.c.b16 %v1580, %v1574
      %v2007 = vpack.c.b16 %v1581, %v1575
      %v2008 = vpack.c.b16 %v1588, %v1582
      %v2009 = vpack.c.b16 %v1589, %v1583
      %v2010 = vpack.c.b16 %v1590, %v1584
      %v2011 = vpack.c.b16 %v1591, %v1585
      %v2012 = vpack.c.b16 %v1592, %v1586
      %v2013 = vpack.c.b16 %v1593, %v1587
      %v2014 = vpack.c.b16 %v1600, %v1594
      %v2015 = vpack.c.b16 %v1601, %v1595
      %v2016 = vpack.c.b16 %v1602, %v1596
      %v2017 = vpack.c.b16 %v1603, %v1597
      %v2018 = vpack.c.b16 %v1604, %v1598
      %v2019 = vpack.c.b16 %v1605, %v1599
      %v2020 = vpack.c.b16 %v1612, %v1606
      %v2021 = vpack.c.b16 %v1613, %v1607
      %v2022 = vpack.c.b16 %v1614, %v1608
      %v2023 = vpack.c.b16 %v1615, %v1609
      %v2024 = vpack.c.b16 %v1616, %v1610
      %v2025 = vpack.c.b16 %v1617, %v1611
      %v2026 = vpack.c.b16 %v1624, %v1618
      %v2027 = vpack.c.b16 %v1625, %v1619
      %v2028 = vpack.c.b16 %v1626, %v1620
      %v2029 = vpack.c.b16 %v1627, %v1621
      %v2030 = vpack.c.b16 %v1628, %v1622
      %v2031 = vpack.c.b16 %v1629, %v1623
      %v2032 = vpack.c.b16 %v1636, %v1630
      %v2033 = vpack.c.b16 %v1637, %v1631
      %v2034 = vpack.c.b16 %v1638, %v1632
      %v2035 = vpack.c.b16 %v1639, %v1633
      %v2036 = vpack.c.b16 %v1640, %v1634
      %v2037 = vpack.c.b16 %v1641, %v1635
      %v2038 = vpack.c.b16 %v1648, %v1642
      %v2039 = vpack.c.b16 %v1649, %v1643
      %v2040 = vpack.c.b16 %v1650, %v1644
      %v2041 = vpack.c.b16 %v1651, %v1645
      %v2042 = vpack.c.b16 %v1652, %v1646
      %v2043 = vpack.c.b16 %v1653, %v1647
      %v2044 = vpack.c.b16 %v1660, %v1654
      %v2045 = vpack.c.b16 %v1661, %v1655
      %v2046 = vpack.c.b16 %v1662, %v1656
      %v2047 = vpack.c.b16 %v1663, %v1657
      %v2048 = vpack.c.b16 %v1664, %v1658
      %v2049 = vpack.c.b16 %v1665, %v1659
      %v2050 = vpack.c.b16 %v1672, %v1666
      %v2051 = vpack.c.b16 %v1673, %v1667
      %v2052 = vpack.c.b16 %v1674, %v1668
      %v2053 = vpack.c.b16 %v1675, %v1669
      %v2054 = vpack.c.b16 %v1676, %v1670
      %v2055 = vpack.c.b16 %v1677, %v1671
      %v2056 = vpack.c.b16 %v1684, %v1678
      %v2057 = vpack.c.b16 %v1685, %v1679
      %v2058 = vpack.c.b16 %v1686, %v1680
      %v2059 = vpack.c.b16 %v1687, %v1681
      %v2060 = vpack.c.b16 %v1688, %v1682
      %v2061 = vpack.c.b16 %v1689, %v1683
      %v2062 = vpack.c.b16 %v1696, %v1690
      %v2063 = vpack.c.b16 %v1697, %v1691
      %v2064 = vpack.c.b16 %v1698, %v1692
      %v2065 = vpack.c.b16 %v1699, %v1693
      %v2066 = vpack.c.b16 %v1700, %v1694
      %v2067 = vpack.c.b16 %v1701, %v1695
      %v2068 = vpack.c.b16 %v1708, %v1702
      %v2069 = vpack.c.b16 %v1709, %v1703
      %v2070 = vpack.c.b16 %v1710, %v1704
      %v2071 = vpack.c.b16 %v1711, %v1705
      %v2072 = vpack.c.b16 %v1712, %v1706
      %v2073 = vpack.c.b16 %v1713, %v1707
      %v2074 = vpack.c.b16 %v1720, %v1714
      %v2075 = vpack.c.b16 %v1721, %v1715
      %v2076 = vpack.c.b16 %v1722, %v1716
      %v2077 = vpack.c.b16 %v1723, %v1717
      %v2078 = vpack.c.b16 %v1724, %v1718
      %v2079 = vpack.c.b16 %v1725, %v1719
      %v2080 = vpack.c.b16 %v1732, %v1726
      %v2081 = vpack.c.b16 %v1733, %v1727
      %v2082 = vpack.c.b16 %v1734, %v1728
      %v2083 = vpack.c.b16 %v1735, %v1729
      %v2084 = vpack.c.b16 %v1736, %v1730
      %v2085 = vpack.c.b16 %v1737, %v1731
      %v2086 = vpack.c.b16 %v1744, %v1738
      %v2087 = vpack.c.b16 %v1745, %v1739
      %v2088 = vpack.c.b16 %v1746, %v1740
      %v2089 = vpack.c.b16 %v1747, %v1741
      %v2090 = vpack.c.b16 %v1748, %v1742
      %v2091 = vpack.c.b16 %v1749, %v1743
      %v2092 = vpack.c.b16 %v1756, %v1750
      %v2093 = vpack.c.b16 %v1757, %v1751
      %v2094 = vpack.c.b16 %v1758, %v1752
      %v2095 = vpack.c.b16 %v1759, %v1753
      %v2096 = vpack.c.b16 %v1760, %v1754
      %v2097 = vpack.c.b16 %v1761, %v1755
      %v2098 = vpack.c.b16 %v1768, %v1762
      %v2099 = vpack.c.b16 %v1769, %v1763
      %v2100 = vpack.c.b16 %v1770, %v1764
      %v2101 = vpack.c.b16 %v1771, %v1765
      %v2102 = vpack.c.b16 %v1772, %v1766
      %v2103 = vpack.c.b16 %v1773, %v1767
      %v2104 = vpack.c.b16 %v1780, %v1774
      %v2105 = vpack.c.b16 %v1781, %v1775
      %v2106 = vpack.c.b16 %v1782, %v1776
      %v2107 = vpack.c.b16 %v1783, %v1777
      %v2108 = vpack.c.b16 %v1784, %v1778
      %v2109 = vpack.c.b16 %v1785, %v1779
      %v2110 = vpack.c.b16 %v1792, %v1786
      %v2111 = vpack.c.b16 %v1793, %v1787
      %v2112 = vpack.c.b16 %v1794, %v1788
      %v2113 = vpack.c.b16 %v1795, %v1789
      %v2114 = vpack.c.b16 %v1796, %v1790
      %v2115 = vpack.c.b16 %v1797, %v1791
      %v2116 = vpack.c.b16 %v1804, %v1798
      %v2117 = vpack.c.b16 %v1805, %v1799
      %v2118 = vpack.c.b16 %v1806, %v1800
      %v2119 = vpack.c.b16 %v1807, %v1801
      %v2120 = vpack.c.b16 %v1808, %v1802
      %v2121 = vpack.c.b16 %v1809, %v1803
      %v2122 = vpack.c.b16 %v1816, %v1810
      %v2123 = vpack.c.b16 %v1817, %v1811
      %v2124 = vpack.c.b16 %v1818, %v1812
      %v2125 = vpack.c.b16 %v1819, %v1813
      %v2126 = vpack.c.b16 %v1820, %v1814
      %v2127 = vpack.c.b16 %v1821, %v1815
      %v2128 = vpack.c.b16 %v1828, %v1822
      %v2129 = vpack.c.b16 %v1829, %v1823
      %v2130 = vpack.c.b16 %v1830, %v1824
      %v2131 = vpack.c.b16 %v1831, %v1825
      %v2132 = vpack.c.b16 %v1832, %v1826
      %v2133 = vpack.c.b16 %v1833, %v1827
      %v2134 = vpack.c.b16 %v1840, %v1834
      %v2135 = vpack.c.b16 %v1841, %v1835
      %v2136 = vpack.c.b16 %v1842, %v1836
      %v2137 = vpack.c.b16 %v1843, %v1837
      %v2138 = vpack.c.b16 %v1844, %v1838
      %v2139 = vpack.c.b16 %v1845, %v1839
      %v2140 = vpack.c.b16 %v1852, %v1846
      %v2141 = vpack.c.b16 %v1853, %v1847
      %v2142 = vpack.c.b16 %v1854, %v1848
      %v2143 = vpack.c.b16 %v1855, %v1849
      %v2144 = vpack.c.b16 %v1856, %v1850
      %v2145 = vpack.c.b16 %v1857, %v1851
      %2434 = vmatpush.bf16.msra.mxu0 %v1900
      %2435 = vmatpush.bf16.msra.mxu0 %v1894
      %2436 = vmatpush.bf16.msra.mxu0 %v1888
      %2437 = vmatpush.bf16.msra.mxu0 %v1882
      %2438 = vmatpush.bf16.msra.mxu0 %v1876
      %2439 = vmatpush.bf16.msra.mxu0 %v1870
      %2440 = vmatpush.bf16.msra.mxu0 %v1864
      %2441 = vmatpush.bf16.msra.mxu0 %v1858
      %2442 = vmatmul.bf16.gmra.mxu0 %v898
      %v2443 = vpop.f32.mrf.mxu0
      %v2444 = vadd.f32 0.0, %v2443
      %v2445 = vpop.f32.mrf.mxu0
      %v2446 = vadd.f32 0.0, %v2445
      %2447 = vmatmul.bf16.gmra.mxu0 %v904
      %v2448 = vpop.f32.mrf.mxu0
      %v2449 = vadd.f32 0.0, %v2448
      %v2450 = vpop.f32.mrf.mxu0
      %v2451 = vadd.f32 0.0, %v2450
      %2452 = vmatmul.bf16.gmra.mxu0 %v910
      %v2453 = vpop.f32.mrf.mxu0
      %v2454 = vadd.f32 0.0, %v2453
      %v2455 = vpop.f32.mrf.mxu0
      %v2456 = vadd.f32 0.0, %v2455
      %2457 = vmatmul.bf16.gmra.mxu0 %v916
      %v2458 = vpop.f32.mrf.mxu0
      %v2459 = vadd.f32 0.0, %v2458
      %v2460 = vpop.f32.mrf.mxu0
      %v2461 = vadd.f32 0.0, %v2460
      %2462 = vmatmul.bf16.gmra.mxu0 %v922
      %v2463 = vpop.f32.mrf.mxu0
      %v2464 = vadd.f32 0.0, %v2463
      %v2465 = vpop.f32.mrf.mxu0
      %v2466 = vadd.f32 0.0, %v2465
      %2467 = vmatmul.bf16.gmra.mxu0 %v928
      %v2468 = vpop.f32.mrf.mxu0
      %v2469 = vadd.f32 0.0, %v2468
      %v2470 = vpop.f32.mrf.mxu0
      %v2471 = vadd.f32 0.0, %v2470
      %2472 = vmatmul.bf16.gmra.mxu0 %v934
      %v2473 = vpop.f32.mrf.mxu0
      %v2474 = vadd.f32 0.0, %v2473
      %v2475 = vpop.f32.mrf.mxu0
      %v2476 = vadd.f32 0.0, %v2475
      %2477 = vmatmul.bf16.gmra.mxu0 %v940
      %v2478 = vpop.f32.mrf.mxu0
      %v2479 = vadd.f32 0.0, %v2478
      %v2480 = vpop.f32.mrf.mxu0
      %v2481 = vadd.f32 0.0, %v2480
      %2482 = vdwg.mxu0
      %2483 = vmatpush.bf16.msra.mxu0 %v1948
      %2484 = vmatpush.bf16.msra.mxu0 %v1942
      %2485 = vmatpush.bf16.msra.mxu0 %v1936
      %2486 = vmatpush.bf16.msra.mxu0 %v1930
      %2487 = vmatpush.bf16.msra.mxu0 %v1924
      %2488 = vmatpush.bf16.msra.mxu0 %v1918
      %2489 = vmatpush.bf16.msra.mxu0 %v1912
      %2490 = vmatpush.bf16.msra.mxu0 %v1906
      %2491 = vmatmul.bf16.gmra.mxu0 %v899
      %v2492 = vpop.f32.mrf.mxu0
      %v2493 = vadd.f32 %v2444, %v2492
      %v2494 = vpop.f32.mrf.mxu0
      %v2495 = vadd.f32 %v2446, %v2494
      %2496 = vmatmul.bf16.gmra.mxu0 %v905
      %v2497 = vpop.f32.mrf.mxu0
      %v2498 = vadd.f32 %v2449, %v2497
      %v2499 = vpop.f32.mrf.mxu0
      %v2500 = vadd.f32 %v2451, %v2499
      %2501 = vmatmul.bf16.gmra.mxu0 %v911
      %v2502 = vpop.f32.mrf.mxu0
      %v2503 = vadd.f32 %v2454, %v2502
      %v2504 = vpop.f32.mrf.mxu0
      %v2505 = vadd.f32 %v2456, %v2504
      %2506 = vmatmul.bf16.gmra.mxu0 %v917
      %v2507 = vpop.f32.mrf.mxu0
      %v2508 = vadd.f32 %v2459, %v2507
      %v2509 = vpop.f32.mrf.mxu0
      %v2510 = vadd.f32 %v2461, %v2509
      %2511 = vmatmul.bf16.gmra.mxu0 %v923
      %v2512 = vpop.f32.mrf.mxu0
      %v2513 = vadd.f32 %v2464, %v2512
      %v2514 = vpop.f32.mrf.mxu0
      %v2515 = vadd.f32 %v2466, %v2514
      %2516 = vmatmul.bf16.gmra.mxu0 %v929
      %v2517 = vpop.f32.mrf.mxu0
      %v2518 = vadd.f32 %v2469, %v2517
      %v2519 = vpop.f32.mrf.mxu0
      %v2520 = vadd.f32 %v2471, %v2519
      %2521 = vmatmul.bf16.gmra.mxu0 %v935
      %v2522 = vpop.f32.mrf.mxu0
      %v2523 = vadd.f32 %v2474, %v2522
      %v2524 = vpop.f32.mrf.mxu0
      %v2525 = vadd.f32 %v2476, %v2524
      %2526 = vmatmul.bf16.gmra.mxu0 %v941
      %v2527 = vpop.f32.mrf.mxu0
      %v2528 = vadd.f32 %v2479, %v2527
      %v2529 = vpop.f32.mrf.mxu0
      %v2530 = vadd.f32 %v2481, %v2529
      %2531 = vdwg.mxu0
      %2532 = vmatpush.bf16.msra.mxu0 %v1996
      %2533 = vmatpush.bf16.msra.mxu0 %v1990
      %2534 = vmatpush.bf16.msra.mxu0 %v1984
      %2535 = vmatpush.bf16.msra.mxu0 %v1978
      %2536 = vmatpush.bf16.msra.mxu0 %v1972
      %2537 = vmatpush.bf16.msra.mxu0 %v1966
      %2538 = vmatpush.bf16.msra.mxu0 %v1960
      %2539 = vmatpush.bf16.msra.mxu0 %v1954
      %2540 = vmatmul.bf16.gmra.mxu0 %v900
      %v2541 = vpop.f32.mrf.mxu0
      %v2542 = vadd.f32 %v2493, %v2541
      %v2543 = vpop.f32.mrf.mxu0
      %v2544 = vadd.f32 %v2495, %v2543
      %2545 = vmatmul.bf16.gmra.mxu0 %v906
      %v2546 = vpop.f32.mrf.mxu0
      %v2547 = vadd.f32 %v2498, %v2546
      %v2548 = vpop.f32.mrf.mxu0
      %v2549 = vadd.f32 %v2500, %v2548
      %2550 = vmatmul.bf16.gmra.mxu0 %v912
      %v2551 = vpop.f32.mrf.mxu0
      %v2552 = vadd.f32 %v2503, %v2551
      %v2553 = vpop.f32.mrf.mxu0
      %v2554 = vadd.f32 %v2505, %v2553
      %2555 = vmatmul.bf16.gmra.mxu0 %v918
      %v2556 = vpop.f32.mrf.mxu0
      %v2557 = vadd.f32 %v2508, %v2556
      %v2558 = vpop.f32.mrf.mxu0
      %v2559 = vadd.f32 %v2510, %v2558
      %2560 = vmatmul.bf16.gmra.mxu0 %v924
      %v2561 = vpop.f32.mrf.mxu0
      %v2562 = vadd.f32 %v2513, %v2561
      %v2563 = vpop.f32.mrf.mxu0
      %v2564 = vadd.f32 %v2515, %v2563
      %2565 = vmatmul.bf16.gmra.mxu0 %v930
      %v2566 = vpop.f32.mrf.mxu0
      %v2567 = vadd.f32 %v2518, %v2566
      %v2568 = vpop.f32.mrf.mxu0
      %v2569 = vadd.f32 %v2520, %v2568
      %2570 = vmatmul.bf16.gmra.mxu0 %v936
      %v2571 = vpop.f32.mrf.mxu0
      %v2572 = vadd.f32 %v2523, %v2571
      %v2573 = vpop.f32.mrf.mxu0
      %v2574 = vadd.f32 %v2525, %v2573
      %2575 = vmatmul.bf16.gmra.mxu0 %v942
      %v2576 = vpop.f32.mrf.mxu0
      %v2577 = vadd.f32 %v2528, %v2576
      %v2578 = vpop.f32.mrf.mxu0
      %v2579 = vadd.f32 %v2530, %v2578
      %2580 = vdwg.mxu0
      %2581 = vmatpush.bf16.msra.mxu0 %v2044
      %2582 = vmatpush.bf16.msra.mxu0 %v2038
      %2583 = vmatpush.bf16.msra.mxu0 %v2032
      %2584 = vmatpush.bf16.msra.mxu0 %v2026
      %2585 = vmatpush.bf16.msra.mxu0 %v2020
      %2586 = vmatpush.bf16.msra.mxu0 %v2014
      %2587 = vmatpush.bf16.msra.mxu0 %v2008
      %2588 = vmatpush.bf16.msra.mxu0 %v2002
      %2589 = vmatmul.bf16.gmra.mxu0 %v901
      %v2590 = vpop.f32.mrf.mxu0
      %v2591 = vadd.f32 %v2542, %v2590
      %v2592 = vpop.f32.mrf.mxu0
      %v2593 = vadd.f32 %v2544, %v2592
      %2594 = vmatmul.bf16.gmra.mxu0 %v907
      %v2595 = vpop.f32.mrf.mxu0
      %v2596 = vadd.f32 %v2547, %v2595
      %v2597 = vpop.f32.mrf.mxu0
      %v2598 = vadd.f32 %v2549, %v2597
      %2599 = vmatmul.bf16.gmra.mxu0 %v913
      %v2600 = vpop.f32.mrf.mxu0
      %v2601 = vadd.f32 %v2552, %v2600
      %v2602 = vpop.f32.mrf.mxu0
      %v2603 = vadd.f32 %v2554, %v2602
      %2604 = vmatmul.bf16.gmra.mxu0 %v919
      %v2605 = vpop.f32.mrf.mxu0
      %v2606 = vadd.f32 %v2557, %v2605
      %v2607 = vpop.f32.mrf.mxu0
      %v2608 = vadd.f32 %v2559, %v2607
      %2609 = vmatmul.bf16.gmra.mxu0 %v925
      %v2610 = vpop.f32.mrf.mxu0
      %v2611 = vadd.f32 %v2562, %v2610
      %v2612 = vpop.f32.mrf.mxu0
      %v2613 = vadd.f32 %v2564, %v2612
      %2614 = vmatmul.bf16.gmra.mxu0 %v931
      %v2615 = vpop.f32.mrf.mxu0
      %v2616 = vadd.f32 %v2567, %v2615
      %v2617 = vpop.f32.mrf.mxu0
      %v2618 = vadd.f32 %v2569, %v2617
      %2619 = vmatmul.bf16.gmra.mxu0 %v937
      %v2620 = vpop.f32.mrf.mxu0
      %v2621 = vadd.f32 %v2572, %v2620
      %v2622 = vpop.f32.mrf.mxu0
      %v2623 = vadd.f32 %v2574, %v2622
      %2624 = vmatmul.bf16.gmra.mxu0 %v943
      %v2625 = vpop.f32.mrf.mxu0
      %v2626 = vadd.f32 %v2577, %v2625
      %v2627 = vpop.f32.mrf.mxu0
      %v2628 = vadd.f32 %v2579, %v2627
      %2629 = vdwg.mxu0
      %2630 = vmatpush.bf16.msra.mxu0 %v2092
      %2631 = vmatpush.bf16.msra.mxu0 %v2086
      %2632 = vmatpush.bf16.msra.mxu0 %v2080
      %2633 = vmatpush.bf16.msra.mxu0 %v2074
      %2634 = vmatpush.bf16.msra.mxu0 %v2068
      %2635 = vmatpush.bf16.msra.mxu0 %v2062
      %2636 = vmatpush.bf16.msra.mxu0 %v2056
      %2637 = vmatpush.bf16.msra.mxu0 %v2050
      %2638 = vmatmul.bf16.gmra.mxu0 %v902
      %v2639 = vpop.f32.mrf.mxu0
      %v2640 = vadd.f32 %v2591, %v2639
      %v2641 = vpop.f32.mrf.mxu0
      %v2642 = vadd.f32 %v2593, %v2641
      %2643 = vmatmul.bf16.gmra.mxu0 %v908
      %v2644 = vpop.f32.mrf.mxu0
      %v2645 = vadd.f32 %v2596, %v2644
      %v2646 = vpop.f32.mrf.mxu0
      %v2647 = vadd.f32 %v2598, %v2646
      %2648 = vmatmul.bf16.gmra.mxu0 %v914
      %v2649 = vpop.f32.mrf.mxu0
      %v2650 = vadd.f32 %v2601, %v2649
      %v2651 = vpop.f32.mrf.mxu0
      %v2652 = vadd.f32 %v2603, %v2651
      %2653 = vmatmul.bf16.gmra.mxu0 %v920
      %v2654 = vpop.f32.mrf.mxu0
      %v2655 = vadd.f32 %v2606, %v2654
      %v2656 = vpop.f32.mrf.mxu0
      %v2657 = vadd.f32 %v2608, %v2656
      %2658 = vmatmul.bf16.gmra.mxu0 %v926
      %v2659 = vpop.f32.mrf.mxu0
      %v2660 = vadd.f32 %v2611, %v2659
      %v2661 = vpop.f32.mrf.mxu0
      %v2662 = vadd.f32 %v2613, %v2661
      %2663 = vmatmul.bf16.gmra.mxu0 %v932
      %v2664 = vpop.f32.mrf.mxu0
      %v2665 = vadd.f32 %v2616, %v2664
      %v2666 = vpop.f32.mrf.mxu0
      %v2667 = vadd.f32 %v2618, %v2666
      %2668 = vmatmul.bf16.gmra.mxu0 %v938
      %v2669 = vpop.f32.mrf.mxu0
      %v2670 = vadd.f32 %v2621, %v2669
      %v2671 = vpop.f32.mrf.mxu0
      %v2672 = vadd.f32 %v2623, %v2671
      %2673 = vmatmul.bf16.gmra.mxu0 %v944
      %v2674 = vpop.f32.mrf.mxu0
      %v2675 = vadd.f32 %v2626, %v2674
      %v2676 = vpop.f32.mrf.mxu0
      %v2677 = vadd.f32 %v2628, %v2676
      %2678 = vdwg.mxu0
      %2679 = vmatpush.bf16.msra.mxu0 %v2140
      %2680 = vmatpush.bf16.msra.mxu0 %v2134
      %2681 = vmatpush.bf16.msra.mxu0 %v2128
      %2682 = vmatpush.bf16.msra.mxu0 %v2122
      %2683 = vmatpush.bf16.msra.mxu0 %v2116
      %2684 = vmatpush.bf16.msra.mxu0 %v2110
      %2685 = vmatpush.bf16.msra.mxu0 %v2104
      %2686 = vmatpush.bf16.msra.mxu0 %v2098
      %2687 = vmatmul.bf16.gmra.mxu0 %v903
      %v2688 = vpop.f32.mrf.mxu0
      %v2689 = vadd.f32 %v2640, %v2688
      %v2690 = vpop.f32.mrf.mxu0
      %v2691 = vadd.f32 %v2642, %v2690
      %2692 = vmatmul.bf16.gmra.mxu0 %v909
      %v2693 = vpop.f32.mrf.mxu0
      %v2694 = vadd.f32 %v2645, %v2693
      %v2695 = vpop.f32.mrf.mxu0
      %v2696 = vadd.f32 %v2647, %v2695
      %2697 = vmatmul.bf16.gmra.mxu0 %v915
      %v2698 = vpop.f32.mrf.mxu0
      %v2699 = vadd.f32 %v2650, %v2698
      %v2700 = vpop.f32.mrf.mxu0
      %v2701 = vadd.f32 %v2652, %v2700
      %2702 = vmatmul.bf16.gmra.mxu0 %v921
      %v2703 = vpop.f32.mrf.mxu0
      %v2704 = vadd.f32 %v2655, %v2703
      %v2705 = vpop.f32.mrf.mxu0
      %v2706 = vadd.f32 %v2657, %v2705
      %2707 = vmatmul.bf16.gmra.mxu0 %v927
      %v2708 = vpop.f32.mrf.mxu0
      %v2709 = vadd.f32 %v2660, %v2708
      %v2710 = vpop.f32.mrf.mxu0
      %v2711 = vadd.f32 %v2662, %v2710
      %2712 = vmatmul.bf16.gmra.mxu0 %v933
      %v2713 = vpop.f32.mrf.mxu0
      %v2714 = vadd.f32 %v2665, %v2713
      %v2715 = vpop.f32.mrf.mxu0
      %v2716 = vadd.f32 %v2667, %v2715
      %2717 = vmatmul.bf16.gmra.mxu0 %v939
      %v2718 = vpop.f32.mrf.mxu0
      %v2719 = vadd.f32 %v2670, %v2718
      %v2720 = vpop.f32.mrf.mxu0
      %v2721 = vadd.f32 %v2672, %v2720
      %2722 = vmatmul.bf16.gmra.mxu0 %v945
      %v2723 = vpop.f32.mrf.mxu0
      %v2724 = vadd.f32 %v2675, %v2723
      %v2725 = vpop.f32.mrf.mxu0
      %v2726 = vadd.f32 %v2677, %v2725
      %2727 = vdwg.mxu0
      %2728 = vmatpush.bf16.msra.mxu0 %v1901
      %2729 = vmatpush.bf16.msra.mxu0 %v1895
      %2730 = vmatpush.bf16.msra.mxu0 %v1889
      %2731 = vmatpush.bf16.msra.mxu0 %v1883
      %2732 = vmatpush.bf16.msra.mxu0 %v1877
      %2733 = vmatpush.bf16.msra.mxu0 %v1871
      %2734 = vmatpush.bf16.msra.mxu0 %v1865
      %2735 = vmatpush.bf16.msra.mxu0 %v1859
      %2736 = vmatmul.bf16.gmra.mxu0 %v898
      %v2737 = vpop.f32.mrf.mxu0
      %v2738 = vadd.f32 0.0, %v2737
      %v2739 = vpop.f32.mrf.mxu0
      %v2740 = vadd.f32 0.0, %v2739
      %2741 = vmatmul.bf16.gmra.mxu0 %v904
      %v2742 = vpop.f32.mrf.mxu0
      %v2743 = vadd.f32 0.0, %v2742
      %v2744 = vpop.f32.mrf.mxu0
      %v2745 = vadd.f32 0.0, %v2744
      %2746 = vmatmul.bf16.gmra.mxu0 %v910
      %v2747 = vpop.f32.mrf.mxu0
      %v2748 = vadd.f32 0.0, %v2747
      %v2749 = vpop.f32.mrf.mxu0
      %v2750 = vadd.f32 0.0, %v2749
      %2751 = vmatmul.bf16.gmra.mxu0 %v916
      %v2752 = vpop.f32.mrf.mxu0
      %v2753 = vadd.f32 0.0, %v2752
      %v2754 = vpop.f32.mrf.mxu0
      %v2755 = vadd.f32 0.0, %v2754
      %2756 = vmatmul.bf16.gmra.mxu0 %v922
      %v2757 = vpop.f32.mrf.mxu0
      %v2758 = vadd.f32 0.0, %v2757
      %v2759 = vpop.f32.mrf.mxu0
      %v2760 = vadd.f32 0.0, %v2759
      %2761 = vmatmul.bf16.gmra.mxu0 %v928
      %v2762 = vpop.f32.mrf.mxu0
      %v2763 = vadd.f32 0.0, %v2762
      %v2764 = vpop.f32.mrf.mxu0
      %v2765 = vadd.f32 0.0, %v2764
      %2766 = vmatmul.bf16.gmra.mxu0 %v934
      %v2767 = vpop.f32.mrf.mxu0
      %v2768 = vadd.f32 0.0, %v2767
      %v2769 = vpop.f32.mrf.mxu0
      %v2770 = vadd.f32 0.0, %v2769
      %2771 = vmatmul.bf16.gmra.mxu0 %v940
      %v2772 = vpop.f32.mrf.mxu0
      %v2773 = vadd.f32 0.0, %v2772
      %v2774 = vpop.f32.mrf.mxu0
      %v2775 = vadd.f32 0.0, %v2774
      %2776 = vdwg.mxu0
      %2777 = vmatpush.bf16.msra.mxu0 %v1949
      %2778 = vmatpush.bf16.msra.mxu0 %v1943
      %2779 = vmatpush.bf16.msra.mxu0 %v1937
      %2780 = vmatpush.bf16.msra.mxu0 %v1931
      %2781 = vmatpush.bf16.msra.mxu0 %v1925
      %2782 = vmatpush.bf16.msra.mxu0 %v1919
      %2783 = vmatpush.bf16.msra.mxu0 %v1913
      %2784 = vmatpush.bf16.msra.mxu0 %v1907
      %2785 = vmatmul.bf16.gmra.mxu0 %v899
      %v2786 = vpop.f32.mrf.mxu0
      %v2787 = vadd.f32 %v2738, %v2786
      %v2788 = vpop.f32.mrf.mxu0
      %v2789 = vadd.f32 %v2740, %v2788
      %2790 = vmatmul.bf16.gmra.mxu0 %v905
      %v2791 = vpop.f32.mrf.mxu0
      %v2792 = vadd.f32 %v2743, %v2791
      %v2793 = vpop.f32.mrf.mxu0
      %v2794 = vadd.f32 %v2745, %v2793
      %2795 = vmatmul.bf16.gmra.mxu0 %v911
      %v2796 = vpop.f32.mrf.mxu0
      %v2797 = vadd.f32 %v2748, %v2796
      %v2798 = vpop.f32.mrf.mxu0
      %v2799 = vadd.f32 %v2750, %v2798
      %2800 = vmatmul.bf16.gmra.mxu0 %v917
      %v2801 = vpop.f32.mrf.mxu0
      %v2802 = vadd.f32 %v2753, %v2801
      %v2803 = vpop.f32.mrf.mxu0
      %v2804 = vadd.f32 %v2755, %v2803
      %2805 = vmatmul.bf16.gmra.mxu0 %v923
      %v2806 = vpop.f32.mrf.mxu0
      %v2807 = vadd.f32 %v2758, %v2806
      %v2808 = vpop.f32.mrf.mxu0
      %v2809 = vadd.f32 %v2760, %v2808
      %2810 = vmatmul.bf16.gmra.mxu0 %v929
      %v2811 = vpop.f32.mrf.mxu0
      %v2812 = vadd.f32 %v2763, %v2811
      %v2813 = vpop.f32.mrf.mxu0
      %v2814 = vadd.f32 %v2765, %v2813
      %2815 = vmatmul.bf16.gmra.mxu0 %v935
      %v2816 = vpop.f32.mrf.mxu0
      %v2817 = vadd.f32 %v2768, %v2816
      %v2818 = vpop.f32.mrf.mxu0
      %v2819 = vadd.f32 %v2770, %v2818
      %2820 = vmatmul.bf16.gmra.mxu0 %v941
      %v2821 = vpop.f32.mrf.mxu0
      %v2822 = vadd.f32 %v2773, %v2821
      %v2823 = vpop.f32.mrf.mxu0
      %v2824 = vadd.f32 %v2775, %v2823
      %2825 = vdwg.mxu0
      %2826 = vmatpush.bf16.msra.mxu0 %v1997
      %2827 = vmatpush.bf16.msra.mxu0 %v1991
      %2828 = vmatpush.bf16.msra.mxu0 %v1985
      %2829 = vmatpush.bf16.msra.mxu0 %v1979
      %2830 = vmatpush.bf16.msra.mxu0 %v1973
      %2831 = vmatpush.bf16.msra.mxu0 %v1967
      %2832 = vmatpush.bf16.msra.mxu0 %v1961
      %2833 = vmatpush.bf16.msra.mxu0 %v1955
      %2834 = vmatmul.bf16.gmra.mxu0 %v900
      %v2835 = vpop.f32.mrf.mxu0
      %v2836 = vadd.f32 %v2787, %v2835
      %v2837 = vpop.f32.mrf.mxu0
      %v2838 = vadd.f32 %v2789, %v2837
      %2839 = vmatmul.bf16.gmra.mxu0 %v906
      %v2840 = vpop.f32.mrf.mxu0
      %v2841 = vadd.f32 %v2792, %v2840
      %v2842 = vpop.f32.mrf.mxu0
      %v2843 = vadd.f32 %v2794, %v2842
      %2844 = vmatmul.bf16.gmra.mxu0 %v912
      %v2845 = vpop.f32.mrf.mxu0
      %v2846 = vadd.f32 %v2797, %v2845
      %v2847 = vpop.f32.mrf.mxu0
      %v2848 = vadd.f32 %v2799, %v2847
      %2849 = vmatmul.bf16.gmra.mxu0 %v918
      %v2850 = vpop.f32.mrf.mxu0
      %v2851 = vadd.f32 %v2802, %v2850
      %v2852 = vpop.f32.mrf.mxu0
      %v2853 = vadd.f32 %v2804, %v2852
      %2854 = vmatmul.bf16.gmra.mxu0 %v924
      %v2855 = vpop.f32.mrf.mxu0
      %v2856 = vadd.f32 %v2807, %v2855
      %v2857 = vpop.f32.mrf.mxu0
      %v2858 = vadd.f32 %v2809, %v2857
      %2859 = vmatmul.bf16.gmra.mxu0 %v930
      %v2860 = vpop.f32.mrf.mxu0
      %v2861 = vadd.f32 %v2812, %v2860
      %v2862 = vpop.f32.mrf.mxu0
      %v2863 = vadd.f32 %v2814, %v2862
      %2864 = vmatmul.bf16.gmra.mxu0 %v936
      %v2865 = vpop.f32.mrf.mxu0
      %v2866 = vadd.f32 %v2817, %v2865
      %v2867 = vpop.f32.mrf.mxu0
      %v2868 = vadd.f32 %v2819, %v2867
      %2869 = vmatmul.bf16.gmra.mxu0 %v942
      %v2870 = vpop.f32.mrf.mxu0
      %v2871 = vadd.f32 %v2822, %v2870
      %v2872 = vpop.f32.mrf.mxu0
      %v2873 = vadd.f32 %v2824, %v2872
      %2874 = vdwg.mxu0
      %2875 = vmatpush.bf16.msra.mxu0 %v2045
      %2876 = vmatpush.bf16.msra.mxu0 %v2039
      %2877 = vmatpush.bf16.msra.mxu0 %v2033
      %2878 = vmatpush.bf16.msra.mxu0 %v2027
      %2879 = vmatpush.bf16.msra.mxu0 %v2021
      %2880 = vmatpush.bf16.msra.mxu0 %v2015
      %2881 = vmatpush.bf16.msra.mxu0 %v2009
      %2882 = vmatpush.bf16.msra.mxu0 %v2003
      %2883 = vmatmul.bf16.gmra.mxu0 %v901
      %v2884 = vpop.f32.mrf.mxu0
      %v2885 = vadd.f32 %v2836, %v2884
      %v2886 = vpop.f32.mrf.mxu0
      %v2887 = vadd.f32 %v2838, %v2886
      %2888 = vmatmul.bf16.gmra.mxu0 %v907
      %v2889 = vpop.f32.mrf.mxu0
      %v2890 = vadd.f32 %v2841, %v2889
      %v2891 = vpop.f32.mrf.mxu0
      %v2892 = vadd.f32 %v2843, %v2891
      %2893 = vmatmul.bf16.gmra.mxu0 %v913
      %v2894 = vpop.f32.mrf.mxu0
      %v2895 = vadd.f32 %v2846, %v2894
      %v2896 = vpop.f32.mrf.mxu0
      %v2897 = vadd.f32 %v2848, %v2896
      %2898 = vmatmul.bf16.gmra.mxu0 %v919
      %v2899 = vpop.f32.mrf.mxu0
      %v2900 = vadd.f32 %v2851, %v2899
      %v2901 = vpop.f32.mrf.mxu0
      %v2902 = vadd.f32 %v2853, %v2901
      %2903 = vmatmul.bf16.gmra.mxu0 %v925
      %v2904 = vpop.f32.mrf.mxu0
      %v2905 = vadd.f32 %v2856, %v2904
      %v2906 = vpop.f32.mrf.mxu0
      %v2907 = vadd.f32 %v2858, %v2906
      %2908 = vmatmul.bf16.gmra.mxu0 %v931
      %v2909 = vpop.f32.mrf.mxu0
      %v2910 = vadd.f32 %v2861, %v2909
      %v2911 = vpop.f32.mrf.mxu0
      %v2912 = vadd.f32 %v2863, %v2911
      %2913 = vmatmul.bf16.gmra.mxu0 %v937
      %v2914 = vpop.f32.mrf.mxu0
      %v2915 = vadd.f32 %v2866, %v2914
      %v2916 = vpop.f32.mrf.mxu0
      %v2917 = vadd.f32 %v2868, %v2916
      %2918 = vmatmul.bf16.gmra.mxu0 %v943
      %v2919 = vpop.f32.mrf.mxu0
      %v2920 = vadd.f32 %v2871, %v2919
      %v2921 = vpop.f32.mrf.mxu0
      %v2922 = vadd.f32 %v2873, %v2921
      %2923 = vdwg.mxu0
      %2924 = vmatpush.bf16.msra.mxu0 %v2093
      %2925 = vmatpush.bf16.msra.mxu0 %v2087
      %2926 = vmatpush.bf16.msra.mxu0 %v2081
      %2927 = vmatpush.bf16.msra.mxu0 %v2075
      %2928 = vmatpush.bf16.msra.mxu0 %v2069
      %2929 = vmatpush.bf16.msra.mxu0 %v2063
      %2930 = vmatpush.bf16.msra.mxu0 %v2057
      %2931 = vmatpush.bf16.msra.mxu0 %v2051
      %2932 = vmatmul.bf16.gmra.mxu0 %v902
      %v2933 = vpop.f32.mrf.mxu0
      %v2934 = vadd.f32 %v2885, %v2933
      %v2935 = vpop.f32.mrf.mxu0
      %v2936 = vadd.f32 %v2887, %v2935
      %2937 = vmatmul.bf16.gmra.mxu0 %v908
      %v2938 = vpop.f32.mrf.mxu0
      %v2939 = vadd.f32 %v2890, %v2938
      %v2940 = vpop.f32.mrf.mxu0
      %v2941 = vadd.f32 %v2892, %v2940
      %2942 = vmatmul.bf16.gmra.mxu0 %v914
      %v2943 = vpop.f32.mrf.mxu0
      %v2944 = vadd.f32 %v2895, %v2943
      %v2945 = vpop.f32.mrf.mxu0
      %v2946 = vadd.f32 %v2897, %v2945
      %2947 = vmatmul.bf16.gmra.mxu0 %v920
      %v2948 = vpop.f32.mrf.mxu0
      %v2949 = vadd.f32 %v2900, %v2948
      %v2950 = vpop.f32.mrf.mxu0
      %v2951 = vadd.f32 %v2902, %v2950
      %2952 = vmatmul.bf16.gmra.mxu0 %v926
      %v2953 = vpop.f32.mrf.mxu0
      %v2954 = vadd.f32 %v2905, %v2953
      %v2955 = vpop.f32.mrf.mxu0
      %v2956 = vadd.f32 %v2907, %v2955
      %2957 = vmatmul.bf16.gmra.mxu0 %v932
      %v2958 = vpop.f32.mrf.mxu0
      %v2959 = vadd.f32 %v2910, %v2958
      %v2960 = vpop.f32.mrf.mxu0
      %v2961 = vadd.f32 %v2912, %v2960
      %2962 = vmatmul.bf16.gmra.mxu0 %v938
      %v2963 = vpop.f32.mrf.mxu0
      %v2964 = vadd.f32 %v2915, %v2963
      %v2965 = vpop.f32.mrf.mxu0
      %v2966 = vadd.f32 %v2917, %v2965
      %2967 = vmatmul.bf16.gmra.mxu0 %v944
      %v2968 = vpop.f32.mrf.mxu0
      %v2969 = vadd.f32 %v2920, %v2968
      %v2970 = vpop.f32.mrf.mxu0
      %v2971 = vadd.f32 %v2922, %v2970
      %2972 = vdwg.mxu0
      %2973 = vmatpush.bf16.msra.mxu0 %v2141
      %2974 = vmatpush.bf16.msra.mxu0 %v2135
      %2975 = vmatpush.bf16.msra.mxu0 %v2129
      %2976 = vmatpush.bf16.msra.mxu0 %v2123
      %2977 = vmatpush.bf16.msra.mxu0 %v2117
      %2978 = vmatpush.bf16.msra.mxu0 %v2111
      %2979 = vmatpush.bf16.msra.mxu0 %v2105
      %2980 = vmatpush.bf16.msra.mxu0 %v2099
      %2981 = vmatmul.bf16.gmra.mxu0 %v903
      %v2982 = vpop.f32.mrf.mxu0
      %v2983 = vadd.f32 %v2934, %v2982
      %v2984 = vpop.f32.mrf.mxu0
      %v2985 = vadd.f32 %v2936, %v2984
      %2986 = vmatmul.bf16.gmra.mxu0 %v909
      %v2987 = vpop.f32.mrf.mxu0
      %v2988 = vadd.f32 %v2939, %v2987
      %v2989 = vpop.f32.mrf.mxu0
      %v2990 = vadd.f32 %v2941, %v2989
      %2991 = vmatmul.bf16.gmra.mxu0 %v915
      %v2992 = vpop.f32.mrf.mxu0
      %v2993 = vadd.f32 %v2944, %v2992
      %v2994 = vpop.f32.mrf.mxu0
      %v2995 = vadd.f32 %v2946, %v2994
      %2996 = vmatmul.bf16.gmra.mxu0 %v921
      %v2997 = vpop.f32.mrf.mxu0
      %v2998 = vadd.f32 %v2949, %v2997
      %v2999 = vpop.f32.mrf.mxu0
      %v3000 = vadd.f32 %v2951, %v2999
      %3001 = vmatmul.bf16.gmra.mxu0 %v927
      %v3002 = vpop.f32.mrf.mxu0
      %v3003 = vadd.f32 %v2954, %v3002
      %v3004 = vpop.f32.mrf.mxu0
      %v3005 = vadd.f32 %v2956, %v3004
      %3006 = vmatmul.bf16.gmra.mxu0 %v933
      %v3007 = vpop.f32.mrf.mxu0
      %v3008 = vadd.f32 %v2959, %v3007
      %v3009 = vpop.f32.mrf.mxu0
      %v3010 = vadd.f32 %v2961, %v3009
      %3011 = vmatmul.bf16.gmra.mxu0 %v939
      %v3012 = vpop.f32.mrf.mxu0
      %v3013 = vadd.f32 %v2964, %v3012
      %v3014 = vpop.f32.mrf.mxu0
      %v3015 = vadd.f32 %v2966, %v3014
      %3016 = vmatmul.bf16.gmra.mxu0 %v945
      %v3017 = vpop.f32.mrf.mxu0
      %v3018 = vadd.f32 %v2969, %v3017
      %v3019 = vpop.f32.mrf.mxu0
      %v3020 = vadd.f32 %v2971, %v3019
      %3021 = vdwg.mxu0
      %3022 = vmatpush.bf16.msra.mxu0 %v1902
      %3023 = vmatpush.bf16.msra.mxu0 %v1896
      %3024 = vmatpush.bf16.msra.mxu0 %v1890
      %3025 = vmatpush.bf16.msra.mxu0 %v1884
      %3026 = vmatpush.bf16.msra.mxu0 %v1878
      %3027 = vmatpush.bf16.msra.mxu0 %v1872
      %3028 = vmatpush.bf16.msra.mxu0 %v1866
      %3029 = vmatpush.bf16.msra.mxu0 %v1860
      %3030 = vmatmul.bf16.gmra.mxu0 %v898
      %v3031 = vpop.f32.mrf.mxu0
      %v3032 = vadd.f32 0.0, %v3031
      %v3033 = vpop.f32.mrf.mxu0
      %v3034 = vadd.f32 0.0, %v3033
      %3035 = vmatmul.bf16.gmra.mxu0 %v904
      %v3036 = vpop.f32.mrf.mxu0
      %v3037 = vadd.f32 0.0, %v3036
      %v3038 = vpop.f32.mrf.mxu0
      %v3039 = vadd.f32 0.0, %v3038
      %3040 = vmatmul.bf16.gmra.mxu0 %v910
      %v3041 = vpop.f32.mrf.mxu0
      %v3042 = vadd.f32 0.0, %v3041
      %v3043 = vpop.f32.mrf.mxu0
      %v3044 = vadd.f32 0.0, %v3043
      %3045 = vmatmul.bf16.gmra.mxu0 %v916
      %v3046 = vpop.f32.mrf.mxu0
      %v3047 = vadd.f32 0.0, %v3046
      %v3048 = vpop.f32.mrf.mxu0
      %v3049 = vadd.f32 0.0, %v3048
      %3050 = vmatmul.bf16.gmra.mxu0 %v922
      %v3051 = vpop.f32.mrf.mxu0
      %v3052 = vadd.f32 0.0, %v3051
      %v3053 = vpop.f32.mrf.mxu0
      %v3054 = vadd.f32 0.0, %v3053
      %3055 = vmatmul.bf16.gmra.mxu0 %v928
      %v3056 = vpop.f32.mrf.mxu0
      %v3057 = vadd.f32 0.0, %v3056
      %v3058 = vpop.f32.mrf.mxu0
      %v3059 = vadd.f32 0.0, %v3058
      %3060 = vmatmul.bf16.gmra.mxu0 %v934
      %v3061 = vpop.f32.mrf.mxu0
      %v3062 = vadd.f32 0.0, %v3061
      %v3063 = vpop.f32.mrf.mxu0
      %v3064 = vadd.f32 0.0, %v3063
      %3065 = vmatmul.bf16.gmra.mxu0 %v940
      %v3066 = vpop.f32.mrf.mxu0
      %v3067 = vadd.f32 0.0, %v3066
      %v3068 = vpop.f32.mrf.mxu0
      %v3069 = vadd.f32 0.0, %v3068
      %3070 = vdwg.mxu0
      %3071 = vmatpush.bf16.msra.mxu0 %v1950
      %3072 = vmatpush.bf16.msra.mxu0 %v1944
      %3073 = vmatpush.bf16.msra.mxu0 %v1938
      %3074 = vmatpush.bf16.msra.mxu0 %v1932
      %3075 = vmatpush.bf16.msra.mxu0 %v1926
      %3076 = vmatpush.bf16.msra.mxu0 %v1920
      %3077 = vmatpush.bf16.msra.mxu0 %v1914
      %3078 = vmatpush.bf16.msra.mxu0 %v1908
      %3079 = vmatmul.bf16.gmra.mxu0 %v899
      %v3080 = vpop.f32.mrf.mxu0
      %v3081 = vadd.f32 %v3032, %v3080
      %v3082 = vpop.f32.mrf.mxu0
      %v3083 = vadd.f32 %v3034, %v3082
      %3084 = vmatmul.bf16.gmra.mxu0 %v905
      %v3085 = vpop.f32.mrf.mxu0
      %v3086 = vadd.f32 %v3037, %v3085
      %v3087 = vpop.f32.mrf.mxu0
      %v3088 = vadd.f32 %v3039, %v3087
      %3089 = vmatmul.bf16.gmra.mxu0 %v911
      %v3090 = vpop.f32.mrf.mxu0
      %v3091 = vadd.f32 %v3042, %v3090
      %v3092 = vpop.f32.mrf.mxu0
      %v3093 = vadd.f32 %v3044, %v3092
      %3094 = vmatmul.bf16.gmra.mxu0 %v917
      %v3095 = vpop.f32.mrf.mxu0
      %v3096 = vadd.f32 %v3047, %v3095
      %v3097 = vpop.f32.mrf.mxu0
      %v3098 = vadd.f32 %v3049, %v3097
      %3099 = vmatmul.bf16.gmra.mxu0 %v923
      %v3100 = vpop.f32.mrf.mxu0
      %v3101 = vadd.f32 %v3052, %v3100
      %v3102 = vpop.f32.mrf.mxu0
      %v3103 = vadd.f32 %v3054, %v3102
      %3104 = vmatmul.bf16.gmra.mxu0 %v929
      %v3105 = vpop.f32.mrf.mxu0
      %v3106 = vadd.f32 %v3057, %v3105
      %v3107 = vpop.f32.mrf.mxu0
      %v3108 = vadd.f32 %v3059, %v3107
      %3109 = vmatmul.bf16.gmra.mxu0 %v935
      %v3110 = vpop.f32.mrf.mxu0
      %v3111 = vadd.f32 %v3062, %v3110
      %v3112 = vpop.f32.mrf.mxu0
      %v3113 = vadd.f32 %v3064, %v3112
      %3114 = vmatmul.bf16.gmra.mxu0 %v941
      %v3115 = vpop.f32.mrf.mxu0
      %v3116 = vadd.f32 %v3067, %v3115
      %v3117 = vpop.f32.mrf.mxu0
      %v3118 = vadd.f32 %v3069, %v3117
      %3119 = vdwg.mxu0
      %3120 = vmatpush.bf16.msra.mxu0 %v1998
      %3121 = vmatpush.bf16.msra.mxu0 %v1992
      %3122 = vmatpush.bf16.msra.mxu0 %v1986
      %3123 = vmatpush.bf16.msra.mxu0 %v1980
      %3124 = vmatpush.bf16.msra.mxu0 %v1974
      %3125 = vmatpush.bf16.msra.mxu0 %v1968
      %3126 = vmatpush.bf16.msra.mxu0 %v1962
      %3127 = vmatpush.bf16.msra.mxu0 %v1956
      %3128 = vmatmul.bf16.gmra.mxu0 %v900
      %v3129 = vpop.f32.mrf.mxu0
      %v3130 = vadd.f32 %v3081, %v3129
      %v3131 = vpop.f32.mrf.mxu0
      %v3132 = vadd.f32 %v3083, %v3131
      %3133 = vmatmul.bf16.gmra.mxu0 %v906
      %v3134 = vpop.f32.mrf.mxu0
      %v3135 = vadd.f32 %v3086, %v3134
      %v3136 = vpop.f32.mrf.mxu0
      %v3137 = vadd.f32 %v3088, %v3136
      %3138 = vmatmul.bf16.gmra.mxu0 %v912
      %v3139 = vpop.f32.mrf.mxu0
      %v3140 = vadd.f32 %v3091, %v3139
      %v3141 = vpop.f32.mrf.mxu0
      %v3142 = vadd.f32 %v3093, %v3141
      %3143 = vmatmul.bf16.gmra.mxu0 %v918
      %v3144 = vpop.f32.mrf.mxu0
      %v3145 = vadd.f32 %v3096, %v3144
      %v3146 = vpop.f32.mrf.mxu0
      %v3147 = vadd.f32 %v3098, %v3146
      %3148 = vmatmul.bf16.gmra.mxu0 %v924
      %v3149 = vpop.f32.mrf.mxu0
      %v3150 = vadd.f32 %v3101, %v3149
      %v3151 = vpop.f32.mrf.mxu0
      %v3152 = vadd.f32 %v3103, %v3151
      %3153 = vmatmul.bf16.gmra.mxu0 %v930
      %v3154 = vpop.f32.mrf.mxu0
      %v3155 = vadd.f32 %v3106, %v3154
      %v3156 = vpop.f32.mrf.mxu0
      %v3157 = vadd.f32 %v3108, %v3156
      %3158 = vmatmul.bf16.gmra.mxu0 %v936
      %v3159 = vpop.f32.mrf.mxu0
      %v3160 = vadd.f32 %v3111, %v3159
      %v3161 = vpop.f32.mrf.mxu0
      %v3162 = vadd.f32 %v3113, %v3161
      %3163 = vmatmul.bf16.gmra.mxu0 %v942
      %v3164 = vpop.f32.mrf.mxu0
      %v3165 = vadd.f32 %v3116, %v3164
      %v3166 = vpop.f32.mrf.mxu0
      %v3167 = vadd.f32 %v3118, %v3166
      %3168 = vdwg.mxu0
      %3169 = vmatpush.bf16.msra.mxu0 %v2046
      %3170 = vmatpush.bf16.msra.mxu0 %v2040
      %3171 = vmatpush.bf16.msra.mxu0 %v2034
      %3172 = vmatpush.bf16.msra.mxu0 %v2028
      %3173 = vmatpush.bf16.msra.mxu0 %v2022
      %3174 = vmatpush.bf16.msra.mxu0 %v2016
      %3175 = vmatpush.bf16.msra.mxu0 %v2010
      %3176 = vmatpush.bf16.msra.mxu0 %v2004
      %3177 = vmatmul.bf16.gmra.mxu0 %v901
      %v3178 = vpop.f32.mrf.mxu0
      %v3179 = vadd.f32 %v3130, %v3178
      %v3180 = vpop.f32.mrf.mxu0
      %v3181 = vadd.f32 %v3132, %v3180
      %3182 = vmatmul.bf16.gmra.mxu0 %v907
      %v3183 = vpop.f32.mrf.mxu0
      %v3184 = vadd.f32 %v3135, %v3183
      %v3185 = vpop.f32.mrf.mxu0
      %v3186 = vadd.f32 %v3137, %v3185
      %3187 = vmatmul.bf16.gmra.mxu0 %v913
      %v3188 = vpop.f32.mrf.mxu0
      %v3189 = vadd.f32 %v3140, %v3188
      %v3190 = vpop.f32.mrf.mxu0
      %v3191 = vadd.f32 %v3142, %v3190
      %3192 = vmatmul.bf16.gmra.mxu0 %v919
      %v3193 = vpop.f32.mrf.mxu0
      %v3194 = vadd.f32 %v3145, %v3193
      %v3195 = vpop.f32.mrf.mxu0
      %v3196 = vadd.f32 %v3147, %v3195
      %3197 = vmatmul.bf16.gmra.mxu0 %v925
      %v3198 = vpop.f32.mrf.mxu0
      %v3199 = vadd.f32 %v3150, %v3198
      %v3200 = vpop.f32.mrf.mxu0
      %v3201 = vadd.f32 %v3152, %v3200
      %3202 = vmatmul.bf16.gmra.mxu0 %v931
      %v3203 = vpop.f32.mrf.mxu0
      %v3204 = vadd.f32 %v3155, %v3203
      %v3205 = vpop.f32.mrf.mxu0
      %v3206 = vadd.f32 %v3157, %v3205
      %3207 = vmatmul.bf16.gmra.mxu0 %v937
      %v3208 = vpop.f32.mrf.mxu0
      %v3209 = vadd.f32 %v3160, %v3208
      %v3210 = vpop.f32.mrf.mxu0
      %v3211 = vadd.f32 %v3162, %v3210
      %3212 = vmatmul.bf16.gmra.mxu0 %v943
      %v3213 = vpop.f32.mrf.mxu0
      %v3214 = vadd.f32 %v3165, %v3213
      %v3215 = vpop.f32.mrf.mxu0
      %v3216 = vadd.f32 %v3167, %v3215
      %3217 = vdwg.mxu0
      %3218 = vmatpush.bf16.msra.mxu0 %v2094
      %3219 = vmatpush.bf16.msra.mxu0 %v2088
      %3220 = vmatpush.bf16.msra.mxu0 %v2082
      %3221 = vmatpush.bf16.msra.mxu0 %v2076
      %3222 = vmatpush.bf16.msra.mxu0 %v2070
      %3223 = vmatpush.bf16.msra.mxu0 %v2064
      %3224 = vmatpush.bf16.msra.mxu0 %v2058
      %3225 = vmatpush.bf16.msra.mxu0 %v2052
      %3226 = vmatmul.bf16.gmra.mxu0 %v902
      %v3227 = vpop.f32.mrf.mxu0
      %v3228 = vadd.f32 %v3179, %v3227
      %v3229 = vpop.f32.mrf.mxu0
      %v3230 = vadd.f32 %v3181, %v3229
      %3231 = vmatmul.bf16.gmra.mxu0 %v908
      %v3232 = vpop.f32.mrf.mxu0
      %v3233 = vadd.f32 %v3184, %v3232
      %v3234 = vpop.f32.mrf.mxu0
      %v3235 = vadd.f32 %v3186, %v3234
      %3236 = vmatmul.bf16.gmra.mxu0 %v914
      %v3237 = vpop.f32.mrf.mxu0
      %v3238 = vadd.f32 %v3189, %v3237
      %v3239 = vpop.f32.mrf.mxu0
      %v3240 = vadd.f32 %v3191, %v3239
      %3241 = vmatmul.bf16.gmra.mxu0 %v920
      %v3242 = vpop.f32.mrf.mxu0
      %v3243 = vadd.f32 %v3194, %v3242
      %v3244 = vpop.f32.mrf.mxu0
      %v3245 = vadd.f32 %v3196, %v3244
      %3246 = vmatmul.bf16.gmra.mxu0 %v926
      %v3247 = vpop.f32.mrf.mxu0
      %v3248 = vadd.f32 %v3199, %v3247
      %v3249 = vpop.f32.mrf.mxu0
      %v3250 = vadd.f32 %v3201, %v3249
      %3251 = vmatmul.bf16.gmra.mxu0 %v932
      %v3252 = vpop.f32.mrf.mxu0
      %v3253 = vadd.f32 %v3204, %v3252
      %v3254 = vpop.f32.mrf.mxu0
      %v3255 = vadd.f32 %v3206, %v3254
      %3256 = vmatmul.bf16.gmra.mxu0 %v938
      %v3257 = vpop.f32.mrf.mxu0
      %v3258 = vadd.f32 %v3209, %v3257
      %v3259 = vpop.f32.mrf.mxu0
      %v3260 = vadd.f32 %v3211, %v3259
      %3261 = vmatmul.bf16.gmra.mxu0 %v944
      %v3262 = vpop.f32.mrf.mxu0
      %v3263 = vadd.f32 %v3214, %v3262
      %v3264 = vpop.f32.mrf.mxu0
      %v3265 = vadd.f32 %v3216, %v3264
      %3266 = vdwg.mxu0
      %3267 = vmatpush.bf16.msra.mxu0 %v2142
      %3268 = vmatpush.bf16.msra.mxu0 %v2136
      %3269 = vmatpush.bf16.msra.mxu0 %v2130
      %3270 = vmatpush.bf16.msra.mxu0 %v2124
      %3271 = vmatpush.bf16.msra.mxu0 %v2118
      %3272 = vmatpush.bf16.msra.mxu0 %v2112
      %3273 = vmatpush.bf16.msra.mxu0 %v2106
      %3274 = vmatpush.bf16.msra.mxu0 %v2100
      %3275 = vmatmul.bf16.gmra.mxu0 %v903
      %v3276 = vpop.f32.mrf.mxu0
      %v3277 = vadd.f32 %v3228, %v3276
      %v3278 = vpop.f32.mrf.mxu0
      %v3279 = vadd.f32 %v3230, %v3278
      %3280 = vmatmul.bf16.gmra.mxu0 %v909
      %v3281 = vpop.f32.mrf.mxu0
      %v3282 = vadd.f32 %v3233, %v3281
      %v3283 = vpop.f32.mrf.mxu0
      %v3284 = vadd.f32 %v3235, %v3283
      %3285 = vmatmul.bf16.gmra.mxu0 %v915
      %v3286 = vpop.f32.mrf.mxu0
      %v3287 = vadd.f32 %v3238, %v3286
      %v3288 = vpop.f32.mrf.mxu0
      %v3289 = vadd.f32 %v3240, %v3288
      %3290 = vmatmul.bf16.gmra.mxu0 %v921
      %v3291 = vpop.f32.mrf.mxu0
      %v3292 = vadd.f32 %v3243, %v3291
      %v3293 = vpop.f32.mrf.mxu0
      %v3294 = vadd.f32 %v3245, %v3293
      %3295 = vmatmul.bf16.gmra.mxu0 %v927
      %v3296 = vpop.f32.mrf.mxu0
      %v3297 = vadd.f32 %v3248, %v3296
      %v3298 = vpop.f32.mrf.mxu0
      %v3299 = vadd.f32 %v3250, %v3298
      %3300 = vmatmul.bf16.gmra.mxu0 %v933
      %v3301 = vpop.f32.mrf.mxu0
      %v3302 = vadd.f32 %v3253, %v3301
      %v3303 = vpop.f32.mrf.mxu0
      %v3304 = vadd.f32 %v3255, %v3303
      %3305 = vmatmul.bf16.gmra.mxu0 %v939
      %v3306 = vpop.f32.mrf.mxu0
      %v3307 = vadd.f32 %v3258, %v3306
      %v3308 = vpop.f32.mrf.mxu0
      %v3309 = vadd.f32 %v3260, %v3308
      %3310 = vmatmul.bf16.gmra.mxu0 %v945
      %v3311 = vpop.f32.mrf.mxu0
      %v3312 = vadd.f32 %v3263, %v3311
      %v3313 = vpop.f32.mrf.mxu0
      %v3314 = vadd.f32 %v3265, %v3313
      %3315 = vdwg.mxu0
      %3316 = vmatpush.bf16.msra.mxu0 %v1903
      %3317 = vmatpush.bf16.msra.mxu0 %v1897
      %3318 = vmatpush.bf16.msra.mxu0 %v1891
      %3319 = vmatpush.bf16.msra.mxu0 %v1885
      %3320 = vmatpush.bf16.msra.mxu0 %v1879
      %3321 = vmatpush.bf16.msra.mxu0 %v1873
      %3322 = vmatpush.bf16.msra.mxu0 %v1867
      %3323 = vmatpush.bf16.msra.mxu0 %v1861
      %3324 = vmatmul.bf16.gmra.mxu0 %v898
      %v3325 = vpop.f32.mrf.mxu0
      %v3326 = vadd.f32 0.0, %v3325
      %v3327 = vpop.f32.mrf.mxu0
      %v3328 = vadd.f32 0.0, %v3327
      %3329 = vmatmul.bf16.gmra.mxu0 %v904
      %v3330 = vpop.f32.mrf.mxu0
      %v3331 = vadd.f32 0.0, %v3330
      %v3332 = vpop.f32.mrf.mxu0
      %v3333 = vadd.f32 0.0, %v3332
      %3334 = vmatmul.bf16.gmra.mxu0 %v910
      %v3335 = vpop.f32.mrf.mxu0
      %v3336 = vadd.f32 0.0, %v3335
      %v3337 = vpop.f32.mrf.mxu0
      %v3338 = vadd.f32 0.0, %v3337
      %3339 = vmatmul.bf16.gmra.mxu0 %v916
      %v3340 = vpop.f32.mrf.mxu0
      %v3341 = vadd.f32 0.0, %v3340
      %v3342 = vpop.f32.mrf.mxu0
      %v3343 = vadd.f32 0.0, %v3342
      %3344 = vmatmul.bf16.gmra.mxu0 %v922
      %v3345 = vpop.f32.mrf.mxu0
      %v3346 = vadd.f32 0.0, %v3345
      %v3347 = vpop.f32.mrf.mxu0
      %v3348 = vadd.f32 0.0, %v3347
      %3349 = vmatmul.bf16.gmra.mxu0 %v928
      %v3350 = vpop.f32.mrf.mxu0
      %v3351 = vadd.f32 0.0, %v3350
      %v3352 = vpop.f32.mrf.mxu0
      %v3353 = vadd.f32 0.0, %v3352
      %3354 = vmatmul.bf16.gmra.mxu0 %v934
      %v3355 = vpop.f32.mrf.mxu0
      %v3356 = vadd.f32 0.0, %v3355
      %v3357 = vpop.f32.mrf.mxu0
      %v3358 = vadd.f32 0.0, %v3357
      %3359 = vmatmul.bf16.gmra.mxu0 %v940
      %v3360 = vpop.f32.mrf.mxu0
      %v3361 = vadd.f32 0.0, %v3360
      %v3362 = vpop.f32.mrf.mxu0
      %v3363 = vadd.f32 0.0, %v3362
      %3364 = vdwg.mxu0
      %3365 = vmatpush.bf16.msra.mxu0 %v1951
      %3366 = vmatpush.bf16.msra.mxu0 %v1945
      %3367 = vmatpush.bf16.msra.mxu0 %v1939
      %3368 = vmatpush.bf16.msra.mxu0 %v1933
      %3369 = vmatpush.bf16.msra.mxu0 %v1927
      %3370 = vmatpush.bf16.msra.mxu0 %v1921
      %3371 = vmatpush.bf16.msra.mxu0 %v1915
      %3372 = vmatpush.bf16.msra.mxu0 %v1909
      %3373 = vmatmul.bf16.gmra.mxu0 %v899
      %v3374 = vpop.f32.mrf.mxu0
      %v3375 = vadd.f32 %v3326, %v3374
      %v3376 = vpop.f32.mrf.mxu0
      %v3377 = vadd.f32 %v3328, %v3376
      %3378 = vmatmul.bf16.gmra.mxu0 %v905
      %v3379 = vpop.f32.mrf.mxu0
      %v3380 = vadd.f32 %v3331, %v3379
      %v3381 = vpop.f32.mrf.mxu0
      %v3382 = vadd.f32 %v3333, %v3381
      %3383 = vmatmul.bf16.gmra.mxu0 %v911
      %v3384 = vpop.f32.mrf.mxu0
      %v3385 = vadd.f32 %v3336, %v3384
      %v3386 = vpop.f32.mrf.mxu0
      %v3387 = vadd.f32 %v3338, %v3386
      %3388 = vmatmul.bf16.gmra.mxu0 %v917
      %v3389 = vpop.f32.mrf.mxu0
      %v3390 = vadd.f32 %v3341, %v3389
      %v3391 = vpop.f32.mrf.mxu0
      %v3392 = vadd.f32 %v3343, %v3391
      %3393 = vmatmul.bf16.gmra.mxu0 %v923
      %v3394 = vpop.f32.mrf.mxu0
      %v3395 = vadd.f32 %v3346, %v3394
      %v3396 = vpop.f32.mrf.mxu0
      %v3397 = vadd.f32 %v3348, %v3396
      %3398 = vmatmul.bf16.gmra.mxu0 %v929
      %v3399 = vpop.f32.mrf.mxu0
      %v3400 = vadd.f32 %v3351, %v3399
      %v3401 = vpop.f32.mrf.mxu0
      %v3402 = vadd.f32 %v3353, %v3401
      %3403 = vmatmul.bf16.gmra.mxu0 %v935
      %v3404 = vpop.f32.mrf.mxu0
      %v3405 = vadd.f32 %v3356, %v3404
      %v3406 = vpop.f32.mrf.mxu0
      %v3407 = vadd.f32 %v3358, %v3406
      %3408 = vmatmul.bf16.gmra.mxu0 %v941
      %v3409 = vpop.f32.mrf.mxu0
      %v3410 = vadd.f32 %v3361, %v3409
      %v3411 = vpop.f32.mrf.mxu0
      %v3412 = vadd.f32 %v3363, %v3411
      %3413 = vdwg.mxu0
      %3414 = vmatpush.bf16.msra.mxu0 %v1999
      %3415 = vmatpush.bf16.msra.mxu0 %v1993
      %3416 = vmatpush.bf16.msra.mxu0 %v1987
      %3417 = vmatpush.bf16.msra.mxu0 %v1981
      %3418 = vmatpush.bf16.msra.mxu0 %v1975
      %3419 = vmatpush.bf16.msra.mxu0 %v1969
      %3420 = vmatpush.bf16.msra.mxu0 %v1963
      %3421 = vmatpush.bf16.msra.mxu0 %v1957
      %3422 = vmatmul.bf16.gmra.mxu0 %v900
      %v3423 = vpop.f32.mrf.mxu0
      %v3424 = vadd.f32 %v3375, %v3423
      %v3425 = vpop.f32.mrf.mxu0
      %v3426 = vadd.f32 %v3377, %v3425
      %3427 = vmatmul.bf16.gmra.mxu0 %v906
      %v3428 = vpop.f32.mrf.mxu0
      %v3429 = vadd.f32 %v3380, %v3428
      %v3430 = vpop.f32.mrf.mxu0
      %v3431 = vadd.f32 %v3382, %v3430
      %3432 = vmatmul.bf16.gmra.mxu0 %v912
      %v3433 = vpop.f32.mrf.mxu0
      %v3434 = vadd.f32 %v3385, %v3433
      %v3435 = vpop.f32.mrf.mxu0
      %v3436 = vadd.f32 %v3387, %v3435
      %3437 = vmatmul.bf16.gmra.mxu0 %v918
      %v3438 = vpop.f32.mrf.mxu0
      %v3439 = vadd.f32 %v3390, %v3438
      %v3440 = vpop.f32.mrf.mxu0
      %v3441 = vadd.f32 %v3392, %v3440
      %3442 = vmatmul.bf16.gmra.mxu0 %v924
      %v3443 = vpop.f32.mrf.mxu0
      %v3444 = vadd.f32 %v3395, %v3443
      %v3445 = vpop.f32.mrf.mxu0
      %v3446 = vadd.f32 %v3397, %v3445
      %3447 = vmatmul.bf16.gmra.mxu0 %v930
      %v3448 = vpop.f32.mrf.mxu0
      %v3449 = vadd.f32 %v3400, %v3448
      %v3450 = vpop.f32.mrf.mxu0
      %v3451 = vadd.f32 %v3402, %v3450
      %3452 = vmatmul.bf16.gmra.mxu0 %v936
      %v3453 = vpop.f32.mrf.mxu0
      %v3454 = vadd.f32 %v3405, %v3453
      %v3455 = vpop.f32.mrf.mxu0
      %v3456 = vadd.f32 %v3407, %v3455
      %3457 = vmatmul.bf16.gmra.mxu0 %v942
      %v3458 = vpop.f32.mrf.mxu0
      %v3459 = vadd.f32 %v3410, %v3458
      %v3460 = vpop.f32.mrf.mxu0
      %v3461 = vadd.f32 %v3412, %v3460
      %3462 = vdwg.mxu0
      %3463 = vmatpush.bf16.msra.mxu0 %v2047
      %3464 = vmatpush.bf16.msra.mxu0 %v2041
      %3465 = vmatpush.bf16.msra.mxu0 %v2035
      %3466 = vmatpush.bf16.msra.mxu0 %v2029
      %3467 = vmatpush.bf16.msra.mxu0 %v2023
      %3468 = vmatpush.bf16.msra.mxu0 %v2017
      %3469 = vmatpush.bf16.msra.mxu0 %v2011
      %3470 = vmatpush.bf16.msra.mxu0 %v2005
      %3471 = vmatmul.bf16.gmra.mxu0 %v901
      %v3472 = vpop.f32.mrf.mxu0
      %v3473 = vadd.f32 %v3424, %v3472
      %v3474 = vpop.f32.mrf.mxu0
      %v3475 = vadd.f32 %v3426, %v3474
      %3476 = vmatmul.bf16.gmra.mxu0 %v907
      %v3477 = vpop.f32.mrf.mxu0
      %v3478 = vadd.f32 %v3429, %v3477
      %v3479 = vpop.f32.mrf.mxu0
      %v3480 = vadd.f32 %v3431, %v3479
      %3481 = vmatmul.bf16.gmra.mxu0 %v913
      %v3482 = vpop.f32.mrf.mxu0
      %v3483 = vadd.f32 %v3434, %v3482
      %v3484 = vpop.f32.mrf.mxu0
      %v3485 = vadd.f32 %v3436, %v3484
      %3486 = vmatmul.bf16.gmra.mxu0 %v919
      %v3487 = vpop.f32.mrf.mxu0
      %v3488 = vadd.f32 %v3439, %v3487
      %v3489 = vpop.f32.mrf.mxu0
      %v3490 = vadd.f32 %v3441, %v3489
      %3491 = vmatmul.bf16.gmra.mxu0 %v925
      %v3492 = vpop.f32.mrf.mxu0
      %v3493 = vadd.f32 %v3444, %v3492
      %v3494 = vpop.f32.mrf.mxu0
      %v3495 = vadd.f32 %v3446, %v3494
      %3496 = vmatmul.bf16.gmra.mxu0 %v931
      %v3497 = vpop.f32.mrf.mxu0
      %v3498 = vadd.f32 %v3449, %v3497
      %v3499 = vpop.f32.mrf.mxu0
      %v3500 = vadd.f32 %v3451, %v3499
      %3501 = vmatmul.bf16.gmra.mxu0 %v937
      %v3502 = vpop.f32.mrf.mxu0
      %v3503 = vadd.f32 %v3454, %v3502
      %v3504 = vpop.f32.mrf.mxu0
      %v3505 = vadd.f32 %v3456, %v3504
      %3506 = vmatmul.bf16.gmra.mxu0 %v943
      %v3507 = vpop.f32.mrf.mxu0
      %v3508 = vadd.f32 %v3459, %v3507
      %v3509 = vpop.f32.mrf.mxu0
      %v3510 = vadd.f32 %v3461, %v3509
      %3511 = vdwg.mxu0
      %3512 = vmatpush.bf16.msra.mxu0 %v2095
      %3513 = vmatpush.bf16.msra.mxu0 %v2089
      %3514 = vmatpush.bf16.msra.mxu0 %v2083
      %3515 = vmatpush.bf16.msra.mxu0 %v2077
      %3516 = vmatpush.bf16.msra.mxu0 %v2071
      %3517 = vmatpush.bf16.msra.mxu0 %v2065
      %3518 = vmatpush.bf16.msra.mxu0 %v2059
      %3519 = vmatpush.bf16.msra.mxu0 %v2053
      %3520 = vmatmul.bf16.gmra.mxu0 %v902
      %v3521 = vpop.f32.mrf.mxu0
      %v3522 = vadd.f32 %v3473, %v3521
      %v3523 = vpop.f32.mrf.mxu0
      %v3524 = vadd.f32 %v3475, %v3523
      %3525 = vmatmul.bf16.gmra.mxu0 %v908
      %v3526 = vpop.f32.mrf.mxu0
      %v3527 = vadd.f32 %v3478, %v3526
      %v3528 = vpop.f32.mrf.mxu0
      %v3529 = vadd.f32 %v3480, %v3528
      %3530 = vmatmul.bf16.gmra.mxu0 %v914
      %v3531 = vpop.f32.mrf.mxu0
      %v3532 = vadd.f32 %v3483, %v3531
      %v3533 = vpop.f32.mrf.mxu0
      %v3534 = vadd.f32 %v3485, %v3533
      %3535 = vmatmul.bf16.gmra.mxu0 %v920
      %v3536 = vpop.f32.mrf.mxu0
      %v3537 = vadd.f32 %v3488, %v3536
      %v3538 = vpop.f32.mrf.mxu0
      %v3539 = vadd.f32 %v3490, %v3538
      %3540 = vmatmul.bf16.gmra.mxu0 %v926
      %v3541 = vpop.f32.mrf.mxu0
      %v3542 = vadd.f32 %v3493, %v3541
      %v3543 = vpop.f32.mrf.mxu0
      %v3544 = vadd.f32 %v3495, %v3543
      %3545 = vmatmul.bf16.gmra.mxu0 %v932
      %v3546 = vpop.f32.mrf.mxu0
      %v3547 = vadd.f32 %v3498, %v3546
      %v3548 = vpop.f32.mrf.mxu0
      %v3549 = vadd.f32 %v3500, %v3548
      %3550 = vmatmul.bf16.gmra.mxu0 %v938
      %v3551 = vpop.f32.mrf.mxu0
      %v3552 = vadd.f32 %v3503, %v3551
      %v3553 = vpop.f32.mrf.mxu0
      %v3554 = vadd.f32 %v3505, %v3553
      %3555 = vmatmul.bf16.gmra.mxu0 %v944
      %v3556 = vpop.f32.mrf.mxu0
      %v3557 = vadd.f32 %v3508, %v3556
      %v3558 = vpop.f32.mrf.mxu0
      %v3559 = vadd.f32 %v3510, %v3558
      %3560 = vdwg.mxu0
      %3561 = vmatpush.bf16.msra.mxu0 %v2143
      %3562 = vmatpush.bf16.msra.mxu0 %v2137
      %3563 = vmatpush.bf16.msra.mxu0 %v2131
      %3564 = vmatpush.bf16.msra.mxu0 %v2125
      %3565 = vmatpush.bf16.msra.mxu0 %v2119
      %3566 = vmatpush.bf16.msra.mxu0 %v2113
      %3567 = vmatpush.bf16.msra.mxu0 %v2107
      %3568 = vmatpush.bf16.msra.mxu0 %v2101
      %3569 = vmatmul.bf16.gmra.mxu0 %v903
      %v3570 = vpop.f32.mrf.mxu0
      %v3571 = vadd.f32 %v3522, %v3570
      %v3572 = vpop.f32.mrf.mxu0
      %v3573 = vadd.f32 %v3524, %v3572
      %3574 = vmatmul.bf16.gmra.mxu0 %v909
      %v3575 = vpop.f32.mrf.mxu0
      %v3576 = vadd.f32 %v3527, %v3575
      %v3577 = vpop.f32.mrf.mxu0
      %v3578 = vadd.f32 %v3529, %v3577
      %3579 = vmatmul.bf16.gmra.mxu0 %v915
      %v3580 = vpop.f32.mrf.mxu0
      %v3581 = vadd.f32 %v3532, %v3580
      %v3582 = vpop.f32.mrf.mxu0
      %v3583 = vadd.f32 %v3534, %v3582
      %3584 = vmatmul.bf16.gmra.mxu0 %v921
      %v3585 = vpop.f32.mrf.mxu0
      %v3586 = vadd.f32 %v3537, %v3585
      %v3587 = vpop.f32.mrf.mxu0
      %v3588 = vadd.f32 %v3539, %v3587
      %3589 = vmatmul.bf16.gmra.mxu0 %v927
      %v3590 = vpop.f32.mrf.mxu0
      %v3591 = vadd.f32 %v3542, %v3590
      %v3592 = vpop.f32.mrf.mxu0
      %v3593 = vadd.f32 %v3544, %v3592
      %3594 = vmatmul.bf16.gmra.mxu0 %v933
      %v3595 = vpop.f32.mrf.mxu0
      %v3596 = vadd.f32 %v3547, %v3595
      %v3597 = vpop.f32.mrf.mxu0
      %v3598 = vadd.f32 %v3549, %v3597
      %3599 = vmatmul.bf16.gmra.mxu0 %v939
      %v3600 = vpop.f32.mrf.mxu0
      %v3601 = vadd.f32 %v3552, %v3600
      %v3602 = vpop.f32.mrf.mxu0
      %v3603 = vadd.f32 %v3554, %v3602
      %3604 = vmatmul.bf16.gmra.mxu0 %v945
      %v3605 = vpop.f32.mrf.mxu0
      %v3606 = vadd.f32 %v3557, %v3605
      %v3607 = vpop.f32.mrf.mxu0
      %v3608 = vadd.f32 %v3559, %v3607
      %3609 = vdwg.mxu0
      %3610 = vmatpush.bf16.msra.mxu0 %v1904
      %3611 = vmatpush.bf16.msra.mxu0 %v1898
      %3612 = vmatpush.bf16.msra.mxu0 %v1892
      %3613 = vmatpush.bf16.msra.mxu0 %v1886
      %3614 = vmatpush.bf16.msra.mxu0 %v1880
      %3615 = vmatpush.bf16.msra.mxu0 %v1874
      %3616 = vmatpush.bf16.msra.mxu0 %v1868
      %3617 = vmatpush.bf16.msra.mxu0 %v1862
      %3618 = vmatmul.bf16.gmra.mxu0 %v898
      %v3619 = vpop.f32.mrf.mxu0
      %v3620 = vadd.f32 0.0, %v3619
      %v3621 = vpop.f32.mrf.mxu0
      %v3622 = vadd.f32 0.0, %v3621
      %3623 = vmatmul.bf16.gmra.mxu0 %v904
      %v3624 = vpop.f32.mrf.mxu0
      %v3625 = vadd.f32 0.0, %v3624
      %v3626 = vpop.f32.mrf.mxu0
      %v3627 = vadd.f32 0.0, %v3626
      %3628 = vmatmul.bf16.gmra.mxu0 %v910
      %v3629 = vpop.f32.mrf.mxu0
      %v3630 = vadd.f32 0.0, %v3629
      %v3631 = vpop.f32.mrf.mxu0
      %v3632 = vadd.f32 0.0, %v3631
      %3633 = vmatmul.bf16.gmra.mxu0 %v916
      %v3634 = vpop.f32.mrf.mxu0
      %v3635 = vadd.f32 0.0, %v3634
      %v3636 = vpop.f32.mrf.mxu0
      %v3637 = vadd.f32 0.0, %v3636
      %3638 = vmatmul.bf16.gmra.mxu0 %v922
      %v3639 = vpop.f32.mrf.mxu0
      %v3640 = vadd.f32 0.0, %v3639
      %v3641 = vpop.f32.mrf.mxu0
      %v3642 = vadd.f32 0.0, %v3641
      %3643 = vmatmul.bf16.gmra.mxu0 %v928
      %v3644 = vpop.f32.mrf.mxu0
      %v3645 = vadd.f32 0.0, %v3644
      %v3646 = vpop.f32.mrf.mxu0
      %v3647 = vadd.f32 0.0, %v3646
      %3648 = vmatmul.bf16.gmra.mxu0 %v934
      %v3649 = vpop.f32.mrf.mxu0
      %v3650 = vadd.f32 0.0, %v3649
      %v3651 = vpop.f32.mrf.mxu0
      %v3652 = vadd.f32 0.0, %v3651
      %3653 = vmatmul.bf16.gmra.mxu0 %v940
      %v3654 = vpop.f32.mrf.mxu0
      %v3655 = vadd.f32 0.0, %v3654
      %v3656 = vpop.f32.mrf.mxu0
      %v3657 = vadd.f32 0.0, %v3656
      %3658 = vdwg.mxu0
      %3659 = vmatpush.bf16.msra.mxu0 %v1952
      %3660 = vmatpush.bf16.msra.mxu0 %v1946
      %3661 = vmatpush.bf16.msra.mxu0 %v1940
      %3662 = vmatpush.bf16.msra.mxu0 %v1934
      %3663 = vmatpush.bf16.msra.mxu0 %v1928
      %3664 = vmatpush.bf16.msra.mxu0 %v1922
      %3665 = vmatpush.bf16.msra.mxu0 %v1916
      %3666 = vmatpush.bf16.msra.mxu0 %v1910
      %3667 = vmatmul.bf16.gmra.mxu0 %v899
      %v3668 = vpop.f32.mrf.mxu0
      %v3669 = vadd.f32 %v3620, %v3668
      %v3670 = vpop.f32.mrf.mxu0
      %v3671 = vadd.f32 %v3622, %v3670
      %3672 = vmatmul.bf16.gmra.mxu0 %v905
      %v3673 = vpop.f32.mrf.mxu0
      %v3674 = vadd.f32 %v3625, %v3673
      %v3675 = vpop.f32.mrf.mxu0
      %v3676 = vadd.f32 %v3627, %v3675
      %3677 = vmatmul.bf16.gmra.mxu0 %v911
      %v3678 = vpop.f32.mrf.mxu0
      %v3679 = vadd.f32 %v3630, %v3678
      %v3680 = vpop.f32.mrf.mxu0
      %v3681 = vadd.f32 %v3632, %v3680
      %3682 = vmatmul.bf16.gmra.mxu0 %v917
      %v3683 = vpop.f32.mrf.mxu0
      %v3684 = vadd.f32 %v3635, %v3683
      %v3685 = vpop.f32.mrf.mxu0
      %v3686 = vadd.f32 %v3637, %v3685
      %3687 = vmatmul.bf16.gmra.mxu0 %v923
      %v3688 = vpop.f32.mrf.mxu0
      %v3689 = vadd.f32 %v3640, %v3688
      %v3690 = vpop.f32.mrf.mxu0
      %v3691 = vadd.f32 %v3642, %v3690
      %3692 = vmatmul.bf16.gmra.mxu0 %v929
      %v3693 = vpop.f32.mrf.mxu0
      %v3694 = vadd.f32 %v3645, %v3693
      %v3695 = vpop.f32.mrf.mxu0
      %v3696 = vadd.f32 %v3647, %v3695
      %3697 = vmatmul.bf16.gmra.mxu0 %v935
      %v3698 = vpop.f32.mrf.mxu0
      %v3699 = vadd.f32 %v3650, %v3698
      %v3700 = vpop.f32.mrf.mxu0
      %v3701 = vadd.f32 %v3652, %v3700
      %3702 = vmatmul.bf16.gmra.mxu0 %v941
      %v3703 = vpop.f32.mrf.mxu0
      %v3704 = vadd.f32 %v3655, %v3703
      %v3705 = vpop.f32.mrf.mxu0
      %v3706 = vadd.f32 %v3657, %v3705
      %3707 = vdwg.mxu0
      %3708 = vmatpush.bf16.msra.mxu0 %v2000
      %3709 = vmatpush.bf16.msra.mxu0 %v1994
      %3710 = vmatpush.bf16.msra.mxu0 %v1988
      %3711 = vmatpush.bf16.msra.mxu0 %v1982
      %3712 = vmatpush.bf16.msra.mxu0 %v1976
      %3713 = vmatpush.bf16.msra.mxu0 %v1970
      %3714 = vmatpush.bf16.msra.mxu0 %v1964
      %3715 = vmatpush.bf16.msra.mxu0 %v1958
      %3716 = vmatmul.bf16.gmra.mxu0 %v900
      %v3717 = vpop.f32.mrf.mxu0
      %v3718 = vadd.f32 %v3669, %v3717
      %v3719 = vpop.f32.mrf.mxu0
      %v3720 = vadd.f32 %v3671, %v3719
      %3721 = vmatmul.bf16.gmra.mxu0 %v906
      %v3722 = vpop.f32.mrf.mxu0
      %v3723 = vadd.f32 %v3674, %v3722
      %v3724 = vpop.f32.mrf.mxu0
      %v3725 = vadd.f32 %v3676, %v3724
      %3726 = vmatmul.bf16.gmra.mxu0 %v912
      %v3727 = vpop.f32.mrf.mxu0
      %v3728 = vadd.f32 %v3679, %v3727
      %v3729 = vpop.f32.mrf.mxu0
      %v3730 = vadd.f32 %v3681, %v3729
      %3731 = vmatmul.bf16.gmra.mxu0 %v918
      %v3732 = vpop.f32.mrf.mxu0
      %v3733 = vadd.f32 %v3684, %v3732
      %v3734 = vpop.f32.mrf.mxu0
      %v3735 = vadd.f32 %v3686, %v3734
      %3736 = vmatmul.bf16.gmra.mxu0 %v924
      %v3737 = vpop.f32.mrf.mxu0
      %v3738 = vadd.f32 %v3689, %v3737
      %v3739 = vpop.f32.mrf.mxu0
      %v3740 = vadd.f32 %v3691, %v3739
      %3741 = vmatmul.bf16.gmra.mxu0 %v930
      %v3742 = vpop.f32.mrf.mxu0
      %v3743 = vadd.f32 %v3694, %v3742
      %v3744 = vpop.f32.mrf.mxu0
      %v3745 = vadd.f32 %v3696, %v3744
      %3746 = vmatmul.bf16.gmra.mxu0 %v936
      %v3747 = vpop.f32.mrf.mxu0
      %v3748 = vadd.f32 %v3699, %v3747
      %v3749 = vpop.f32.mrf.mxu0
      %v3750 = vadd.f32 %v3701, %v3749
      %3751 = vmatmul.bf16.gmra.mxu0 %v942
      %v3752 = vpop.f32.mrf.mxu0
      %v3753 = vadd.f32 %v3704, %v3752
      %v3754 = vpop.f32.mrf.mxu0
      %v3755 = vadd.f32 %v3706, %v3754
      %3756 = vdwg.mxu0
      %3757 = vmatpush.bf16.msra.mxu0 %v2048
      %3758 = vmatpush.bf16.msra.mxu0 %v2042
      %3759 = vmatpush.bf16.msra.mxu0 %v2036
      %3760 = vmatpush.bf16.msra.mxu0 %v2030
      %3761 = vmatpush.bf16.msra.mxu0 %v2024
      %3762 = vmatpush.bf16.msra.mxu0 %v2018
      %3763 = vmatpush.bf16.msra.mxu0 %v2012
      %3764 = vmatpush.bf16.msra.mxu0 %v2006
      %3765 = vmatmul.bf16.gmra.mxu0 %v901
      %v3766 = vpop.f32.mrf.mxu0
      %v3767 = vadd.f32 %v3718, %v3766
      %v3768 = vpop.f32.mrf.mxu0
      %v3769 = vadd.f32 %v3720, %v3768
      %3770 = vmatmul.bf16.gmra.mxu0 %v907
      %v3771 = vpop.f32.mrf.mxu0
      %v3772 = vadd.f32 %v3723, %v3771
      %v3773 = vpop.f32.mrf.mxu0
      %v3774 = vadd.f32 %v3725, %v3773
      %3775 = vmatmul.bf16.gmra.mxu0 %v913
      %v3776 = vpop.f32.mrf.mxu0
      %v3777 = vadd.f32 %v3728, %v3776
      %v3778 = vpop.f32.mrf.mxu0
      %v3779 = vadd.f32 %v3730, %v3778
      %3780 = vmatmul.bf16.gmra.mxu0 %v919
      %v3781 = vpop.f32.mrf.mxu0
      %v3782 = vadd.f32 %v3733, %v3781
      %v3783 = vpop.f32.mrf.mxu0
      %v3784 = vadd.f32 %v3735, %v3783
      %3785 = vmatmul.bf16.gmra.mxu0 %v925
      %v3786 = vpop.f32.mrf.mxu0
      %v3787 = vadd.f32 %v3738, %v3786
      %v3788 = vpop.f32.mrf.mxu0
      %v3789 = vadd.f32 %v3740, %v3788
      %3790 = vmatmul.bf16.gmra.mxu0 %v931
      %v3791 = vpop.f32.mrf.mxu0
      %v3792 = vadd.f32 %v3743, %v3791
      %v3793 = vpop.f32.mrf.mxu0
      %v3794 = vadd.f32 %v3745, %v3793
      %3795 = vmatmul.bf16.gmra.mxu0 %v937
      %v3796 = vpop.f32.mrf.mxu0
      %v3797 = vadd.f32 %v3748, %v3796
      %v3798 = vpop.f32.mrf.mxu0
      %v3799 = vadd.f32 %v3750, %v3798
      %3800 = vmatmul.bf16.gmra.mxu0 %v943
      %v3801 = vpop.f32.mrf.mxu0
      %v3802 = vadd.f32 %v3753, %v3801
      %v3803 = vpop.f32.mrf.mxu0
      %v3804 = vadd.f32 %v3755, %v3803
      %3805 = vdwg.mxu0
      %3806 = vmatpush.bf16.msra.mxu0 %v2096
      %3807 = vmatpush.bf16.msra.mxu0 %v2090
      %3808 = vmatpush.bf16.msra.mxu0 %v2084
      %3809 = vmatpush.bf16.msra.mxu0 %v2078
      %3810 = vmatpush.bf16.msra.mxu0 %v2072
      %3811 = vmatpush.bf16.msra.mxu0 %v2066
      %3812 = vmatpush.bf16.msra.mxu0 %v2060
      %3813 = vmatpush.bf16.msra.mxu0 %v2054
      %3814 = vmatmul.bf16.gmra.mxu0 %v902
      %v3815 = vpop.f32.mrf.mxu0
      %v3816 = vadd.f32 %v3767, %v3815
      %v3817 = vpop.f32.mrf.mxu0
      %v3818 = vadd.f32 %v3769, %v3817
      %3819 = vmatmul.bf16.gmra.mxu0 %v908
      %v3820 = vpop.f32.mrf.mxu0
      %v3821 = vadd.f32 %v3772, %v3820
      %v3822 = vpop.f32.mrf.mxu0
      %v3823 = vadd.f32 %v3774, %v3822
      %3824 = vmatmul.bf16.gmra.mxu0 %v914
      %v3825 = vpop.f32.mrf.mxu0
      %v3826 = vadd.f32 %v3777, %v3825
      %v3827 = vpop.f32.mrf.mxu0
      %v3828 = vadd.f32 %v3779, %v3827
      %3829 = vmatmul.bf16.gmra.mxu0 %v920
      %v3830 = vpop.f32.mrf.mxu0
      %v3831 = vadd.f32 %v3782, %v3830
      %v3832 = vpop.f32.mrf.mxu0
      %v3833 = vadd.f32 %v3784, %v3832
      %3834 = vmatmul.bf16.gmra.mxu0 %v926
      %v3835 = vpop.f32.mrf.mxu0
      %v3836 = vadd.f32 %v3787, %v3835
      %v3837 = vpop.f32.mrf.mxu0
      %v3838 = vadd.f32 %v3789, %v3837
      %3839 = vmatmul.bf16.gmra.mxu0 %v932
      %v3840 = vpop.f32.mrf.mxu0
      %v3841 = vadd.f32 %v3792, %v3840
      %v3842 = vpop.f32.mrf.mxu0
      %v3843 = vadd.f32 %v3794, %v3842
      %3844 = vmatmul.bf16.gmra.mxu0 %v938
      %v3845 = vpop.f32.mrf.mxu0
      %v3846 = vadd.f32 %v3797, %v3845
      %v3847 = vpop.f32.mrf.mxu0
      %v3848 = vadd.f32 %v3799, %v3847
      %3849 = vmatmul.bf16.gmra.mxu0 %v944
      %v3850 = vpop.f32.mrf.mxu0
      %v3851 = vadd.f32 %v3802, %v3850
      %v3852 = vpop.f32.mrf.mxu0
      %v3853 = vadd.f32 %v3804, %v3852
      %3854 = vdwg.mxu0
      %3855 = vmatpush.bf16.msra.mxu0 %v2144
      %3856 = vmatpush.bf16.msra.mxu0 %v2138
      %3857 = vmatpush.bf16.msra.mxu0 %v2132
      %3858 = vmatpush.bf16.msra.mxu0 %v2126
      %3859 = vmatpush.bf16.msra.mxu0 %v2120
      %3860 = vmatpush.bf16.msra.mxu0 %v2114
      %3861 = vmatpush.bf16.msra.mxu0 %v2108
      %3862 = vmatpush.bf16.msra.mxu0 %v2102
      %3863 = vmatmul.bf16.gmra.mxu0 %v903
      %v3864 = vpop.f32.mrf.mxu0
      %v3865 = vadd.f32 %v3816, %v3864
      %v3866 = vpop.f32.mrf.mxu0
      %v3867 = vadd.f32 %v3818, %v3866
      %3868 = vmatmul.bf16.gmra.mxu0 %v909
      %v3869 = vpop.f32.mrf.mxu0
      %v3870 = vadd.f32 %v3821, %v3869
      %v3871 = vpop.f32.mrf.mxu0
      %v3872 = vadd.f32 %v3823, %v3871
      %3873 = vmatmul.bf16.gmra.mxu0 %v915
      %v3874 = vpop.f32.mrf.mxu0
      %v3875 = vadd.f32 %v3826, %v3874
      %v3876 = vpop.f32.mrf.mxu0
      %v3877 = vadd.f32 %v3828, %v3876
      %3878 = vmatmul.bf16.gmra.mxu0 %v921
      %v3879 = vpop.f32.mrf.mxu0
      %v3880 = vadd.f32 %v3831, %v3879
      %v3881 = vpop.f32.mrf.mxu0
      %v3882 = vadd.f32 %v3833, %v3881
      %3883 = vmatmul.bf16.gmra.mxu0 %v927
      %v3884 = vpop.f32.mrf.mxu0
      %v3885 = vadd.f32 %v3836, %v3884
      %v3886 = vpop.f32.mrf.mxu0
      %v3887 = vadd.f32 %v3838, %v3886
      %3888 = vmatmul.bf16.gmra.mxu0 %v933
      %v3889 = vpop.f32.mrf.mxu0
      %v3890 = vadd.f32 %v3841, %v3889
      %v3891 = vpop.f32.mrf.mxu0
      %v3892 = vadd.f32 %v3843, %v3891
      %3893 = vmatmul.bf16.gmra.mxu0 %v939
      %v3894 = vpop.f32.mrf.mxu0
      %v3895 = vadd.f32 %v3846, %v3894
      %v3896 = vpop.f32.mrf.mxu0
      %v3897 = vadd.f32 %v3848, %v3896
      %3898 = vmatmul.bf16.gmra.mxu0 %v945
      %v3899 = vpop.f32.mrf.mxu0
      %v3900 = vadd.f32 %v3851, %v3899
      %v3901 = vpop.f32.mrf.mxu0
      %v3902 = vadd.f32 %v3853, %v3901
      %3903 = vdwg.mxu0
      %3904 = vmatpush.bf16.msra.mxu0 %v1905
      %3905 = vmatpush.bf16.msra.mxu0 %v1899
      %3906 = vmatpush.bf16.msra.mxu0 %v1893
      %3907 = vmatpush.bf16.msra.mxu0 %v1887
      %3908 = vmatpush.bf16.msra.mxu0 %v1881
      %3909 = vmatpush.bf16.msra.mxu0 %v1875
      %3910 = vmatpush.bf16.msra.mxu0 %v1869
      %3911 = vmatpush.bf16.msra.mxu0 %v1863
      %3912 = vmatmul.bf16.gmra.mxu0 %v898
      %v3913 = vpop.f32.mrf.mxu0
      %v3914 = vadd.f32 0.0, %v3913
      %v3915 = vpop.f32.mrf.mxu0
      %v3916 = vadd.f32 0.0, %v3915
      %3917 = vmatmul.bf16.gmra.mxu0 %v904
      %v3918 = vpop.f32.mrf.mxu0
      %v3919 = vadd.f32 0.0, %v3918
      %v3920 = vpop.f32.mrf.mxu0
      %v3921 = vadd.f32 0.0, %v3920
      %3922 = vmatmul.bf16.gmra.mxu0 %v910
      %v3923 = vpop.f32.mrf.mxu0
      %v3924 = vadd.f32 0.0, %v3923
      %v3925 = vpop.f32.mrf.mxu0
      %v3926 = vadd.f32 0.0, %v3925
      %3927 = vmatmul.bf16.gmra.mxu0 %v916
      %v3928 = vpop.f32.mrf.mxu0
      %v3929 = vadd.f32 0.0, %v3928
      %v3930 = vpop.f32.mrf.mxu0
      %v3931 = vadd.f32 0.0, %v3930
      %3932 = vmatmul.bf16.gmra.mxu0 %v922
      %v3933 = vpop.f32.mrf.mxu0
      %v3934 = vadd.f32 0.0, %v3933
      %v3935 = vpop.f32.mrf.mxu0
      %v3936 = vadd.f32 0.0, %v3935
      %3937 = vmatmul.bf16.gmra.mxu0 %v928
      %v3938 = vpop.f32.mrf.mxu0
      %v3939 = vadd.f32 0.0, %v3938
      %v3940 = vpop.f32.mrf.mxu0
      %v3941 = vadd.f32 0.0, %v3940
      %3942 = vmatmul.bf16.gmra.mxu0 %v934
      %v3943 = vpop.f32.mrf.mxu0
      %v3944 = vadd.f32 0.0, %v3943
      %v3945 = vpop.f32.mrf.mxu0
      %v3946 = vadd.f32 0.0, %v3945
      %3947 = vmatmul.bf16.gmra.mxu0 %v940
      %v3948 = vpop.f32.mrf.mxu0
      %v3949 = vadd.f32 0.0, %v3948
      %v3950 = vpop.f32.mrf.mxu0
      %v3951 = vadd.f32 0.0, %v3950
      %3952 = vdwg.mxu0
      %3953 = vmatpush.bf16.msra.mxu0 %v1953
      %3954 = vmatpush.bf16.msra.mxu0 %v1947
      %3955 = vmatpush.bf16.msra.mxu0 %v1941
      %3956 = vmatpush.bf16.msra.mxu0 %v1935
      %3957 = vmatpush.bf16.msra.mxu0 %v1929
      %3958 = vmatpush.bf16.msra.mxu0 %v1923
      %3959 = vmatpush.bf16.msra.mxu0 %v1917
      %3960 = vmatpush.bf16.msra.mxu0 %v1911
      %3961 = vmatmul.bf16.gmra.mxu0 %v899
      %v3962 = vpop.f32.mrf.mxu0
      %v3963 = vadd.f32 %v3914, %v3962
      %v3964 = vpop.f32.mrf.mxu0
      %v3965 = vadd.f32 %v3916, %v3964
      %3966 = vmatmul.bf16.gmra.mxu0 %v905
      %v3967 = vpop.f32.mrf.mxu0
      %v3968 = vadd.f32 %v3919, %v3967
      %v3969 = vpop.f32.mrf.mxu0
      %v3970 = vadd.f32 %v3921, %v3969
      %3971 = vmatmul.bf16.gmra.mxu0 %v911
      %v3972 = vpop.f32.mrf.mxu0
      %v3973 = vadd.f32 %v3924, %v3972
      %v3974 = vpop.f32.mrf.mxu0
      %v3975 = vadd.f32 %v3926, %v3974
      %3976 = vmatmul.bf16.gmra.mxu0 %v917
      %v3977 = vpop.f32.mrf.mxu0
      %v3978 = vadd.f32 %v3929, %v3977
      %v3979 = vpop.f32.mrf.mxu0
      %v3980 = vadd.f32 %v3931, %v3979
      %3981 = vmatmul.bf16.gmra.mxu0 %v923
      %v3982 = vpop.f32.mrf.mxu0
      %v3983 = vadd.f32 %v3934, %v3982
      %v3984 = vpop.f32.mrf.mxu0
      %v3985 = vadd.f32 %v3936, %v3984
      %3986 = vmatmul.bf16.gmra.mxu0 %v929
      %v3987 = vpop.f32.mrf.mxu0
      %v3988 = vadd.f32 %v3939, %v3987
      %v3989 = vpop.f32.mrf.mxu0
      %v3990 = vadd.f32 %v3941, %v3989
      %3991 = vmatmul.bf16.gmra.mxu0 %v935
      %v3992 = vpop.f32.mrf.mxu0
      %v3993 = vadd.f32 %v3944, %v3992
      %v3994 = vpop.f32.mrf.mxu0
      %v3995 = vadd.f32 %v3946, %v3994
      %3996 = vmatmul.bf16.gmra.mxu0 %v941
      %v3997 = vpop.f32.mrf.mxu0
      %v3998 = vadd.f32 %v3949, %v3997
      %v3999 = vpop.f32.mrf.mxu0
      %v4000 = vadd.f32 %v3951, %v3999
      %4001 = vdwg.mxu0
      %4002 = vmatpush.bf16.msra.mxu0 %v2001
      %4003 = vmatpush.bf16.msra.mxu0 %v1995
      %4004 = vmatpush.bf16.msra.mxu0 %v1989
      %4005 = vmatpush.bf16.msra.mxu0 %v1983
      %4006 = vmatpush.bf16.msra.mxu0 %v1977
      %4007 = vmatpush.bf16.msra.mxu0 %v1971
      %4008 = vmatpush.bf16.msra.mxu0 %v1965
      %4009 = vmatpush.bf16.msra.mxu0 %v1959
      %4010 = vmatmul.bf16.gmra.mxu0 %v900
      %v4011 = vpop.f32.mrf.mxu0
      %v4012 = vadd.f32 %v3963, %v4011
      %v4013 = vpop.f32.mrf.mxu0
      %v4014 = vadd.f32 %v3965, %v4013
      %4015 = vmatmul.bf16.gmra.mxu0 %v906
      %v4016 = vpop.f32.mrf.mxu0
      %v4017 = vadd.f32 %v3968, %v4016
      %v4018 = vpop.f32.mrf.mxu0
      %v4019 = vadd.f32 %v3970, %v4018
      %4020 = vmatmul.bf16.gmra.mxu0 %v912
      %v4021 = vpop.f32.mrf.mxu0
      %v4022 = vadd.f32 %v3973, %v4021
      %v4023 = vpop.f32.mrf.mxu0
      %v4024 = vadd.f32 %v3975, %v4023
      %4025 = vmatmul.bf16.gmra.mxu0 %v918
      %v4026 = vpop.f32.mrf.mxu0
      %v4027 = vadd.f32 %v3978, %v4026
      %v4028 = vpop.f32.mrf.mxu0
      %v4029 = vadd.f32 %v3980, %v4028
      %4030 = vmatmul.bf16.gmra.mxu0 %v924
      %v4031 = vpop.f32.mrf.mxu0
      %v4032 = vadd.f32 %v3983, %v4031
      %v4033 = vpop.f32.mrf.mxu0
      %v4034 = vadd.f32 %v3985, %v4033
      %4035 = vmatmul.bf16.gmra.mxu0 %v930
      %v4036 = vpop.f32.mrf.mxu0
      %v4037 = vadd.f32 %v3988, %v4036
      %v4038 = vpop.f32.mrf.mxu0
      %v4039 = vadd.f32 %v3990, %v4038
      %4040 = vmatmul.bf16.gmra.mxu0 %v936
      %v4041 = vpop.f32.mrf.mxu0
      %v4042 = vadd.f32 %v3993, %v4041
      %v4043 = vpop.f32.mrf.mxu0
      %v4044 = vadd.f32 %v3995, %v4043
      %4045 = vmatmul.bf16.gmra.mxu0 %v942
      %v4046 = vpop.f32.mrf.mxu0
      %v4047 = vadd.f32 %v3998, %v4046
      %v4048 = vpop.f32.mrf.mxu0
      %v4049 = vadd.f32 %v4000, %v4048
      %4050 = vdwg.mxu0
      %4051 = vmatpush.bf16.msra.mxu0 %v2049
      %4052 = vmatpush.bf16.msra.mxu0 %v2043
      %4053 = vmatpush.bf16.msra.mxu0 %v2037
      %4054 = vmatpush.bf16.msra.mxu0 %v2031
      %4055 = vmatpush.bf16.msra.mxu0 %v2025
      %4056 = vmatpush.bf16.msra.mxu0 %v2019
      %4057 = vmatpush.bf16.msra.mxu0 %v2013
      %4058 = vmatpush.bf16.msra.mxu0 %v2007
      %4059 = vmatmul.bf16.gmra.mxu0 %v901
      %v4060 = vpop.f32.mrf.mxu0
      %v4061 = vadd.f32 %v4012, %v4060
      %v4062 = vpop.f32.mrf.mxu0
      %v4063 = vadd.f32 %v4014, %v4062
      %4064 = vmatmul.bf16.gmra.mxu0 %v907
      %v4065 = vpop.f32.mrf.mxu0
      %v4066 = vadd.f32 %v4017, %v4065
      %v4067 = vpop.f32.mrf.mxu0
      %v4068 = vadd.f32 %v4019, %v4067
      %4069 = vmatmul.bf16.gmra.mxu0 %v913
      %v4070 = vpop.f32.mrf.mxu0
      %v4071 = vadd.f32 %v4022, %v4070
      %v4072 = vpop.f32.mrf.mxu0
      %v4073 = vadd.f32 %v4024, %v4072
      %4074 = vmatmul.bf16.gmra.mxu0 %v919
      %v4075 = vpop.f32.mrf.mxu0
      %v4076 = vadd.f32 %v4027, %v4075
      %v4077 = vpop.f32.mrf.mxu0
      %v4078 = vadd.f32 %v4029, %v4077
      %4079 = vmatmul.bf16.gmra.mxu0 %v925
      %v4080 = vpop.f32.mrf.mxu0
      %v4081 = vadd.f32 %v4032, %v4080
      %v4082 = vpop.f32.mrf.mxu0
      %v4083 = vadd.f32 %v4034, %v4082
      %4084 = vmatmul.bf16.gmra.mxu0 %v931
      %v4085 = vpop.f32.mrf.mxu0
      %v4086 = vadd.f32 %v4037, %v4085
      %v4087 = vpop.f32.mrf.mxu0
      %v4088 = vadd.f32 %v4039, %v4087
      %4089 = vmatmul.bf16.gmra.mxu0 %v937
      %v4090 = vpop.f32.mrf.mxu0
      %v4091 = vadd.f32 %v4042, %v4090
      %v4092 = vpop.f32.mrf.mxu0
      %v4093 = vadd.f32 %v4044, %v4092
      %4094 = vmatmul.bf16.gmra.mxu0 %v943
      %v4095 = vpop.f32.mrf.mxu0
      %v4096 = vadd.f32 %v4047, %v4095
      %v4097 = vpop.f32.mrf.mxu0
      %v4098 = vadd.f32 %v4049, %v4097
      %4099 = vdwg.mxu0
      %4100 = vmatpush.bf16.msra.mxu0 %v2097
      %4101 = vmatpush.bf16.msra.mxu0 %v2091
      %4102 = vmatpush.bf16.msra.mxu0 %v2085
      %4103 = vmatpush.bf16.msra.mxu0 %v2079
      %4104 = vmatpush.bf16.msra.mxu0 %v2073
      %4105 = vmatpush.bf16.msra.mxu0 %v2067
      %4106 = vmatpush.bf16.msra.mxu0 %v2061
      %4107 = vmatpush.bf16.msra.mxu0 %v2055
      %4108 = vmatmul.bf16.gmra.mxu0 %v902
      %v4109 = vpop.f32.mrf.mxu0
      %v4110 = vadd.f32 %v4061, %v4109
      %v4111 = vpop.f32.mrf.mxu0
      %v4112 = vadd.f32 %v4063, %v4111
      %4113 = vmatmul.bf16.gmra.mxu0 %v908
      %v4114 = vpop.f32.mrf.mxu0
      %v4115 = vadd.f32 %v4066, %v4114
      %v4116 = vpop.f32.mrf.mxu0
      %v4117 = vadd.f32 %v4068, %v4116
      %4118 = vmatmul.bf16.gmra.mxu0 %v914
      %v4119 = vpop.f32.mrf.mxu0
      %v4120 = vadd.f32 %v4071, %v4119
      %v4121 = vpop.f32.mrf.mxu0
      %v4122 = vadd.f32 %v4073, %v4121
      %4123 = vmatmul.bf16.gmra.mxu0 %v920
      %v4124 = vpop.f32.mrf.mxu0
      %v4125 = vadd.f32 %v4076, %v4124
      %v4126 = vpop.f32.mrf.mxu0
      %v4127 = vadd.f32 %v4078, %v4126
      %4128 = vmatmul.bf16.gmra.mxu0 %v926
      %v4129 = vpop.f32.mrf.mxu0
      %v4130 = vadd.f32 %v4081, %v4129
      %v4131 = vpop.f32.mrf.mxu0
      %v4132 = vadd.f32 %v4083, %v4131
      %4133 = vmatmul.bf16.gmra.mxu0 %v932
      %v4134 = vpop.f32.mrf.mxu0
      %v4135 = vadd.f32 %v4086, %v4134
      %v4136 = vpop.f32.mrf.mxu0
      %v4137 = vadd.f32 %v4088, %v4136
      %4138 = vmatmul.bf16.gmra.mxu0 %v938
      %v4139 = vpop.f32.mrf.mxu0
      %v4140 = vadd.f32 %v4091, %v4139
      %v4141 = vpop.f32.mrf.mxu0
      %v4142 = vadd.f32 %v4093, %v4141
      %4143 = vmatmul.bf16.gmra.mxu0 %v944
      %v4144 = vpop.f32.mrf.mxu0
      %v4145 = vadd.f32 %v4096, %v4144
      %v4146 = vpop.f32.mrf.mxu0
      %v4147 = vadd.f32 %v4098, %v4146
      %4148 = vdwg.mxu0
      %4149 = vmatpush.bf16.msra.mxu0 %v2145
      %4150 = vmatpush.bf16.msra.mxu0 %v2139
      %4151 = vmatpush.bf16.msra.mxu0 %v2133
      %4152 = vmatpush.bf16.msra.mxu0 %v2127
      %4153 = vmatpush.bf16.msra.mxu0 %v2121
      %4154 = vmatpush.bf16.msra.mxu0 %v2115
      %4155 = vmatpush.bf16.msra.mxu0 %v2109
      %4156 = vmatpush.bf16.msra.mxu0 %v2103
      %4157 = vmatmul.bf16.gmra.mxu0 %v903
      %v4158 = vpop.f32.mrf.mxu0
      %v4159 = vadd.f32 %v4110, %v4158
      %v4160 = vpop.f32.mrf.mxu0
      %v4161 = vadd.f32 %v4112, %v4160
      %4162 = vmatmul.bf16.gmra.mxu0 %v909
      %v4163 = vpop.f32.mrf.mxu0
      %v4164 = vadd.f32 %v4115, %v4163
      %v4165 = vpop.f32.mrf.mxu0
      %v4166 = vadd.f32 %v4117, %v4165
      %4167 = vmatmul.bf16.gmra.mxu0 %v915
      %v4168 = vpop.f32.mrf.mxu0
      %v4169 = vadd.f32 %v4120, %v4168
      %v4170 = vpop.f32.mrf.mxu0
      %v4171 = vadd.f32 %v4122, %v4170
      %4172 = vmatmul.bf16.gmra.mxu0 %v921
      %v4173 = vpop.f32.mrf.mxu0
      %v4174 = vadd.f32 %v4125, %v4173
      %v4175 = vpop.f32.mrf.mxu0
      %v4176 = vadd.f32 %v4127, %v4175
      %4177 = vmatmul.bf16.gmra.mxu0 %v927
      %v4178 = vpop.f32.mrf.mxu0
      %v4179 = vadd.f32 %v4130, %v4178
      %v4180 = vpop.f32.mrf.mxu0
      %v4181 = vadd.f32 %v4132, %v4180
      %4182 = vmatmul.bf16.gmra.mxu0 %v933
      %v4183 = vpop.f32.mrf.mxu0
      %v4184 = vadd.f32 %v4135, %v4183
      %v4185 = vpop.f32.mrf.mxu0
      %v4186 = vadd.f32 %v4137, %v4185
      %4187 = vmatmul.bf16.gmra.mxu0 %v939
      %v4188 = vpop.f32.mrf.mxu0
      %v4189 = vadd.f32 %v4140, %v4188
      %v4190 = vpop.f32.mrf.mxu0
      %v4191 = vadd.f32 %v4142, %v4190
      %4192 = vmatmul.bf16.gmra.mxu0 %v945
      %v4193 = vpop.f32.mrf.mxu0
      %v4194 = vadd.f32 %v4145, %v4193
      %v4195 = vpop.f32.mrf.mxu0
      %v4196 = vadd.f32 %v4147, %v4195
      %4197 = vdwg.mxu0
      %v4198 = vpack.c.bf16 %v2983, %v2689
      %v4199 = vpack.c.bf16 %v3571, %v3277
      %v4200 = vpack.c.bf16 %v4159, %v3865
      %v4201 = vpack.c.bf16 %v2985, %v2691
      %v4202 = vpack.c.bf16 %v3573, %v3279
      %v4203 = vpack.c.bf16 %v4161, %v3867
      %v4204 = vpack.c.bf16 %v2988, %v2694
      %v4205 = vpack.c.bf16 %v3576, %v3282
      %v4206 = vpack.c.bf16 %v4164, %v3870
      %v4207 = vpack.c.bf16 %v2990, %v2696
      %v4208 = vpack.c.bf16 %v3578, %v3284
      %v4209 = vpack.c.bf16 %v4166, %v3872
      %v4210 = vpack.c.bf16 %v2993, %v2699
      %v4211 = vpack.c.bf16 %v3581, %v3287
      %v4212 = vpack.c.bf16 %v4169, %v3875
      %v4213 = vpack.c.bf16 %v2995, %v2701
      %v4214 = vpack.c.bf16 %v3583, %v3289
      %v4215 = vpack.c.bf16 %v4171, %v3877
      %v4216 = vpack.c.bf16 %v2998, %v2704
      %v4217 = vpack.c.bf16 %v3586, %v3292
      %v4218 = vpack.c.bf16 %v4174, %v3880
      %v4219 = vpack.c.bf16 %v3000, %v2706
      %v4220 = vpack.c.bf16 %v3588, %v3294
      %v4221 = vpack.c.bf16 %v4176, %v3882
      %v4222 = vpack.c.bf16 %v3003, %v2709
      %v4223 = vpack.c.bf16 %v3591, %v3297
      %v4224 = vpack.c.bf16 %v4179, %v3885
      %v4225 = vpack.c.bf16 %v3005, %v2711
      %v4226 = vpack.c.bf16 %v3593, %v3299
      %v4227 = vpack.c.bf16 %v4181, %v3887
      %v4228 = vpack.c.bf16 %v3008, %v2714
      %v4229 = vpack.c.bf16 %v3596, %v3302
      %v4230 = vpack.c.bf16 %v4184, %v3890
      %v4231 = vpack.c.bf16 %v3010, %v2716
      %v4232 = vpack.c.bf16 %v3598, %v3304
      %v4233 = vpack.c.bf16 %v4186, %v3892
      %v4234 = vpack.c.bf16 %v3013, %v2719
      %v4235 = vpack.c.bf16 %v3601, %v3307
      %v4236 = vpack.c.bf16 %v4189, %v3895
      %v4237 = vpack.c.bf16 %v3015, %v2721
      %v4238 = vpack.c.bf16 %v3603, %v3309
      %v4239 = vpack.c.bf16 %v4191, %v3897
      %v4240 = vpack.c.bf16 %v3018, %v2724
      %v4241 = vpack.c.bf16 %v3606, %v3312
      %v4242 = vpack.c.bf16 %v4194, %v3900
      %v4243 = vpack.c.bf16 %v3020, %v2726
      %v4244 = vpack.c.bf16 %v3608, %v3314
      %v4245 = vpack.c.bf16 %v4196, %v3902
      %v4246 = vlaneseq
      %v4247 = vand.u32 %v4246, 127
      %vm4248 = vcmp.lt.s32.totalorder %v4247, 64
      %v4249 = vld [vmem:[%s402] sm:$0xf]
      %v4250 = vld [vmem:[%s402 + $0x4] sm:$0xf]
      %v4251 = vld [vmem:[%s402 + $0x8] sm:$0xf]
      %v4252 = vld [vmem:[%s402 + $0xc] sm:$0xf]
      %v4253 = vld [vmem:[%s402 + $0x10] sm:$0xf]
      %v4254 = vld [vmem:[%s402 + $0x14] sm:$0xf]
      %v4271 = vunpack.c.l.b16 %v4198
      %v4272 = vunpack.c.l.b16 %v4201
      %v4273 = vunpack.c.l.b16 %v4204
      %v4274 = vunpack.c.l.b16 %v4207
      %v4275 = vunpack.c.l.b16 %v4210
      %v4276 = vunpack.c.l.b16 %v4213
      %v4277 = vunpack.c.l.b16 %v4216
      %v4278 = vunpack.c.l.b16 %v4219
      %v4279 = vunpack.c.l.b16 %v4222
      %v4280 = vunpack.c.l.b16 %v4225
      %v4281 = vunpack.c.l.b16 %v4228
      %v4282 = vunpack.c.l.b16 %v4231
      %v4283 = vunpack.c.l.b16 %v4234
      %v4284 = vunpack.c.l.b16 %v4237
      %v4285 = vunpack.c.l.b16 %v4240
      %v4286 = vunpack.c.l.b16 %v4243
      %v4287 = vpack.c.b16 %v4272, %v4271
      %v4288 = vpack.c.b16 %v4274, %v4273
      %v4289 = vpack.c.b16 %v4276, %v4275
      %v4290 = vpack.c.b16 %v4278, %v4277
      %v4291 = vpack.c.b16 %v4280, %v4279
      %v4292 = vpack.c.b16 %v4282, %v4281
      %v4293 = vpack.c.b16 %v4284, %v4283
      %v4294 = vpack.c.b16 %v4286, %v4285
      %4303 = vmatpush.bf16.msra.mxu0 %v4294
      %4304 = vmatpush.bf16.msra.mxu0 %v4293
      %4305 = vmatpush.bf16.msra.mxu0 %v4292
      %4306 = vmatpush.bf16.msra.mxu0 %v4291
      %4307 = vmatpush.bf16.msra.mxu0 %v4290
      %4308 = vmatpush.bf16.msra.mxu0 %v4289
      %4309 = vmatpush.bf16.msra.mxu0 %v4288
      %4310 = vmatpush.bf16.msra.mxu0 %v4287
      %4311 = vmatmul.bf16.gmra.mxu0 %v4249
      %v4312 = vpop.f32.mrf.mxu0
      %v4313 = vadd.f32 0.0, %v4312
      %v4314 = vpop.f32.mrf.mxu0
      %4315 = vdwg.mxu0
      %v4317 = vrot.slane %v4313, 4
      %v4319 = vsel %vm4248, %v4313, %v4317
      %v4320 = vunpack.c.h.b16 %v4198
      %v4321 = vunpack.c.h.b16 %v4201
      %v4322 = vunpack.c.h.b16 %v4204
      %v4323 = vunpack.c.h.b16 %v4207
      %v4324 = vunpack.c.h.b16 %v4210
      %v4325 = vunpack.c.h.b16 %v4213
      %v4326 = vunpack.c.h.b16 %v4216
      %v4327 = vunpack.c.h.b16 %v4219
      %v4328 = vunpack.c.h.b16 %v4222
      %v4329 = vunpack.c.h.b16 %v4225
      %v4330 = vunpack.c.h.b16 %v4228
      %v4331 = vunpack.c.h.b16 %v4231
      %v4332 = vunpack.c.h.b16 %v4234
      %v4333 = vunpack.c.h.b16 %v4237
      %v4334 = vunpack.c.h.b16 %v4240
      %v4335 = vunpack.c.h.b16 %v4243
      %v4336 = vpack.c.b16 %v4321, %v4320
      %v4337 = vpack.c.b16 %v4323, %v4322
      %v4338 = vpack.c.b16 %v4325, %v4324
      %v4339 = vpack.c.b16 %v4327, %v4326
      %v4340 = vpack.c.b16 %v4329, %v4328
      %v4341 = vpack.c.b16 %v4331, %v4330
      %v4342 = vpack.c.b16 %v4333, %v4332
      %v4343 = vpack.c.b16 %v4335, %v4334
      %4352 = vmatpush.bf16.msra.mxu0 %v4343
      %4353 = vmatpush.bf16.msra.mxu0 %v4342
      %4354 = vmatpush.bf16.msra.mxu0 %v4341
      %4355 = vmatpush.bf16.msra.mxu0 %v4340
      %4356 = vmatpush.bf16.msra.mxu0 %v4339
      %4357 = vmatpush.bf16.msra.mxu0 %v4338
      %4358 = vmatpush.bf16.msra.mxu0 %v4337
      %4359 = vmatpush.bf16.msra.mxu0 %v4336
      %4360 = vmatmul.bf16.gmra.mxu0 %v4250
      %v4361 = vpop.f32.mrf.mxu0
      %v4362 = vadd.f32 0.0, %v4361
      %v4363 = vpop.f32.mrf.mxu0
      %4364 = vdwg.mxu0
      %v4366 = vrot.slane %v4362, 4
      %v4368 = vsel %vm4248, %v4362, %v4366
      %v4385 = vunpack.c.l.b16 %v4199
      %v4386 = vunpack.c.l.b16 %v4202
      %v4387 = vunpack.c.l.b16 %v4205
      %v4388 = vunpack.c.l.b16 %v4208
      %v4389 = vunpack.c.l.b16 %v4211
      %v4390 = vunpack.c.l.b16 %v4214
      %v4391 = vunpack.c.l.b16 %v4217
      %v4392 = vunpack.c.l.b16 %v4220
      %v4393 = vunpack.c.l.b16 %v4223
      %v4394 = vunpack.c.l.b16 %v4226
      %v4395 = vunpack.c.l.b16 %v4229
      %v4396 = vunpack.c.l.b16 %v4232
      %v4397 = vunpack.c.l.b16 %v4235
      %v4398 = vunpack.c.l.b16 %v4238
      %v4399 = vunpack.c.l.b16 %v4241
      %v4400 = vunpack.c.l.b16 %v4244
      %v4401 = vpack.c.b16 %v4386, %v4385
      %v4402 = vpack.c.b16 %v4388, %v4387
      %v4403 = vpack.c.b16 %v4390, %v4389
      %v4404 = vpack.c.b16 %v4392, %v4391
      %v4405 = vpack.c.b16 %v4394, %v4393
      %v4406 = vpack.c.b16 %v4396, %v4395
      %v4407 = vpack.c.b16 %v4398, %v4397
      %v4408 = vpack.c.b16 %v4400, %v4399
      %4417 = vmatpush.bf16.msra.mxu0 %v4408
      %4418 = vmatpush.bf16.msra.mxu0 %v4407
      %4419 = vmatpush.bf16.msra.mxu0 %v4406
      %4420 = vmatpush.bf16.msra.mxu0 %v4405
      %4421 = vmatpush.bf16.msra.mxu0 %v4404
      %4422 = vmatpush.bf16.msra.mxu0 %v4403
      %4423 = vmatpush.bf16.msra.mxu0 %v4402
      %4424 = vmatpush.bf16.msra.mxu0 %v4401
      %4425 = vmatmul.bf16.gmra.mxu0 %v4251
      %v4426 = vpop.f32.mrf.mxu0
      %v4427 = vadd.f32 0.0, %v4426
      %v4428 = vpop.f32.mrf.mxu0
      %4429 = vdwg.mxu0
      %v4431 = vrot.slane %v4427, 4
      %v4433 = vsel %vm4248, %v4427, %v4431
      %v4434 = vunpack.c.h.b16 %v4199
      %v4435 = vunpack.c.h.b16 %v4202
      %v4436 = vunpack.c.h.b16 %v4205
      %v4437 = vunpack.c.h.b16 %v4208
      %v4438 = vunpack.c.h.b16 %v4211
      %v4439 = vunpack.c.h.b16 %v4214
      %v4440 = vunpack.c.h.b16 %v4217
      %v4441 = vunpack.c.h.b16 %v4220
      %v4442 = vunpack.c.h.b16 %v4223
      %v4443 = vunpack.c.h.b16 %v4226
      %v4444 = vunpack.c.h.b16 %v4229
      %v4445 = vunpack.c.h.b16 %v4232
      %v4446 = vunpack.c.h.b16 %v4235
      %v4447 = vunpack.c.h.b16 %v4238
      %v4448 = vunpack.c.h.b16 %v4241
      %v4449 = vunpack.c.h.b16 %v4244
      %v4450 = vpack.c.b16 %v4435, %v4434
      %v4451 = vpack.c.b16 %v4437, %v4436
      %v4452 = vpack.c.b16 %v4439, %v4438
      %v4453 = vpack.c.b16 %v4441, %v4440
      %v4454 = vpack.c.b16 %v4443, %v4442
      %v4455 = vpack.c.b16 %v4445, %v4444
      %v4456 = vpack.c.b16 %v4447, %v4446
      %v4457 = vpack.c.b16 %v4449, %v4448
      %4466 = vmatpush.bf16.msra.mxu0 %v4457
      %4467 = vmatpush.bf16.msra.mxu0 %v4456
      %4468 = vmatpush.bf16.msra.mxu0 %v4455
      %4469 = vmatpush.bf16.msra.mxu0 %v4454
      %4470 = vmatpush.bf16.msra.mxu0 %v4453
      %4471 = vmatpush.bf16.msra.mxu0 %v4452
      %4472 = vmatpush.bf16.msra.mxu0 %v4451
      %4473 = vmatpush.bf16.msra.mxu0 %v4450
      %4474 = vmatmul.bf16.gmra.mxu0 %v4252
      %v4475 = vpop.f32.mrf.mxu0
      %v4476 = vadd.f32 0.0, %v4475
      %v4477 = vpop.f32.mrf.mxu0
      %4478 = vdwg.mxu0
      %v4480 = vrot.slane %v4476, 4
      %v4482 = vsel %vm4248, %v4476, %v4480
      %v4499 = vunpack.c.l.b16 %v4200
      %v4500 = vunpack.c.l.b16 %v4203
      %v4501 = vunpack.c.l.b16 %v4206
      %v4502 = vunpack.c.l.b16 %v4209
      %v4503 = vunpack.c.l.b16 %v4212
      %v4504 = vunpack.c.l.b16 %v4215
      %v4505 = vunpack.c.l.b16 %v4218
      %v4506 = vunpack.c.l.b16 %v4221
      %v4507 = vunpack.c.l.b16 %v4224
      %v4508 = vunpack.c.l.b16 %v4227
      %v4509 = vunpack.c.l.b16 %v4230
      %v4510 = vunpack.c.l.b16 %v4233
      %v4511 = vunpack.c.l.b16 %v4236
      %v4512 = vunpack.c.l.b16 %v4239
      %v4513 = vunpack.c.l.b16 %v4242
      %v4514 = vunpack.c.l.b16 %v4245
      %v4515 = vpack.c.b16 %v4500, %v4499
      %v4516 = vpack.c.b16 %v4502, %v4501
      %v4517 = vpack.c.b16 %v4504, %v4503
      %v4518 = vpack.c.b16 %v4506, %v4505
      %v4519 = vpack.c.b16 %v4508, %v4507
      %v4520 = vpack.c.b16 %v4510, %v4509
      %v4521 = vpack.c.b16 %v4512, %v4511
      %v4522 = vpack.c.b16 %v4514, %v4513
      %4531 = vmatpush.bf16.msra.mxu0 %v4522
      %4532 = vmatpush.bf16.msra.mxu0 %v4521
      %4533 = vmatpush.bf16.msra.mxu0 %v4520
      %4534 = vmatpush.bf16.msra.mxu0 %v4519
      %4535 = vmatpush.bf16.msra.mxu0 %v4518
      %4536 = vmatpush.bf16.msra.mxu0 %v4517
      %4537 = vmatpush.bf16.msra.mxu0 %v4516
      %4538 = vmatpush.bf16.msra.mxu0 %v4515
      %4539 = vmatmul.bf16.gmra.mxu0 %v4253
      %v4540 = vpop.f32.mrf.mxu0
      %v4541 = vadd.f32 0.0, %v4540
      %v4542 = vpop.f32.mrf.mxu0
      %4543 = vdwg.mxu0
      %v4545 = vrot.slane %v4541, 4
      %v4547 = vsel %vm4248, %v4541, %v4545
      %v4548 = vunpack.c.h.b16 %v4200
      %v4549 = vunpack.c.h.b16 %v4203
      %v4550 = vunpack.c.h.b16 %v4206
      %v4551 = vunpack.c.h.b16 %v4209
      %v4552 = vunpack.c.h.b16 %v4212
      %v4553 = vunpack.c.h.b16 %v4215
      %v4554 = vunpack.c.h.b16 %v4218
      %v4555 = vunpack.c.h.b16 %v4221
      %v4556 = vunpack.c.h.b16 %v4224
      %v4557 = vunpack.c.h.b16 %v4227
      %v4558 = vunpack.c.h.b16 %v4230
      %v4559 = vunpack.c.h.b16 %v4233
      %v4560 = vunpack.c.h.b16 %v4236
      %v4561 = vunpack.c.h.b16 %v4239
      %v4562 = vunpack.c.h.b16 %v4242
      %v4563 = vunpack.c.h.b16 %v4245
      %v4564 = vpack.c.b16 %v4549, %v4548
      %v4565 = vpack.c.b16 %v4551, %v4550
      %v4566 = vpack.c.b16 %v4553, %v4552
      %v4567 = vpack.c.b16 %v4555, %v4554
      %v4568 = vpack.c.b16 %v4557, %v4556
      %v4569 = vpack.c.b16 %v4559, %v4558
      %v4570 = vpack.c.b16 %v4561, %v4560
      %v4571 = vpack.c.b16 %v4563, %v4562
      %4580 = vmatpush.bf16.msra.mxu0 %v4571
      %4581 = vmatpush.bf16.msra.mxu0 %v4570
      %4582 = vmatpush.bf16.msra.mxu0 %v4569
      %4583 = vmatpush.bf16.msra.mxu0 %v4568
      %4584 = vmatpush.bf16.msra.mxu0 %v4567
      %4585 = vmatpush.bf16.msra.mxu0 %v4566
      %4586 = vmatpush.bf16.msra.mxu0 %v4565
      %4587 = vmatpush.bf16.msra.mxu0 %v4564
      %4588 = vmatmul.bf16.gmra.mxu0 %v4254
      %v4589 = vpop.f32.mrf.mxu0
      %v4590 = vadd.f32 0.0, %v4589
      %v4591 = vpop.f32.mrf.mxu0
      %4592 = vdwg.mxu0
      %v4594 = vrot.slane %v4590, 4
      %v4596 = vsel %vm4248, %v4590, %v4594
      %v4597 = vld [vmem:[#allocation2] sm:$0xff]
      %v4598 = vld [vmem:[#allocation2 + $0x8] sm:$0xff]
      %v4599 = vld [vmem:[#allocation2 + $0x10] sm:$0xff]
      %v4606 = vrot.slane %v4368, 4
      %v4607 = vrot.slane %v4482, 4
      %v4608 = vrot.slane %v4596, 4
      %vm4609 = vcmask 1043456
      %v4610 = vsel %vm4609, %v4319, %v4606
      %v4611 = vsel %vm4609, %v4433, %v4607
      %v4612 = vsel %vm4609, %v4547, %v4608
      %v4616 = vadd.f32 %v4597, %v4610
      %v4617 = vadd.f32 %v4598, %v4611
      %v4618 = vadd.f32 %v4599, %v4612
      %4619 = vst [vmem:[#allocation2] sm:$0xff] %v4616
      %4620 = vst [vmem:[#allocation2 + $0x8] sm:$0xff] %v4617
      %4621 = vst [vmem:[#allocation2 + $0x10] sm:$0xff] %v4618
      // Predicated region
      $region61: #{ext_summarizer_forward.1} parent=55 // pred_check
        %p4622 = pneg %p411
      $region62: #{ext_summarizer_forward.1} parent=55 // pred_check_branch
        %4624 = sbr.rel (%p4622) target = $region64
      $region63: #{ext_summarizer_forward.1} parent=55 // pred_region
        %v4625 = vld [vmem:[#allocation2] sm:$0xff]
        %v4626 = vld [vmem:[#allocation2 + $0x8] sm:$0xff]
        %v4627 = vld [vmem:[#allocation2 + $0x10] sm:$0xff]
        %v4628 = vld [vmem:[%s3] sm:$0x3f]
        %v4630 = vperm.slane %v4628, 0
        %v4631 = vperm.slane %v4628, 1
        %v4632 = vperm.slane %v4628, 2
        %v4633 = vperm.slane %v4628, 3
        %v4634 = vperm.slane %v4628, 4
        %v4635 = vperm.slane %v4628, 5
        %v4636 = vrot.slane %v4631, 4
        %v4637 = vrot.slane %v4633, 4
        %v4638 = vrot.slane %v4635, 4
        %v4639 = vsel %vm4609, %v4630, %v4636
        %v4640 = vsel %vm4609, %v4632, %v4637
        %v4641 = vsel %vm4609, %v4634, %v4638
        %v4645 = vadd.f32 %v4625, %v4639
        %v4646 = vadd.f32 %v4626, %v4640
        %v4647 = vadd.f32 %v4627, %v4641
        %4651 = vst [vmem:[#allocation1] ss:$2 sm:$0xff] %v4645
        %s4652 = scalar_lea.vmem [#allocation1], 16
        %4653 = vst [vmem:[%s4652] ss:$2 sm:$0xff] %v4646
        %s4654 = scalar_lea.vmem [#allocation1], 32
        %4655 = vst [vmem:[%s4654] ss:$2 sm:$0xff] %v4647
        %v4656 = vld.sshfl [vmem:[#allocation1] sm:$0xff pattern:$0x75316420]
        %v4657 = vld.sshfl [vmem:[#allocation1 + $0x8] sm:$0xff pattern:$0x75316420]
        %v4658 = vld.sshfl [vmem:[#allocation1 + $0x10] sm:$0xff pattern:$0x75316420]
        %v4659 = vld.sshfl [vmem:[#allocation1 + $0x18] sm:$0xff pattern:$0x75316420]
        %v4660 = vld.sshfl [vmem:[#allocation1 + $0x20] sm:$0xff pattern:$0x75316420]
        %v4661 = vld.sshfl [vmem:[#allocation1 + $0x28] sm:$0xff pattern:$0x75316420]
        %v4668 = vsel %vm4609, %v4656, 0.0
        %v4669 = vsel %vm4609, %v4657, 0.0
        %v4670 = vadd.f32 %v4668, %v4669
        %v4671 = vsel %vm4609, %v4658, 0.0
        %v4672 = vadd.f32 %v4670, %v4671
        %v4673 = vsel %vm4609, %v4659, 0.0
        %v4674 = vadd.f32 %v4672, %v4673
        %v4675 = vsel %vm4609, %v4660, 0.0
        %v4676 = vadd.f32 %v4674, %v4675
        %v4677 = vsel %vm4609, %v4661, 0.0
        %v4678 = vadd.f32 %v4676, %v4677
        %4679 = vadd.xlane.f32.xlu0 %v4678
        %v4680 = vpop.xlane.xlu0 %4679
        %v4681 = vrcp.pop 768.0
        %v4682 = vmul.f32 768.0, %v4681
        %v4683 = vsub.f32 1.0, %v4682
        %v4684 = vmul.f32 %v4681, %v4683
        %v4685 = vadd.f32 %v4681, %v4684
        %vm4686 = vweird.f32 %v4681
        %v4687 = vsel %vm4686, %v4681, %v4685
        %v4688 = vmul.f32 %v4680, %v4687
        %v4691 = vunpack.c.l.s4 839922192
        %v4692 = vunpack.c.0.s8 %v4691
        %v4693 = vperm.slane %v4688, %v4692
        %v4695 = vsub.f32 %v4645, %v4693
        %v4696 = vsub.f32 %v4646, %v4693
        %v4697 = vsub.f32 %v4647, %v4693
        %v4698 = vmul.f32 %v4695, %v4695
        %v4699 = vmul.f32 %v4696, %v4696
        %v4700 = vmul.f32 %v4697, %v4697
        %4704 = vst [vmem:[#allocation1] ss:$2 sm:$0xff] %v4698
        %s4705 = scalar_lea.vmem [#allocation1], 16
        %4706 = vst [vmem:[%s4705] ss:$2 sm:$0xff] %v4699
        %s4707 = scalar_lea.vmem [#allocation1], 32
        %4708 = vst [vmem:[%s4707] ss:$2 sm:$0xff] %v4700
        %v4709 = vld.sshfl [vmem:[#allocation1] sm:$0xff pattern:$0x75316420]
        %v4710 = vld.sshfl [vmem:[#allocation1 + $0x8] sm:$0xff pattern:$0x75316420]
        %v4711 = vld.sshfl [vmem:[#allocation1 + $0x10] sm:$0xff pattern:$0x75316420]
        %v4712 = vld.sshfl [vmem:[#allocation1 + $0x18] sm:$0xff pattern:$0x75316420]
        %v4713 = vld.sshfl [vmem:[#allocation1 + $0x20] sm:$0xff pattern:$0x75316420]
        %v4714 = vld.sshfl [vmem:[#allocation1 + $0x28] sm:$0xff pattern:$0x75316420]
        %v4721 = vsel %vm4609, %v4709, 0.0
        %v4722 = vsel %vm4609, %v4710, 0.0
        %v4723 = vadd.f32 %v4721, %v4722
        %v4724 = vsel %vm4609, %v4711, 0.0
        %v4725 = vadd.f32 %v4723, %v4724
        %v4726 = vsel %vm4609, %v4712, 0.0
        %v4727 = vadd.f32 %v4725, %v4726
        %v4728 = vsel %vm4609, %v4713, 0.0
        %v4729 = vadd.f32 %v4727, %v4728
        %v4730 = vsel %vm4609, %v4714, 0.0
        %v4731 = vadd.f32 %v4729, %v4730
        %4732 = vadd.xlane.f32.xlu0 %v4731
        %v4733 = vpop.xlane.xlu0 %4732
        %v4734 = vmul.f32 %v4733, %v4687
        %v4735 = vadd.f32 %v4734, 1e-12
        %v4736 = vrsqrt.pop %v4735
        %v4737 = vmul.f32 %v4736, %v4735
        %v4738 = vmul.f32 %v4737, %v4736
        %v4739 = vmul.f32 0.5, %v4738
        %v4740 = vsub.f32 1.5, %v4739
        %v4741 = vmul.f32 %v4736, %v4740
        %vm4742 = vweird.f32 %v4735
        %vm4743 = vweird.f32 %v4736
        %vm4744 = vmor %vm4742, %vm4743
        %v4745 = vsel %vm4744, %v4736, %v4741
        %v4748 = vunpack.c.l.s4 839922192
        %v4749 = vunpack.c.0.s8 %v4748
        %v4750 = vperm.slane %v4745, %v4749
        %v4752 = vmul.f32 %v4695, %v4750
        %v4753 = vmul.f32 %v4696, %v4750
        %v4754 = vmul.f32 %v4697, %v4750
        %v4755 = vld [vmem:[%s4] sm:$0x3f]
        %v4757 = vperm.slane %v4755, 0
        %v4758 = vperm.slane %v4755, 1
        %v4759 = vperm.slane %v4755, 2
        %v4760 = vperm.slane %v4755, 3
        %v4761 = vperm.slane %v4755, 4
        %v4762 = vperm.slane %v4755, 5
        %v4763 = vrot.slane %v4758, 4
        %v4764 = vrot.slane %v4760, 4
        %v4765 = vrot.slane %v4762, 4
        %v4766 = vsel %vm4609, %v4757, %v4763
        %v4767 = vsel %vm4609, %v4759, %v4764
        %v4768 = vsel %vm4609, %v4761, %v4765
        %v4772 = vmul.f32 %v4752, %v4766
        %v4773 = vmul.f32 %v4753, %v4767
        %v4774 = vmul.f32 %v4754, %v4768
        %v4775 = vld [vmem:[%s5] sm:$0x3f]
        %v4777 = vperm.slane %v4775, 0
        %v4778 = vperm.slane %v4775, 1
        %v4779 = vperm.slane %v4775, 2
        %v4780 = vperm.slane %v4775, 3
        %v4781 = vperm.slane %v4775, 4
        %v4782 = vperm.slane %v4775, 5
        %v4783 = vrot.slane %v4778, 4
        %v4784 = vrot.slane %v4780, 4
        %v4785 = vrot.slane %v4782, 4
        %v4786 = vsel %vm4609, %v4777, %v4783
        %v4787 = vsel %vm4609, %v4779, %v4784
        %v4788 = vsel %vm4609, %v4781, %v4785
        %v4792 = vadd.f32 %v4772, %v4786
        %v4793 = vadd.f32 %v4773, %v4787
        %v4794 = vadd.f32 %v4774, %v4788
        %v4795 = vld [vmem:[%s6] sm:$0x3f]
        %v4797 = vperm.slane %v4795, 0
        %v4798 = vperm.slane %v4795, 1
        %v4799 = vperm.slane %v4795, 2
        %v4800 = vperm.slane %v4795, 3
        %v4801 = vperm.slane %v4795, 4
        %v4802 = vperm.slane %v4795, 5
        %v4803 = vrot.slane %v4798, 4
        %v4804 = vrot.slane %v4800, 4
        %v4805 = vrot.slane %v4802, 4
        %v4806 = vsel %vm4609, %v4797, %v4803
        %v4807 = vsel %vm4609, %v4799, %v4804
        %v4808 = vsel %vm4609, %v4801, %v4805
        %v4812 = vmul.f32 %v4792, %v4806
        %v4813 = vmul.f32 %v4793, %v4807
        %v4814 = vmul.f32 %v4794, %v4808
        %4818 = vst [vmem:[#allocation1] ss:$2 sm:$0xff] %v4812
        %s4819 = scalar_lea.vmem [#allocation1], 16
        %4820 = vst [vmem:[%s4819] ss:$2 sm:$0xff] %v4813
        %s4821 = scalar_lea.vmem [#allocation1], 32
        %4822 = vst [vmem:[%s4821] ss:$2 sm:$0xff] %v4814
        %v4823 = vld.sshfl [vmem:[#allocation1] sm:$0xff pattern:$0x75316420]
        %v4824 = vld.sshfl [vmem:[#allocation1 + $0x8] sm:$0xff pattern:$0x75316420]
        %v4825 = vld.sshfl [vmem:[#allocation1 + $0x10] sm:$0xff pattern:$0x75316420]
        %v4826 = vld.sshfl [vmem:[#allocation1 + $0x18] sm:$0xff pattern:$0x75316420]
        %v4827 = vld.sshfl [vmem:[#allocation1 + $0x20] sm:$0xff pattern:$0x75316420]
        %v4828 = vld.sshfl [vmem:[#allocation1 + $0x28] sm:$0xff pattern:$0x75316420]
        %v4835 = vsel %vm4609, %v4823, 0.0
        %v4836 = vsel %vm4609, %v4824, 0.0
        %v4837 = vadd.f32 %v4835, %v4836
        %v4838 = vsel %vm4609, %v4825, 0.0
        %v4839 = vadd.f32 %v4837, %v4838
        %v4840 = vsel %vm4609, %v4826, 0.0
        %v4841 = vadd.f32 %v4839, %v4840
        %v4842 = vsel %vm4609, %v4827, 0.0
        %v4843 = vadd.f32 %v4841, %v4842
        %v4844 = vsel %vm4609, %v4828, 0.0
        %v4845 = vadd.f32 %v4843, %v4844
        %4846 = vadd.xlane.f32.xlu0 %v4845
        %v4847 = vpop.xlane.xlu0 %4846
        %s4848 = sld [smem:[#allocation3]]
        %v4849 = vstv %s4848
        %v4850 = vadd.f32 %v4847, %v4849
        %v4851 = vxor.u32 %v4850, 2147483648
        %v4852 = vmul.f32 %v4851, 1.442695
        %v4853 = vpow.pop %v4852
        %v4854 = vadd.f32 %v4853, 1.0
        %v4855 = vrcp.pop %v4854
        %v4856 = vmul.f32 %v4854, %v4855
        %v4857 = vsub.f32 1.0, %v4856
        %v4858 = vmul.f32 %v4855, %v4857
        %v4859 = vadd.f32 %v4855, %v4858
        %vm4860 = vweird.f32 %v4854
        %vm4861 = vweird.f32 %v4855
        %vm4862 = vmor %vm4860, %vm4861
        %v4863 = vsel %vm4862, %v4855, %v4859
        %v4864 = vand.u32 2147483647, %v4854
        %vm4865 = vcmp.eq.f32.partialorder %v4864, 8.507059e+37
        %v4866 = vand.u32 %v4854, 2147483648
        %v4867 = vor.u32 1.1754944e-38, %v4866
        %v4868 = vsel %vm4865, %v4867, %v4863
        %v4869 = vmul.f32 1.0, %v4868
        %v4870 = vld [vmem:[%s406] sm:$0xf]
        %v4871 = vmul.f32 %v4869, %v4870
        %vm4872 = vcmask 3072
        %4873 = vst.msk [vmem:[%s410] sm:$0xf] %vm4872, %v4871
      $region64: #{ext_summarizer_forward.1} parent=55 // pred_fallthru
        _
      %p4874 = scmp.lt.s32.totalorder %s25, 1
      %s4875 = scalar_select %p4874, %s25, 1
      %s4876 = smul.addr %s4875, 4
      %s4877 = scalar_lea.vmem %s9, %s4876
      // Predicated region
      $region65: #{ext_summarizer_forward.1} parent=55 // pred_check
        %p4878 = pneg %p259
      $region66: #{ext_summarizer_forward.1} parent=55 // pred_check_branch
        %4880 = sbr.rel (%p4878) target = $region68
      $region67: #{ext_summarizer_forward.1} parent=55 // pred_region
        _
      $region68: #{ext_summarizer_forward.1} parent=55 // pred_fallthru
        _
    $region56: #{ext_summarizer_forward.1} parent=5 // pred_fallthru
      _
    %p4881 = scmp.le.s32.totalorder 2, %s16
    // Predicated region
    $region69: #{ext_summarizer_forward.1} parent=5 // pred_check
      %p4882 = pneg %p4881
    $region70: #{ext_summarizer_forward.1} parent=5 // pred_check_branch
      %4884 = sbr.rel (%p4882) target = $region72
    $region71: #{ext_summarizer_forward.1} parent=5 // pred_region
      %s4885 = ssub.s32 %s16, 2
      // Predicated region
      $region73: #{ext_summarizer_forward.1} parent=71 // pred_check
        %p4886 = pneg %p265
      $region74: #{ext_summarizer_forward.1} parent=71 // pred_check_branch
        %4888 = sbr.rel (%p4886) target = $region76
      $region75: #{ext_summarizer_forward.1} parent=71 // pred_region
        %p4889 = scmp.lt.s32.totalorder %s27, 1
        %s4890 = scalar_select %p4889, %s27, 1
        %s4891 = smul.addr %s4890, 4
        %s4892 = scalar_lea.vmem %s9, %s4891
      $region76: #{ext_summarizer_forward.1} parent=71 // pred_fallthru
        _
    $region72: #{ext_summarizer_forward.1} parent=5 // pred_fallthru
      _
  $region6: #{ext_summarizer_forward.1} parent=0 // loop_footer
    %s20 = sadd.s32 1, %s16
  $region7: #{ext_summarizer_forward.1} parent=0 // loop_footer_branch
    %15 = sbr.rel target = $region3
  $region8: #{ext_summarizer_forward.1} parent=0 // loop_exit
    _

</llo_original>
